<compile_context>
chip_gen: v6e
topology: v6e:2x2x1
jax: 0.10.0
libtpu: 0.0.40
codegen_flags: <defaults>
</compile_context>

<pallas_src>
import jax
import jax.numpy as jnp
from jax.experimental import pallas as pl
from jax.experimental.pallas import tpu as pltpu


def fold_bn(gamma, beta, mean, var, eps=1e-3):
    scale = gamma / jnp.sqrt(var + eps)
    bias = beta - mean * scale
    return scale[None, :], bias[None, :]


def _pick_row_tile(H, W, c_mid, itemsize, budget_bytes=6 * 1024 * 1024):
    """Largest divisor of H whose padded-y1 + im2col scratches fit the budget."""
    for th in range(H, 0, -1):
        if H % th:
            continue
        patch = th * W * 9 * c_mid * itemsize
        ypad = (th + 2) * (W + 2) * c_mid * itemsize
        if patch + ypad <= budget_bytes:
            return th
    return 1


def _make_kernel(TH, W, c_mid, c2, add, mxu_dtype, approx_silu):
    def silu(y):
        # y * sigmoid(y).  exp runs on the EUP; with approx_silu=True the
        # reciprocal also moves to the EUP slot (~1e-3 rel err) instead of VALU.
        return y * pl.reciprocal(1.0 + jnp.exp(-y), approx=approx_silu)

    def kernel(xm_ref, xt_ref, xb_ref, w1_ref, b1_ref, w2_ref, b2_ref,
               o_ref, yp_ref, patch_ref):
        r = pl.program_id(1)
        last_r = pl.num_programs(1) - 1

        w1 = w1_ref[...]              # (c1, c_)  BN scale pre-folded, mxu dtype
        b1 = b1_ref[...]              # (1, c_)   f32

        # ---- cv1 (1x1 conv + BN bias + SiLU) on the TH main rows -----------
        xm2d = xm_ref[...].reshape(TH * W, -1)                   # (TH*W, c1) f32
        y1 = jnp.dot(xm2d.astype(mxu_dtype), w1,
                     preferred_element_type=jnp.float32)
        y1 = silu(y1 + b1)
        yp_ref[1:TH + 1, 1:W + 1, :] = (
            y1.reshape(TH, W, c_mid).astype(yp_ref.dtype))

        # ---- cv1 on the 1-row halos.  The 3x3 conv zero-pads *y1*, so at the
        #      image top/bottom the halo row must be zero (not cv1(0)). -------
        def halo(x_row_ref, is_border):
            xr = x_row_ref[...].reshape(W, -1)                   # (W, c1)
            yh = jnp.dot(xr.astype(mxu_dtype), w1,
                         preferred_element_type=jnp.float32)
            yh = silu(yh + b1)
            yh = jnp.where(is_border, 0.0, yh)
            return yh.reshape(1, W, c_mid).astype(yp_ref.dtype)

        yp_ref[0:1, 1:W + 1, :] = halo(xt_ref, r == 0)
        yp_ref[TH + 1:TH + 2, 1:W + 1, :] = halo(xb_ref, r == last_r)

        # ---- zero ONLY the 1-pixel W border columns (interior is always
        #      fully overwritten above; no full-buffer zero fill) ------------
        zcol = jnp.zeros((TH + 2, 1, c_mid), yp_ref.dtype)
        yp_ref[:, 0:1, :] = zcol
        yp_ref[:, W + 1:W + 2, :] = zcol

        # ---- im2col: (TH*W, 9*c_) patch matrix, tap by tap from ref slices -
        # TODO(synk): +/-1 W-offset slices lower to masked ld/st; pltpu.roll
        #             would keep the shift on the (idle) XLU slot.
        for ky in range(3):
            for kx in range(3):
                tap = ky * 3 + kx
                patch_ref[:, tap * c_mid:(tap + 1) * c_mid] = (
                    yp_ref[ky:ky + TH, kx:kx + W, :].reshape(TH * W, c_mid))

        # ---- cv2: ONE MXU matmul with K = 9*c_ + BN bias + SiLU -------------
        # TODO(synk): on v7x (MRB) consider 9 accumulating K=c_ matmuls to drop
        #             the patch scratch entirely.
        y2 = jnp.dot(patch_ref[...], w2_ref[...],
                     preferred_element_type=jnp.float32)
        y2 = silu(y2 + b2_ref[...])
        if add:
            y2 = y2 + xm2d                                       # c1 == c2 here
        o_ref[...] = y2.reshape(1, TH, W, c2).astype(o_ref.dtype)

    return kernel


def bottleneck_forward(x_nchw, params, shortcut=True,
                       mxu_dtype=jnp.bfloat16, approx_silu=True,
                       row_tile=None):
    """Fused Bottleneck forward.  NCHW in / NCHW out, like the PyTorch module."""
    N, c1, H, W = x_nchw.shape
    c_mid = params["w1"].shape[1]
    c2 = params["w2"].shape[3]
    add = bool(shortcut and c1 == c2)

    # Layout plumbing in plain JAX: NCHW -> NHWC so channels sit on lanes.
    x = jnp.transpose(x_nchw, (0, 2, 3, 1)).astype(jnp.float32)   # (N, H, W, c1)

    # Fold BN scale into the conv weights once (wrapper-side) and cast to the
    # MXU dtype here, so the kernel never re-casts weight tiles per grid step.
    s1, b1 = fold_bn(params["g1"], params["b1"], params["m1"], params["v1"])
    s2, b2 = fold_bn(params["g2"], params["b2"], params["m2"], params["v2"])
    w1 = (params["w1"] * s1).astype(mxu_dtype)                          # (c1, c_)
    w2 = (params["w2"] * s2).reshape(9 * c_mid, c2).astype(mxu_dtype)   # tap-major
    b1 = b1.astype(jnp.float32)
    b2 = b2.astype(jnp.float32)

    itemsize = jnp.dtype(mxu_dtype).itemsize
    TH = row_tile if row_tile is not None else _pick_row_tile(H, W, c_mid, itemsize)
    assert H % TH == 0, (H, TH)
    n_row = H // TH

    kernel = _make_kernel(TH, W, c_mid, c2, add, mxu_dtype, approx_silu)

    in_specs = [
        # main TH-row strip of x (also reused as the residual when add=True)
        pl.BlockSpec((1, TH, W, c1), lambda n, r: (n, r, 0, 0)),
        # 1-row top/bottom halos, clamped at the image border; the kernel
        # zeroes the corresponding y1 rows there (matching SAME zero padding)
        pl.BlockSpec((1, 1, W, c1),
                     lambda n, r: (n, jnp.maximum(r * TH - 1, 0), 0, 0)),
        pl.BlockSpec((1, 1, W, c1),
                     lambda n, r: (n, jnp.minimum(r * TH + TH, H - 1), 0, 0)),
        pl.BlockSpec((c1, c_mid), lambda n, r: (0, 0)),            # w1 (scaled)
        pl.BlockSpec((1, c_mid), lambda n, r: (0, 0)),             # b1
        pl.BlockSpec((9 * c_mid, c2), lambda n, r: (0, 0)),        # w2 (scaled)
        pl.BlockSpec((1, c2), lambda n, r: (0, 0)),                # b2
    ]

    out = pl.pallas_call(
        kernel,
        out_shape=jax.ShapeDtypeStruct((N, H, W, c2), jnp.float32),
        grid=(N, n_row),
        in_specs=in_specs,
        out_specs=pl.BlockSpec((1, TH, W, c2), lambda n, r: (n, r, 0, 0)),
        scratch_shapes=[
            pltpu.VMEM((TH + 2, W + 2, c_mid), mxu_dtype),         # padded y1
            pltpu.VMEM((TH * W, 9 * c_mid), mxu_dtype),            # im2col patches
        ],
        compiler_params=pltpu.CompilerParams(
            dimension_semantics=("parallel", "parallel"),
            # Safe on every generation (v7x has 64 MiB physical VMEM); the
            # row tiler keeps per-step scratches well inside this budget.
            vmem_limit_bytes=32 * 1024 * 1024,
        ),
    )(x, x, x, w1, b1, w2, b2)

    return jnp.transpose(out, (0, 3, 1, 2))        # NHWC -> NCHW


# ----------------------------------------------------------------------------
# Pure-JAX reference (correctness check)
# ----------------------------------------------------------------------------
def reference_forward(x_nchw, params, shortcut=True):
    c1 = x_nchw.shape[1]
    c2 = params["w2"].shape[3]
    add = bool(shortcut and c1 == c2)
    x = jnp.transpose(x_nchw, (0, 2, 3, 1))

    y = jnp.einsum("nhwc,cd->nhwd", x, params["w1"])
    y = (y - params["m1"]) / jnp.sqrt(params["v1"] + 1e-3) * params["g1"] + params["b1"]
    y = y * jax.nn.sigmoid(y)

    y2 = jax.lax.conv_general_dilated(
        y, params["w2"], (1, 1), "SAME",
        dimension_numbers=("NHWC", "HWIO", "NHWC"))
    y2 = (y2 - params["m2"]) / jnp.sqrt(params["v2"] + 1e-3) * params["g2"] + params["b2"]
    y2 = y2 * jax.nn.sigmoid(y2)

    out = x + y2 if add else y2
    return jnp.transpose(out, (0, 3, 1, 2))


if __name__ == "__main__":
    # Bottleneck(c1=4, c2=4, shortcut=True, g=1, e=0.5)  =>  c_ = 2
    N, c1, H, W = 2, 4, 16, 16
    c2, e = 4, 0.5
    c_mid = int(c2 * e)

    key = jax.random.PRNGKey(0)
    keys = jax.random.split(key, 11)

    params = {
        # cv1 conv: PyTorch (c_, c1, 1, 1) -> stored as (c1, c_)
        "w1": jax.random.normal(keys[0], (c1, c_mid), jnp.float32) * 0.5,
        "g1": jax.random.normal(keys[1], (c_mid,), jnp.float32) * 0.1 + 1.0,
        "b1": jax.random.normal(keys[2], (c_mid,), jnp.float32) * 0.1,
        "m1": jax.random.normal(keys[3], (c_mid,), jnp.float32) * 0.1,
        "v1": jax.random.uniform(keys[4], (c_mid,), jnp.float32, 0.5, 1.5),
        # cv2 conv: PyTorch (c2, c_, 3, 3) -> stored as HWIO (3, 3, c_, c2)
        "w2": jax.random.normal(keys[5], (3, 3, c_mid, c2), jnp.float32) * 0.3,
        "g2": jax.random.normal(keys[6], (c2,), jnp.float32) * 0.1 + 1.0,
        "b2": jax.random.normal(keys[7], (c2,), jnp.float32) * 0.1,
        "m2": jax.random.normal(keys[8], (c2,), jnp.float32) * 0.1,
        "v2": jax.random.uniform(keys[9], (c2,), jnp.float32, 0.5, 1.5),
    }
    x = jax.random.normal(keys[10], (N, c1, H, W), jnp.float32)

    ref_t = jax.block_until_ready(reference_forward(x, params, shortcut=True))
    ref_f = jax.block_until_ready(reference_forward(x, params, shortcut=False))

    # 1) strict f32 path, exact SiLU, single row tile
    out = jax.block_until_ready(bottleneck_forward(
        x, params, shortcut=True, mxu_dtype=jnp.float32, approx_silu=False))
    assert out.shape == (N, c2, H, W), out.shape
    assert jnp.allclose(out, ref_t, atol=2e-4, rtol=2e-4), (
        float(jnp.max(jnp.abs(out - ref_t))))

    # 2) strict f32 path, exact SiLU, 8-row tiles (exercises the halo logic)
    out = jax.block_until_ready(bottleneck_forward(
        x, params, shortcut=True, mxu_dtype=jnp.float32, approx_silu=False,
        row_tile=8))
    assert jnp.allclose(out, ref_t, atol=2e-4, rtol=2e-4), (
        float(jnp.max(jnp.abs(out - ref_t))))

    # 3) shortcut=False path (no residual add)
    out = jax.block_until_ready(bottleneck_forward(
        x, params, shortcut=False, mxu_dtype=jnp.float32, approx_silu=False))
    assert jnp.allclose(out, ref_f, atol=2e-4, rtol=2e-4), (
        float(jnp.max(jnp.abs(out - ref_f))))

    # 4) default fast path: bf16 MXU operands/scratch + EUP-approx SiLU
    out = jax.block_until_ready(bottleneck_forward(
        x, params, shortcut=True, row_tile=8))
    assert jnp.allclose(out, ref_t, atol=8e-2, rtol=8e-2), (
        float(jnp.max(jnp.abs(out - ref_t))))

    print("KERNEL_OK")
</pallas_src>

<mosaic_0001>
module attributes {stable_mosaic.version = 11 : i64} {
  func.func @kernel(%arg0: i32, %arg1: i32, %arg2: memref<1x16x16x4xf32, #tpu.memory_space<vmem>>, %arg3: memref<1x1x16x4xf32, #tpu.memory_space<vmem>>, %arg4: memref<1x1x16x4xf32, #tpu.memory_space<vmem>>, %arg5: memref<4x2xf32, #tpu.memory_space<vmem>>, %arg6: memref<1x2xf32, #tpu.memory_space<vmem>>, %arg7: memref<18x4xf32, #tpu.memory_space<vmem>>, %arg8: memref<1x4xf32, #tpu.memory_space<vmem>>, %arg9: memref<1x16x16x4xf32, #tpu.memory_space<vmem>>, %arg10: memref<18x18x2xf32, #tpu.memory_space<vmem>>, %arg11: memref<256x18xf32, #tpu.memory_space<vmem>>) attributes {dimension_semantics = [#tpu.dimension_semantics<parallel>, #tpu.dimension_semantics<parallel>], iteration_bounds = array<i64: 2, 1>, scalar_prefetch = 0 : i64, scratch_operands = 2 : i64, tpu.core_type = #tpu.core_type<tc>, window_params = [{transform_indices = @transform_0, window_bounds = array<i64: 1, 16, 16, 4>}, {transform_indices = @transform_1, window_bounds = array<i64: 1, 1, 16, 4>}, {transform_indices = @transform_2, window_bounds = array<i64: 1, 1, 16, 4>}, {pipeline_mode = #tpu.pipeline_mode<synchronous>, transform_indices = @transform_3, window_bounds = array<i64: 4, 2>}, {pipeline_mode = #tpu.pipeline_mode<synchronous>, transform_indices = @transform_4, window_bounds = array<i64: 1, 2>}, {pipeline_mode = #tpu.pipeline_mode<synchronous>, transform_indices = @transform_5, window_bounds = array<i64: 18, 4>}, {pipeline_mode = #tpu.pipeline_mode<synchronous>, transform_indices = @transform_6, window_bounds = array<i64: 1, 4>}, {transform_indices = @transform_7, window_bounds = array<i64: 1, 16, 16, 4>}]} {
    %c0 = arith.constant 0 : index
    %c0_0 = arith.constant 0 : index
    %0 = vector.load %arg5[%c0, %c0_0] : memref<4x2xf32, #tpu.memory_space<vmem>>, vector<4x2xf32>
    %c0_1 = arith.constant 0 : index
    %c0_2 = arith.constant 0 : index
    %1 = vector.load %arg6[%c0_1, %c0_2] : memref<1x2xf32, #tpu.memory_space<vmem>>, vector<1x2xf32>
    %c0_3 = arith.constant 0 : index
    %c0_4 = arith.constant 0 : index
    %c0_5 = arith.constant 0 : index
    %c0_6 = arith.constant 0 : index
    %2 = vector.load %arg2[%c0_3, %c0_4, %c0_5, %c0_6] : memref<1x16x16x4xf32, #tpu.memory_space<vmem>>, vector<1x16x16x4xf32>
    %3 = vector.shape_cast %2 : vector<1x16x16x4xf32> to vector<256x4xf32>
    %cst = arith.constant dense<0.000000e+00> : vector<256x2xf32>
    %4 = tpu.matmul %3, %0, %cst {dimension_numbers = #tpu.dot_dimension_numbers<[1], [0], [0], [1], [0, 0, 1, 1], [], []>} : vector<256x4xf32>, vector<4x2xf32>, vector<256x2xf32> -> vector<256x2xf32>
    %5 = vector.broadcast %1 : vector<1x2xf32> to vector<256x2xf32>
    %6 = arith.addf %4, %5 : vector<256x2xf32>
    %cst_7 = arith.constant 0.000000e+00 : f32
    %7 = vector.broadcast %cst_7 : f32 to vector<256x2xf32>
    %8 = arith.subf %7, %6 : vector<256x2xf32>
    %9 = math.exp %8 : vector<256x2xf32>
    %cst_8 = arith.constant 1.000000e+00 : f32
    %10 = vector.broadcast %cst_8 : f32 to vector<256x2xf32>
    %11 = arith.addf %10, %9 : vector<256x2xf32>
    %12 = tpu.reciprocal %11 : vector<256x2xf32> -> vector<256x2xf32>
    %13 = arith.mulf %6, %12 : vector<256x2xf32>
    %14 = vector.shape_cast %13 : vector<256x2xf32> to vector<16x16x2xf32>
    %c1 = arith.constant 1 : index
    %c1_9 = arith.constant 1 : index
    %c0_10 = arith.constant 0 : index
    %15 = vector.load %arg10[%c1, %c1_9, %c0_10] : memref<18x18x2xf32, #tpu.memory_space<vmem>>, vector<16x16x2xf32>
    tpu.vector_store %arg10[%c1, %c1_9, %c0_10], %14 {strides = array<i32>} : memref<18x18x2xf32, #tpu.memory_space<vmem>>, vector<16x16x2xf32>,
    %c0_i32 = arith.constant 0 : i32
    %16 = arith.cmpi eq, %arg1, %c0_i32 : i32
    %c0_11 = arith.constant 0 : index
    %c0_12 = arith.constant 0 : index
    %c0_13 = arith.constant 0 : index
    %c0_14 = arith.constant 0 : index
    %17 = vector.load %arg3[%c0_11, %c0_12, %c0_13, %c0_14] : memref<1x1x16x4xf32, #tpu.memory_space<vmem>>, vector<1x1x16x4xf32>
    %18 = vector.shape_cast %17 : vector<1x1x16x4xf32> to vector<16x4xf32>
    %cst_15 = arith.constant dense<0.000000e+00> : vector<16x2xf32>
    %19 = tpu.matmul %18, %0, %cst_15 {dimension_numbers = #tpu.dot_dimension_numbers<[1], [0], [0], [1], [0, 0, 1, 1], [], []>} : vector<16x4xf32>, vector<4x2xf32>, vector<16x2xf32> -> vector<16x2xf32>
    %20 = vector.broadcast %1 : vector<1x2xf32> to vector<16x2xf32>
    %21 = arith.addf %19, %20 : vector<16x2xf32>
    %cst_16 = arith.constant 0.000000e+00 : f32
    %22 = vector.broadcast %cst_16 : f32 to vector<16x2xf32>
    %23 = arith.subf %22, %21 : vector<16x2xf32>
    %24 = math.exp %23 : vector<16x2xf32>
    %cst_17 = arith.constant 1.000000e+00 : f32
    %25 = vector.broadcast %cst_17 : f32 to vector<16x2xf32>
    %26 = arith.addf %25, %24 : vector<16x2xf32>
    %27 = tpu.reciprocal %26 : vector<16x2xf32> -> vector<16x2xf32>
    %28 = arith.mulf %21, %27 : vector<16x2xf32>
    %cst_18 = arith.constant 0.000000e+00 : f32
    %29 = vector.broadcast %cst_18 : f32 to vector<16x2xf32>
    %30 = arith.select %16, %29, %28 : vector<16x2xf32>
    %31 = vector.shape_cast %30 : vector<16x2xf32> to vector<1x16x2xf32>
    %c0_19 = arith.constant 0 : index
    %c1_20 = arith.constant 1 : index
    %c0_21 = arith.constant 0 : index
    %32 = vector.load %arg10[%c0_19, %c1_20, %c0_21] : memref<18x18x2xf32, #tpu.memory_space<vmem>>, vector<1x16x2xf32>
    tpu.vector_store %arg10[%c0_19, %c1_20, %c0_21], %31 {strides = array<i32>} : memref<18x18x2xf32, #tpu.memory_space<vmem>>, vector<1x16x2xf32>,
    %c0_i32_22 = arith.constant 0 : i32
    %33 = arith.cmpi eq, %arg1, %c0_i32_22 : i32
    %c0_23 = arith.constant 0 : index
    %c0_24 = arith.constant 0 : index
    %c0_25 = arith.constant 0 : index
    %c0_26 = arith.constant 0 : index
    %34 = vector.load %arg4[%c0_23, %c0_24, %c0_25, %c0_26] : memref<1x1x16x4xf32, #tpu.memory_space<vmem>>, vector<1x1x16x4xf32>
    %35 = vector.shape_cast %34 : vector<1x1x16x4xf32> to vector<16x4xf32>
    %cst_27 = arith.constant dense<0.000000e+00> : vector<16x2xf32>
    %36 = tpu.matmul %35, %0, %cst_27 {dimension_numbers = #tpu.dot_dimension_numbers<[1], [0], [0], [1], [0, 0, 1, 1], [], []>} : vector<16x4xf32>, vector<4x2xf32>, vector<16x2xf32> -> vector<16x2xf32>
    %37 = vector.broadcast %1 : vector<1x2xf32> to vector<16x2xf32>
    %38 = arith.addf %36, %37 : vector<16x2xf32>
    %cst_28 = arith.constant 0.000000e+00 : f32
    %39 = vector.broadcast %cst_28 : f32 to vector<16x2xf32>
    %40 = arith.subf %39, %38 : vector<16x2xf32>
    %41 = math.exp %40 : vector<16x2xf32>
    %cst_29 = arith.constant 1.000000e+00 : f32
    %42 = vector.broadcast %cst_29 : f32 to vector<16x2xf32>
    %43 = arith.addf %42, %41 : vector<16x2xf32>
    %44 = tpu.reciprocal %43 : vector<16x2xf32> -> vector<16x2xf32>
    %45 = arith.mulf %38, %44 : vector<16x2xf32>
    %cst_30 = arith.constant 0.000000e+00 : f32
    %46 = vector.broadcast %cst_30 : f32 to vector<16x2xf32>
    %47 = arith.select %33, %46, %45 : vector<16x2xf32>
    %48 = vector.shape_cast %47 : vector<16x2xf32> to vector<1x16x2xf32>
    %c17 = arith.constant 17 : index
    %c1_31 = arith.constant 1 : index
    %c0_32 = arith.constant 0 : index
    %49 = vector.load %arg10[%c17, %c1_31, %c0_32] : memref<18x18x2xf32, #tpu.memory_space<vmem>>, vector<1x16x2xf32>
    tpu.vector_store %arg10[%c17, %c1_31, %c0_32], %48 {strides = array<i32>} : memref<18x18x2xf32, #tpu.memory_space<vmem>>, vector<1x16x2xf32>,
    %cst_33 = arith.constant 0.000000e+00 : f32
    %50 = vector.broadcast %cst_33 : f32 to vector<18x1x2xf32>
    %c0_34 = arith.constant 0 : index
    %c0_35 = arith.constant 0 : index
    %c0_36 = arith.constant 0 : index
    %51 = vector.load %arg10[%c0_34, %c0_35, %c0_36] : memref<18x18x2xf32, #tpu.memory_space<vmem>>, vector<18x1x2xf32>
    tpu.vector_store %arg10[%c0_34, %c0_35, %c0_36], %50 {strides = array<i32>} : memref<18x18x2xf32, #tpu.memory_space<vmem>>, vector<18x1x2xf32>,
    %c0_37 = arith.constant 0 : index
    %c17_38 = arith.constant 17 : index
    %c0_39 = arith.constant 0 : index
    %52 = vector.load %arg10[%c0_37, %c17_38, %c0_39] : memref<18x18x2xf32, #tpu.memory_space<vmem>>, vector<18x1x2xf32>
    tpu.vector_store %arg10[%c0_37, %c17_38, %c0_39], %50 {strides = array<i32>} : memref<18x18x2xf32, #tpu.memory_space<vmem>>, vector<18x1x2xf32>,
    %c0_40 = arith.constant 0 : index
    %c0_41 = arith.constant 0 : index
    %c0_42 = arith.constant 0 : index
    %53 = vector.load %arg10[%c0_40, %c0_41, %c0_42] : memref<18x18x2xf32, #tpu.memory_space<vmem>>, vector<16x16x2xf32>
    %54 = vector.shape_cast %53 : vector<16x16x2xf32> to vector<256x2xf32>
    %c0_43 = arith.constant 0 : index
    %c0_44 = arith.constant 0 : index
    %55 = vector.load %arg11[%c0_43, %c0_44] : memref<256x18xf32, #tpu.memory_space<vmem>>, vector<256x2xf32>
    tpu.vector_store %arg11[%c0_43, %c0_44], %54 {strides = array<i32>} : memref<256x18xf32, #tpu.memory_space<vmem>>, vector<256x2xf32>,
    %c0_45 = arith.constant 0 : index
    %c1_46 = arith.constant 1 : index
    %c0_47 = arith.constant 0 : index
    %56 = vector.load %arg10[%c0_45, %c1_46, %c0_47] : memref<18x18x2xf32, #tpu.memory_space<vmem>>, vector<16x16x2xf32>
    %57 = vector.shape_cast %56 : vector<16x16x2xf32> to vector<256x2xf32>
    %c0_48 = arith.constant 0 : index
    %c2 = arith.constant 2 : index
    %58 = vector.load %arg11[%c0_48, %c2] : memref<256x18xf32, #tpu.memory_space<vmem>>, vector<256x2xf32>
    tpu.vector_store %arg11[%c0_48, %c2], %57 {strides = array<i32>} : memref<256x18xf32, #tpu.memory_space<vmem>>, vector<256x2xf32>,
    %c0_49 = arith.constant 0 : index
    %c2_50 = arith.constant 2 : index
    %c0_51 = arith.constant 0 : index
    %59 = vector.load %arg10[%c0_49, %c2_50, %c0_51] : memref<18x18x2xf32, #tpu.memory_space<vmem>>, vector<16x16x2xf32>
    %60 = vector.shape_cast %59 : vector<16x16x2xf32> to vector<256x2xf32>
    %c0_52 = arith.constant 0 : index
    %c4 = arith.constant 4 : index
    %61 = vector.load %arg11[%c0_52, %c4] : memref<256x18xf32, #tpu.memory_space<vmem>>, vector<256x2xf32>
    tpu.vector_store %arg11[%c0_52, %c4], %60 {strides = array<i32>} : memref<256x18xf32, #tpu.memory_space<vmem>>, vector<256x2xf32>,
    %c1_53 = arith.constant 1 : index
    %c0_54 = arith.constant 0 : index
    %c0_55 = arith.constant 0 : index
    %62 = vector.load %arg10[%c1_53, %c0_54, %c0_55] : memref<18x18x2xf32, #tpu.memory_space<vmem>>, vector<16x16x2xf32>
    %63 = vector.shape_cast %62 : vector<16x16x2xf32> to vector<256x2xf32>
    %c0_56 = arith.constant 0 : index
    %c6 = arith.constant 6 : index
    %64 = vector.load %arg11[%c0_56, %c6] : memref<256x18xf32, #tpu.memory_space<vmem>>, vector<256x2xf32>
    tpu.vector_store %arg11[%c0_56, %c6], %63 {strides = array<i32>} : memref<256x18xf32, #tpu.memory_space<vmem>>, vector<256x2xf32>,
    %c1_57 = arith.constant 1 : index
    %c1_58 = arith.constant 1 : index
    %c0_59 = arith.constant 0 : index
    %65 = vector.load %arg10[%c1_57, %c1_58, %c0_59] : memref<18x18x2xf32, #tpu.memory_space<vmem>>, vector<16x16x2xf32>
    %66 = vector.shape_cast %65 : vector<16x16x2xf32> to vector<256x2xf32>
    %c0_60 = arith.constant 0 : index
    %c8 = arith.constant 8 : index
    %67 = vector.load %arg11[%c0_60, %c8] : memref<256x18xf32, #tpu.memory_space<vmem>>, vector<256x2xf32>
    tpu.vector_store %arg11[%c0_60, %c8], %66 {strides = array<i32>} : memref<256x18xf32, #tpu.memory_space<vmem>>, vector<256x2xf32>,
    %c1_61 = arith.constant 1 : index
    %c2_62 = arith.constant 2 : index
    %c0_63 = arith.constant 0 : index
    %68 = vector.load %arg10[%c1_61, %c2_62, %c0_63] : memref<18x18x2xf32, #tpu.memory_space<vmem>>, vector<16x16x2xf32>
    %69 = vector.shape_cast %68 : vector<16x16x2xf32> to vector<256x2xf32>
    %c0_64 = arith.constant 0 : index
    %c10 = arith.constant 10 : index
    %70 = vector.load %arg11[%c0_64, %c10] : memref<256x18xf32, #tpu.memory_space<vmem>>, vector<256x2xf32>
    tpu.vector_store %arg11[%c0_64, %c10], %69 {strides = array<i32>} : memref<256x18xf32, #tpu.memory_space<vmem>>, vector<256x2xf32>,
    %c2_65 = arith.constant 2 : index
    %c0_66 = arith.constant 0 : index
    %c0_67 = arith.constant 0 : index
    %71 = vector.load %arg10[%c2_65, %c0_66, %c0_67] : memref<18x18x2xf32, #tpu.memory_space<vmem>>, vector<16x16x2xf32>
    %72 = vector.shape_cast %71 : vector<16x16x2xf32> to vector<256x2xf32>
    %c0_68 = arith.constant 0 : index
    %c12 = arith.constant 12 : index
    %73 = vector.load %arg11[%c0_68, %c12] : memref<256x18xf32, #tpu.memory_space<vmem>>, vector<256x2xf32>
    tpu.vector_store %arg11[%c0_68, %c12], %72 {strides = array<i32>} : memref<256x18xf32, #tpu.memory_space<vmem>>, vector<256x2xf32>,
    %c2_69 = arith.constant 2 : index
    %c1_70 = arith.constant 1 : index
    %c0_71 = arith.constant 0 : index
    %74 = vector.load %arg10[%c2_69, %c1_70, %c0_71] : memref<18x18x2xf32, #tpu.memory_space<vmem>>, vector<16x16x2xf32>
    %75 = vector.shape_cast %74 : vector<16x16x2xf32> to vector<256x2xf32>
    %c0_72 = arith.constant 0 : index
    %c14 = arith.constant 14 : index
    %76 = vector.load %arg11[%c0_72, %c14] : memref<256x18xf32, #tpu.memory_space<vmem>>, vector<256x2xf32>
    tpu.vector_store %arg11[%c0_72, %c14], %75 {strides = array<i32>} : memref<256x18xf32, #tpu.memory_space<vmem>>, vector<256x2xf32>,
    %c2_73 = arith.constant 2 : index
    %c2_74 = arith.constant 2 : index
    %c0_75 = arith.constant 0 : index
    %77 = vector.load %arg10[%c2_73, %c2_74, %c0_75] : memref<18x18x2xf32, #tpu.memory_space<vmem>>, vector<16x16x2xf32>
    %78 = vector.shape_cast %77 : vector<16x16x2xf32> to vector<256x2xf32>
    %c0_76 = arith.constant 0 : index
    %c16 = arith.constant 16 : index
    %79 = vector.load %arg11[%c0_76, %c16] : memref<256x18xf32, #tpu.memory_space<vmem>>, vector<256x2xf32>
    tpu.vector_store %arg11[%c0_76, %c16], %78 {strides = array<i32>} : memref<256x18xf32, #tpu.memory_space<vmem>>, vector<256x2xf32>,
    %c0_77 = arith.constant 0 : index
    %c0_78 = arith.constant 0 : index
    %80 = vector.load %arg11[%c0_77, %c0_78] : memref<256x18xf32, #tpu.memory_space<vmem>>, vector<256x18xf32>
    %c0_79 = arith.constant 0 : index
    %c0_80 = arith.constant 0 : index
    %81 = vector.load %arg7[%c0_79, %c0_80] : memref<18x4xf32, #tpu.memory_space<vmem>>, vector<18x4xf32>
    %cst_81 = arith.constant dense<0.000000e+00> : vector<256x4xf32>
    %82 = tpu.matmul %80, %81, %cst_81 {dimension_numbers = #tpu.dot_dimension_numbers<[1], [0], [0], [1], [0, 0, 1, 1], [], []>} : vector<256x18xf32>, vector<18x4xf32>, vector<256x4xf32> -> vector<256x4xf32>
    %c0_82 = arith.constant 0 : index
    %c0_83 = arith.constant 0 : index
    %83 = vector.load %arg8[%c0_82, %c0_83] : memref<1x4xf32, #tpu.memory_space<vmem>>, vector<1x4xf32>
    %84 = vector.broadcast %83 : vector<1x4xf32> to vector<256x4xf32>
    %85 = arith.addf %82, %84 : vector<256x4xf32>
    %cst_84 = arith.constant 0.000000e+00 : f32
    %86 = vector.broadcast %cst_84 : f32 to vector<256x4xf32>
    %87 = arith.subf %86, %85 : vector<256x4xf32>
    %88 = math.exp %87 : vector<256x4xf32>
    %cst_85 = arith.constant 1.000000e+00 : f32
    %89 = vector.broadcast %cst_85 : f32 to vector<256x4xf32>
    %90 = arith.addf %89, %88 : vector<256x4xf32>
    %91 = tpu.reciprocal %90 : vector<256x4xf32> -> vector<256x4xf32>
    %92 = arith.mulf %85, %91 : vector<256x4xf32>
    %93 = arith.addf %92, %3 : vector<256x4xf32>
    %94 = vector.shape_cast %93 : vector<256x4xf32> to vector<1x16x16x4xf32>
    %c0_86 = arith.constant 0 : index
    %c0_87 = arith.constant 0 : index
    %c0_88 = arith.constant 0 : index
    %c0_89 = arith.constant 0 : index
    %95 = vector.load %arg9[%c0_86, %c0_87, %c0_88, %c0_89] : memref<1x16x16x4xf32, #tpu.memory_space<vmem>>, vector<1x16x16x4xf32>
    tpu.vector_store %arg9[%c0_86, %c0_87, %c0_88, %c0_89], %94 {strides = array<i32>} : memref<1x16x16x4xf32, #tpu.memory_space<vmem>>, vector<1x16x16x4xf32>,
    return
  }
  func.func @transform_0(%arg0: i32, %arg1: i32) -> (i32, i32, i32, i32) {
    %c0_i32 = arith.constant 0 : i32
    %c0_i32_0 = arith.constant 0 : i32
    %c0_i32_1 = arith.constant 0 : i32
    return %arg0, %arg1, %c0_i32, %c0_i32_0 : i32, i32, i32, i32
  }
  func.func @transform_1(%arg0: i32, %arg1: i32) -> (i32, i32, i32, i32) {
    %c16_i32 = arith.constant 16 : i32
    %0 = arith.muli %arg1, %c16_i32 : i32
    %c1_i32 = arith.constant 1 : i32
    %1 = arith.subi %0, %c1_i32 : i32
    %c0_i32 = arith.constant 0 : i32
    %2 = arith.maxsi %1, %c0_i32 : i32
    %c0_i32_0 = arith.constant 0 : i32
    %c0_i32_1 = arith.constant 0 : i32
    %c0_i32_2 = arith.constant 0 : i32
    return %arg0, %2, %c0_i32_0, %c0_i32_1 : i32, i32, i32, i32
  }
  func.func @transform_2(%arg0: i32, %arg1: i32) -> (i32, i32, i32, i32) {
    %c16_i32 = arith.constant 16 : i32
    %0 = arith.muli %arg1, %c16_i32 : i32
    %c16_i32_0 = arith.constant 16 : i32
    %1 = arith.addi %0, %c16_i32_0 : i32
    %c15_i32 = arith.constant 15 : i32
    %2 = arith.minsi %1, %c15_i32 : i32
    %c0_i32 = arith.constant 0 : i32
    %c0_i32_1 = arith.constant 0 : i32
    %c0_i32_2 = arith.constant 0 : i32
    return %arg0, %2, %c0_i32, %c0_i32_1 : i32, i32, i32, i32
  }
  func.func @transform_3(%arg0: i32, %arg1: i32) -> (i32, i32) {
    %c0_i32 = arith.constant 0 : i32
    %c0_i32_0 = arith.constant 0 : i32
    %c0_i32_1 = arith.constant 0 : i32
    return %c0_i32, %c0_i32_0 : i32, i32
  }
  func.func @transform_4(%arg0: i32, %arg1: i32) -> (i32, i32) {
    %c0_i32 = arith.constant 0 : i32
    %c0_i32_0 = arith.constant 0 : i32
    %c0_i32_1 = arith.constant 0 : i32
    return %c0_i32, %c0_i32_0 : i32, i32
  }
  func.func @transform_5(%arg0: i32, %arg1: i32) -> (i32, i32) {
    %c0_i32 = arith.constant 0 : i32
    %c0_i32_0 = arith.constant 0 : i32
    %c0_i32_1 = arith.constant 0 : i32
    return %c0_i32, %c0_i32_0 : i32, i32
  }
  func.func @transform_6(%arg0: i32, %arg1: i32) -> (i32, i32) {
    %c0_i32 = arith.constant 0 : i32
    %c0_i32_0 = arith.constant 0 : i32
    %c0_i32_1 = arith.constant 0 : i32
    return %c0_i32, %c0_i32_0 : i32, i32
  }
  func.func @transform_7(%arg0: i32, %arg1: i32) -> (i32, i32, i32, i32) {
    %c0_i32 = arith.constant 0 : i32
    %c0_i32_0 = arith.constant 0 : i32
    %c0_i32_1 = arith.constant 0 : i32
    return %arg0, %arg1, %c0_i32, %c0_i32_0 : i32, i32, i32, i32
  }
}

</mosaic_0001>

<llo_original>
// kernel: tpu_custom_call.1
$region0: #{tpu_custom_call.1}
  #allocation0 [shape = 'u32[]', space=smem, size = 0x4, offset = 0x4, fixed_abs, tag = 'smem constant byte address 0x4 - core index']
  #allocation1 [shape = 'u32[144,128]{1,0:T(1,128)}', space=vmem, size = 0x12000, scoped, tag = 'internal scratch']
  #allocation2 [shape = 'f32[18,18,2]{2,1,0:T(8,128)}', space=vmem, size = 0x36000, scoped, tag = 'scratch operand']
  #allocation3 [shape = 'f32[256,18]{1,0:T(8,128)}', space=vmem, size = 0x20000, scoped, tag = 'scratch operand']
  %s0 = inlined_call_operand.vmem [shape: f32[2,16,16,4], index: 0, kind: input, shape index: {}]
  %s1 = inlined_call_operand.vmem [shape: f32[2,16,16,4], index: 1, kind: input, shape index: {}]
  %s2 = inlined_call_operand.vmem [shape: f32[2,16,16,4], index: 2, kind: input, shape index: {}]
  %s3 = inlined_call_operand.vmem [shape: f32[4,2], index: 3, kind: input, shape index: {}]
  %s4 = inlined_call_operand.vmem [shape: f32[1,2], index: 4, kind: input, shape index: {}]
  %s5 = inlined_call_operand.vmem [shape: f32[18,4], index: 5, kind: input, shape index: {}]
  %s6 = inlined_call_operand.vmem [shape: f32[1,4], index: 6, kind: input, shape index: {}]
  %s7 = inlined_call_operand.vmem [shape: f32[2,16,16,4], index: 7, kind: output, shape index: {}]
  %s8 = sld [smem:[#allocation0]]
  $region61: #{tpu_custom_call.1} parent=0
    _
  %s10 = ssub.s32 1, %s8
  %s11 = scalar_select 0, %s10, %s8
  loop: start=0, step=1, limit=4
  $region2: #{tpu_custom_call.1} parent=0 // loop_pre_header
    _
  $region3: #{tpu_custom_call.1} parent=0 // loop_header
    %s13 = sphi 0, %s17
    %p14 = scmp.ge.s32.totalorder %s13, 4
    %s20 = sphi 0, %s32
    %s21 = sphi 0, %s28
    %s22 = sphi 0, %s20
    %s23 = sphi 0, %s21
    %s24 = sphi 0, %s22
    %s25 = sphi 0, %s23
    %s37 = sphi 0, %s39
    %s40 = sphi 0, %s37
    %s41 = sphi 0, %s40
    %s57 = sphi 0, %s41
    %s73 = sphi 0, %s75
    %s76 = sphi 0, %s73
    %s77 = sphi 0, %s76
    %s93 = sphi 0, %s77
    %s109 = sphi 0, %s111
    %s112 = sphi 0, %s109
    %s113 = sphi 0, %s112
    %s129 = sphi 0, %s113
    %s133 = sphi 0, %s133
    %s135 = sphi 0, %s133
    %s136 = sphi 0, %s135
    %s150 = sphi 0, %s136
    %s154 = sphi 0, %s154
    %s156 = sphi 0, %s154
    %s157 = sphi 0, %s156
    %s171 = sphi 0, %s157
    %s175 = sphi 0, %s175
    %s177 = sphi 0, %s175
    %s178 = sphi 0, %s177
    %s192 = sphi 0, %s178
    %s196 = sphi 0, %s196
    %s198 = sphi 0, %s196
    %s199 = sphi 0, %s198
    %s213 = sphi 0, %s199
    %s221 = sphi 0, %s223
    %s224 = sphi 0, %s221
    %s225 = sphi 0, %s224
    %s241 = sphi 0, %s225
  $region4: #{tpu_custom_call.1} parent=0 // loop_header_branch
    %16 = sbr.rel (%p14) target = $region8
  $region5: #{tpu_custom_call.1} parent=0 // loop_body
    %s18 = ssub.s32 %s13, 1
    %s19 = ssub.s32 %s13, 2
    %s26 = sadd.s32 1, %s21
    %p27 = scmp.ge.s32.totalorder %s26, 1
    %s28 = scalar_select %p27, 0, %s26
    %s29 = sadd.s32 1, %s20
    %s30 = scalar_select %p27, %s29, %s20
    %p31 = scmp.ge.s32.totalorder %s30, 2
    %s32 = scalar_select %p31, 0, %s30
    %s33 = ssub.s32 %s20, %s32
    %s34 = ssub.s32 %s21, %s28
    %s35 = sor.u32 %s33, %s34
    %p36 = scmp.eq.s32.totalorder %s35, 0
    %s38 = sadd.s32 %s37, 1
    %s39 = scalar_select %p36, %s37, %s38
    %p42 = pneg %p36
    %p43 = scmp.eq.s32.totalorder %s13, 1
    %p44 = por %p42, %p43
    %p45 = scmp.ne.s32.totalorder %s37, %s40
    %p46 = scmp.eq.s32.totalorder %s13, 0
    %p47 = por %p45, %p46
    %p48 = scmp.ne.s32.totalorder %s37, %s40
    %p49 = scmp.eq.s32.totalorder %s18, 1
    %p50 = por %p48, %p49
    %p51 = scmp.ne.s32.totalorder %s40, %s41
    %p52 = scmp.eq.s32.totalorder %s18, 0
    %p53 = por %p51, %p52
    %p54 = scmp.ne.s32.totalorder %s40, %s41
    %p55 = scmp.eq.s32.totalorder %s19, 1
    %p56 = por %p54, %p55
    %p58 = scmp.ne.s32.totalorder %s41, %s57
    %p59 = scmp.eq.s32.totalorder %s19, 0
    %p60 = por %p58, %p59
    %s61 = smul.u32 %s21, 16
    %s62 = ssub.s32 %s61, 1
    %p63 = scmp.gt.s32.totalorder %s62, 0
    %s64 = scalar_select %p63, %s62, 0
    %s65 = smul.u32 %s28, 16
    %s66 = ssub.s32 %s65, 1
    %p67 = scmp.gt.s32.totalorder %s66, 0
    %s68 = scalar_select %p67, %s66, 0
    %s69 = ssub.s32 %s20, %s32
    %s70 = ssub.s32 %s64, %s68
    %s71 = sor.u32 %s69, %s70
    %p72 = scmp.eq.s32.totalorder %s71, 0
    %s74 = sadd.s32 %s73, 1
    %s75 = scalar_select %p72, %s73, %s74
    %p78 = pneg %p72
    %p79 = scmp.eq.s32.totalorder %s13, 1
    %p80 = por %p78, %p79
    %p81 = scmp.ne.s32.totalorder %s73, %s76
    %p82 = scmp.eq.s32.totalorder %s13, 0
    %p83 = por %p81, %p82
    %p84 = scmp.ne.s32.totalorder %s73, %s76
    %p85 = scmp.eq.s32.totalorder %s18, 1
    %p86 = por %p84, %p85
    %p87 = scmp.ne.s32.totalorder %s76, %s77
    %p88 = scmp.eq.s32.totalorder %s18, 0
    %p89 = por %p87, %p88
    %p90 = scmp.ne.s32.totalorder %s76, %s77
    %p91 = scmp.eq.s32.totalorder %s19, 1
    %p92 = por %p90, %p91
    %p94 = scmp.ne.s32.totalorder %s77, %s93
    %p95 = scmp.eq.s32.totalorder %s19, 0
    %p96 = por %p94, %p95
    %s97 = smul.u32 %s21, 16
    %s98 = sadd.s32 %s97, 16
    %p99 = scmp.lt.s32.totalorder %s98, 15
    %s100 = scalar_select %p99, %s98, 15
    %s101 = smul.u32 %s28, 16
    %s102 = sadd.s32 %s101, 16
    %p103 = scmp.lt.s32.totalorder %s102, 15
    %s104 = scalar_select %p103, %s102, 15
    %s105 = ssub.s32 %s20, %s32
    %s106 = ssub.s32 %s100, %s104
    %s107 = sor.u32 %s105, %s106
    %p108 = scmp.eq.s32.totalorder %s107, 0
    %s110 = sadd.s32 %s109, 1
    %s111 = scalar_select %p108, %s109, %s110
    %p114 = pneg %p108
    %p115 = scmp.eq.s32.totalorder %s13, 1
    %p116 = por %p114, %p115
    %p117 = scmp.ne.s32.totalorder %s109, %s112
    %p118 = scmp.eq.s32.totalorder %s13, 0
    %p119 = por %p117, %p118
    %p120 = scmp.ne.s32.totalorder %s109, %s112
    %p121 = scmp.eq.s32.totalorder %s18, 1
    %p122 = por %p120, %p121
    %p123 = scmp.ne.s32.totalorder %s112, %s113
    %p124 = scmp.eq.s32.totalorder %s18, 0
    %p125 = por %p123, %p124
    %p126 = scmp.ne.s32.totalorder %s112, %s113
    %p127 = scmp.eq.s32.totalorder %s19, 1
    %p128 = por %p126, %p127
    %p130 = scmp.ne.s32.totalorder %s113, %s129
    %p131 = scmp.eq.s32.totalorder %s19, 0
    %p132 = por %p130, %p131
    %s134 = sadd.s32 %s133, 1
    %p137 = scmp.eq.s32.totalorder %s13, 1
    %p138 = scmp.ne.s32.totalorder %s133, %s135
    %p139 = scmp.eq.s32.totalorder %s13, 0
    %p140 = por %p138, %p139
    %p141 = scmp.ne.s32.totalorder %s133, %s135
    %p142 = scmp.eq.s32.totalorder %s18, 1
    %p143 = por %p141, %p142
    %p144 = scmp.ne.s32.totalorder %s135, %s136
    %p145 = scmp.eq.s32.totalorder %s18, 0
    %p146 = por %p144, %p145
    %p147 = scmp.ne.s32.totalorder %s135, %s136
    %p148 = scmp.eq.s32.totalorder %s19, 1
    %p149 = por %p147, %p148
    %p151 = scmp.ne.s32.totalorder %s136, %s150
    %p152 = scmp.eq.s32.totalorder %s19, 0
    %p153 = por %p151, %p152
    %s155 = sadd.s32 %s154, 1
    %p158 = scmp.eq.s32.totalorder %s13, 1
    %p159 = scmp.ne.s32.totalorder %s154, %s156
    %p160 = scmp.eq.s32.totalorder %s13, 0
    %p161 = por %p159, %p160
    %p162 = scmp.ne.s32.totalorder %s154, %s156
    %p163 = scmp.eq.s32.totalorder %s18, 1
    %p164 = por %p162, %p163
    %p165 = scmp.ne.s32.totalorder %s156, %s157
    %p166 = scmp.eq.s32.totalorder %s18, 0
    %p167 = por %p165, %p166
    %p168 = scmp.ne.s32.totalorder %s156, %s157
    %p169 = scmp.eq.s32.totalorder %s19, 1
    %p170 = por %p168, %p169
    %p172 = scmp.ne.s32.totalorder %s157, %s171
    %p173 = scmp.eq.s32.totalorder %s19, 0
    %p174 = por %p172, %p173
    %s176 = sadd.s32 %s175, 1
    %p179 = scmp.eq.s32.totalorder %s13, 1
    %p180 = scmp.ne.s32.totalorder %s175, %s177
    %p181 = scmp.eq.s32.totalorder %s13, 0
    %p182 = por %p180, %p181
    %p183 = scmp.ne.s32.totalorder %s175, %s177
    %p184 = scmp.eq.s32.totalorder %s18, 1
    %p185 = por %p183, %p184
    %p186 = scmp.ne.s32.totalorder %s177, %s178
    %p187 = scmp.eq.s32.totalorder %s18, 0
    %p188 = por %p186, %p187
    %p189 = scmp.ne.s32.totalorder %s177, %s178
    %p190 = scmp.eq.s32.totalorder %s19, 1
    %p191 = por %p189, %p190
    %p193 = scmp.ne.s32.totalorder %s178, %s192
    %p194 = scmp.eq.s32.totalorder %s19, 0
    %p195 = por %p193, %p194
    %s197 = sadd.s32 %s196, 1
    %p200 = scmp.eq.s32.totalorder %s13, 1
    %p201 = scmp.ne.s32.totalorder %s196, %s198
    %p202 = scmp.eq.s32.totalorder %s13, 0
    %p203 = por %p201, %p202
    %p204 = scmp.ne.s32.totalorder %s196, %s198
    %p205 = scmp.eq.s32.totalorder %s18, 1
    %p206 = por %p204, %p205
    %p207 = scmp.ne.s32.totalorder %s198, %s199
    %p208 = scmp.eq.s32.totalorder %s18, 0
    %p209 = por %p207, %p208
    %p210 = scmp.ne.s32.totalorder %s198, %s199
    %p211 = scmp.eq.s32.totalorder %s19, 1
    %p212 = por %p210, %p211
    %p214 = scmp.ne.s32.totalorder %s199, %s213
    %p215 = scmp.eq.s32.totalorder %s19, 0
    %p216 = por %p214, %p215
    %s217 = ssub.s32 %s20, %s32
    %s218 = ssub.s32 %s21, %s28
    %s219 = sor.u32 %s217, %s218
    %p220 = scmp.eq.s32.totalorder %s219, 0
    %s222 = sadd.s32 %s221, 1
    %s223 = scalar_select %p220, %s221, %s222
    %p226 = pneg %p220
    %p227 = scmp.eq.s32.totalorder %s13, 1
    %p228 = por %p226, %p227
    %p229 = scmp.ne.s32.totalorder %s221, %s224
    %p230 = scmp.eq.s32.totalorder %s13, 0
    %p231 = por %p229, %p230
    %p232 = scmp.ne.s32.totalorder %s221, %s224
    %p233 = scmp.eq.s32.totalorder %s18, 1
    %p234 = por %p232, %p233
    %p235 = scmp.ne.s32.totalorder %s224, %s225
    %p236 = scmp.eq.s32.totalorder %s18, 0
    %p237 = por %p235, %p236
    %p238 = scmp.ne.s32.totalorder %s224, %s225
    %p239 = scmp.eq.s32.totalorder %s19, 1
    %p240 = por %p238, %p239
    %p242 = scmp.ne.s32.totalorder %s225, %s241
    %p243 = scmp.eq.s32.totalorder %s19, 0
    %p244 = por %p242, %p243
    %p245 = scmp.le.s32.totalorder 1, %s13
    %p246 = scmp.lt.s32.totalorder %s13, 3
    %p247 = pnand %p245, %p246
    %p248 = pneg %p247
    // Predicated region
    $region9: #{tpu_custom_call.1} parent=5 // pred_check
      _
    $region10: #{tpu_custom_call.1} parent=5 // pred_check_branch
      %250 = sbr.rel (%p247) target = $region12
    $region11: #{tpu_custom_call.1} parent=5 // pred_region
      %s251 = ssub.s32 %s13, 1
      // Predicated region
      $region13: #{tpu_custom_call.1} parent=11 // pred_check
        %p252 = pneg %p146
      $region14: #{tpu_custom_call.1} parent=11 // pred_check_branch
        %254 = sbr.rel (%p252) target = $region16
      $region15: #{tpu_custom_call.1} parent=11 // pred_region
        _
      $region16: #{tpu_custom_call.1} parent=11 // pred_fallthru
        _
      // Predicated region
      $region17: #{tpu_custom_call.1} parent=11 // pred_check
        %p255 = pneg %p167
      $region18: #{tpu_custom_call.1} parent=11 // pred_check_branch
        %257 = sbr.rel (%p255) target = $region20
      $region19: #{tpu_custom_call.1} parent=11 // pred_region
        _
      $region20: #{tpu_custom_call.1} parent=11 // pred_fallthru
        _
      // Predicated region
      $region21: #{tpu_custom_call.1} parent=11 // pred_check
        %p258 = pneg %p188
      $region22: #{tpu_custom_call.1} parent=11 // pred_check_branch
        %260 = sbr.rel (%p258) target = $region24
      $region23: #{tpu_custom_call.1} parent=11 // pred_region
        _
      $region24: #{tpu_custom_call.1} parent=11 // pred_fallthru
        _
      // Predicated region
      $region25: #{tpu_custom_call.1} parent=11 // pred_check
        %p261 = pneg %p209
      $region26: #{tpu_custom_call.1} parent=11 // pred_check_branch
        %263 = sbr.rel (%p261) target = $region28
      $region27: #{tpu_custom_call.1} parent=11 // pred_region
        _
      $region28: #{tpu_custom_call.1} parent=11 // pred_fallthru
        _
    $region12: #{tpu_custom_call.1} parent=5 // pred_fallthru
      _
    %p264 = scmp.lt.s32.totalorder %s13, 2
    // Predicated region
    $region29: #{tpu_custom_call.1} parent=5 // pred_check
      %p265 = pneg %p264
    $region30: #{tpu_custom_call.1} parent=5 // pred_check_branch
      %267 = sbr.rel (%p265) target = $region32
    $region31: #{tpu_custom_call.1} parent=5 // pred_region
      // Predicated region
      $region33: #{tpu_custom_call.1} parent=31 // pred_check
        %p268 = pneg %p47
      $region34: #{tpu_custom_call.1} parent=31 // pred_check_branch
        %270 = sbr.rel (%p268) target = $region36
      $region35: #{tpu_custom_call.1} parent=31 // pred_region
        %s271 = smul.u32 16, %s21
        %p272 = scmp.lt.s32.totalorder %s20, 1
        %s273 = scalar_select %p272, %s20, 1
        %p274 = scmp.lt.s32.totalorder %s271, 15
        %s275 = scalar_select %p274, %s271, 15
        %s276 = smul.addr %s275, 2
        %s277 = smul.addr %s273, 32
        %s278 = sadd.s32 %s276, %s277
        %s279 = smul.addr %s278, 8
        %s280 = scalar_lea.vmem %s0, %s279
        %s281 = smul.u32 16, %s21
      $region36: #{tpu_custom_call.1} parent=31 // pred_fallthru
        _
      // Predicated region
      $region37: #{tpu_custom_call.1} parent=31 // pred_check
        %p282 = pneg %p83
      $region38: #{tpu_custom_call.1} parent=31 // pred_check_branch
        %284 = sbr.rel (%p282) target = $region40
      $region39: #{tpu_custom_call.1} parent=31 // pred_region
        %s285 = smul.u32 %s21, 16
        %s286 = ssub.s32 %s285, 1
        %p287 = scmp.gt.s32.totalorder %s286, 0
        %s288 = scalar_select %p287, %s286, 0
        %p289 = scmp.lt.s32.totalorder %s20, 1
        %s290 = scalar_select %p289, %s20, 1
        %p291 = scmp.lt.s32.totalorder %s288, 15
        %s292 = scalar_select %p291, %s288, 15
        %s293 = smul.addr %s292, 2
        %s294 = smul.addr %s290, 32
        %s295 = sadd.s32 %s293, %s294
        %s296 = smul.addr %s295, 8
        %s297 = scalar_lea.vmem %s1, %s296
        %s298 = smul.u32 %s21, 16
        %s299 = ssub.s32 %s298, 1
        %p300 = scmp.gt.s32.totalorder %s299, 0
        %s301 = scalar_select %p300, %s299, 0
      $region40: #{tpu_custom_call.1} parent=31 // pred_fallthru
        _
      // Predicated region
      $region41: #{tpu_custom_call.1} parent=31 // pred_check
        %p302 = pneg %p119
      $region42: #{tpu_custom_call.1} parent=31 // pred_check_branch
        %304 = sbr.rel (%p302) target = $region44
      $region43: #{tpu_custom_call.1} parent=31 // pred_region
        %s305 = smul.u32 %s21, 16
        %s306 = sadd.s32 %s305, 16
        %p307 = scmp.lt.s32.totalorder %s306, 15
        %s308 = scalar_select %p307, %s306, 15
        %p309 = scmp.lt.s32.totalorder %s20, 1
        %s310 = scalar_select %p309, %s20, 1
        %p311 = scmp.lt.s32.totalorder %s308, 15
        %s312 = scalar_select %p311, %s308, 15
        %s313 = smul.addr %s312, 2
        %s314 = smul.addr %s310, 32
        %s315 = sadd.s32 %s313, %s314
        %s316 = smul.addr %s315, 8
        %s317 = scalar_lea.vmem %s2, %s316
        %s318 = smul.u32 %s21, 16
        %s319 = sadd.s32 %s318, 16
        %p320 = scmp.lt.s32.totalorder %s319, 15
        %s321 = scalar_select %p320, %s319, 15
      $region44: #{tpu_custom_call.1} parent=31 // pred_fallthru
        _
    $region32: #{tpu_custom_call.1} parent=5 // pred_fallthru
      _
    %p322 = scmp.le.s32.totalorder 1, %s13
    %p323 = scmp.lt.s32.totalorder %s13, 3
    %p324 = pnand %p322, %p323
    %p325 = pneg %p324
    // Predicated region
    $region45: #{tpu_custom_call.1} parent=5 // pred_check
      _
    $region46: #{tpu_custom_call.1} parent=5 // pred_check_branch
      %327 = sbr.rel (%p324) target = $region48
    $region47: #{tpu_custom_call.1} parent=5 // pred_region
      %s328 = ssub.s32 %s13, 1
      %s329 = smul.u32 16, %s23
      %p330 = scmp.lt.s32.totalorder %s22, 1
      %s331 = scalar_select %p330, %s22, 1
      %p332 = scmp.lt.s32.totalorder %s329, 15
      %s333 = scalar_select %p332, %s329, 15
      %s334 = smul.addr %s333, 2
      %s335 = smul.addr %s331, 32
      %s336 = sadd.s32 %s334, %s335
      %s337 = smul.addr %s336, 8
      %s338 = scalar_lea.vmem %s0, %s337
      %p339 = pneg %p53
      %p340 = pneg %p50
      %s341 = smul.u32 %s23, 16
      %s342 = ssub.s32 %s341, 1
      %p343 = scmp.gt.s32.totalorder %s342, 0
      %s344 = scalar_select %p343, %s342, 0
      %p345 = scmp.lt.s32.totalorder %s22, 1
      %s346 = scalar_select %p345, %s22, 1
      %p347 = scmp.lt.s32.totalorder %s344, 15
      %s348 = scalar_select %p347, %s344, 15
      %s349 = smul.addr %s348, 2
      %s350 = smul.addr %s346, 32
      %s351 = sadd.s32 %s349, %s350
      %s352 = smul.addr %s351, 8
      %s353 = scalar_lea.vmem %s1, %s352
      %p354 = pneg %p89
      %p355 = pneg %p86
      %s356 = smul.u32 %s23, 16
      %s357 = sadd.s32 %s356, 16
      %p358 = scmp.lt.s32.totalorder %s357, 15
      %s359 = scalar_select %p358, %s357, 15
      %p360 = scmp.lt.s32.totalorder %s22, 1
      %s361 = scalar_select %p360, %s22, 1
      %p362 = scmp.lt.s32.totalorder %s359, 15
      %s363 = scalar_select %p362, %s359, 15
      %s364 = smul.addr %s363, 2
      %s365 = smul.addr %s361, 32
      %s366 = sadd.s32 %s364, %s365
      %s367 = smul.addr %s366, 8
      %s368 = scalar_lea.vmem %s2, %s367
      %p369 = pneg %p125
      %p370 = pneg %p122
      %p371 = pneg %p146
      %p372 = pneg %p143
      %p373 = pneg %p167
      %p374 = pneg %p164
      %p375 = pneg %p188
      %p376 = pneg %p185
      %p377 = pneg %p209
      %p378 = pneg %p206
      %p379 = pneg %p237
      %p380 = pneg %p234
      %s381 = smul.u32 16, %s23
      %p382 = scmp.lt.s32.totalorder %s22, 1
      %s383 = scalar_select %p382, %s22, 1
      %p384 = scmp.lt.s32.totalorder %s381, 15
      %s385 = scalar_select %p384, %s381, 15
      %s386 = smul.addr %s385, 2
      %s387 = smul.addr %s383, 32
      %s388 = sadd.s32 %s386, %s387
      %s389 = smul.addr %s388, 8
      %s390 = scalar_lea.vmem %s7, %s389
      %s391 = smul.u32 16, %s23
      %p392 = scmp.lt.s32.totalorder %s22, 1
      %s393 = scalar_select %p392, %s22, 1
      %p394 = scmp.lt.s32.totalorder %s391, 15
      %s395 = scalar_select %p394, %s391, 15
      %s396 = smul.addr %s395, 2
      %s397 = smul.addr %s393, 32
      %s398 = sadd.s32 %s396, %s397
      %s399 = smul.addr %s398, 8
      %s400 = scalar_lea.vmem %s0, %s399
      %s401 = smul.u32 16, %s23
      %s402 = smul.u32 %s23, 16
      %s403 = ssub.s32 %s402, 1
      %p404 = scmp.gt.s32.totalorder %s403, 0
      %s405 = scalar_select %p404, %s403, 0
      %p406 = scmp.lt.s32.totalorder %s22, 1
      %s407 = scalar_select %p406, %s22, 1
      %p408 = scmp.lt.s32.totalorder %s405, 15
      %s409 = scalar_select %p408, %s405, 15
      %s410 = smul.addr %s409, 2
      %s411 = smul.addr %s407, 32
      %s412 = sadd.s32 %s410, %s411
      %s413 = smul.addr %s412, 8
      %s414 = scalar_lea.vmem %s1, %s413
      %s415 = smul.u32 %s23, 16
      %s416 = ssub.s32 %s415, 1
      %p417 = scmp.gt.s32.totalorder %s416, 0
      %s418 = scalar_select %p417, %s416, 0
      %s419 = smul.u32 %s23, 16
      %s420 = sadd.s32 %s419, 16
      %p421 = scmp.lt.s32.totalorder %s420, 15
      %s422 = scalar_select %p421, %s420, 15
      %p423 = scmp.lt.s32.totalorder %s22, 1
      %s424 = scalar_select %p423, %s22, 1
      %p425 = scmp.lt.s32.totalorder %s422, 15
      %s426 = scalar_select %p425, %s422, 15
      %s427 = smul.addr %s426, 2
      %s428 = smul.addr %s424, 32
      %s429 = sadd.s32 %s427, %s428
      %s430 = smul.addr %s429, 8
      %s431 = scalar_lea.vmem %s2, %s430
      %s432 = smul.u32 %s23, 16
      %s433 = sadd.s32 %s432, 16
      %p434 = scmp.lt.s32.totalorder %s433, 15
      %s435 = scalar_select %p434, %s433, 15
      %s436 = smul.u32 16, %s23
      %p437 = scmp.lt.s32.totalorder %s22, 1
      %s438 = scalar_select %p437, %s22, 1
      %p439 = scmp.lt.s32.totalorder %s436, 15
      %s440 = scalar_select %p439, %s436, 15
      %s441 = smul.addr %s440, 2
      %s442 = smul.addr %s438, 32
      %s443 = sadd.s32 %s441, %s442
      %s444 = smul.addr %s443, 8
      %s445 = scalar_lea.vmem %s7, %s444
      %s446 = smul.u32 16, %s23
      %v447 = vld [vmem:[%s3] sm:$0xf]
      %v448 = vld [vmem:[%s4] sm:$0x1]
      %v449 = vld [vmem:[%s400] sm:$0xff]
      %v450 = vld [vmem:[%s400 + $0x8] sm:$0xff]
      %v451 = vld [vmem:[%s400 + $0x10] sm:$0xff]
      %v452 = vld [vmem:[%s400 + $0x18] sm:$0xff]
      %v453 = vld [vmem:[%s400 + $0x20] sm:$0xff]
      %v454 = vld [vmem:[%s400 + $0x28] sm:$0xff]
      %v455 = vld [vmem:[%s400 + $0x30] sm:$0xff]
      %v456 = vld [vmem:[%s400 + $0x38] sm:$0xff]
      %v457 = vld [vmem:[%s400 + $0x40] sm:$0xff]
      %v458 = vld [vmem:[%s400 + $0x48] sm:$0xff]
      %v459 = vld [vmem:[%s400 + $0x50] sm:$0xff]
      %v460 = vld [vmem:[%s400 + $0x58] sm:$0xff]
      %v461 = vld [vmem:[%s400 + $0x60] sm:$0xff]
      %v462 = vld [vmem:[%s400 + $0x68] sm:$0xff]
      %v463 = vld [vmem:[%s400 + $0x70] sm:$0xff]
      %v464 = vld [vmem:[%s400 + $0x78] sm:$0xff]
      %v465 = vld [vmem:[%s400 + $0x80] sm:$0xff]
      %v466 = vld [vmem:[%s400 + $0x88] sm:$0xff]
      %v467 = vld [vmem:[%s400 + $0x90] sm:$0xff]
      %v468 = vld [vmem:[%s400 + $0x98] sm:$0xff]
      %v469 = vld [vmem:[%s400 + $0xa0] sm:$0xff]
      %v470 = vld [vmem:[%s400 + $0xa8] sm:$0xff]
      %v471 = vld [vmem:[%s400 + $0xb0] sm:$0xff]
      %v472 = vld [vmem:[%s400 + $0xb8] sm:$0xff]
      %v473 = vld [vmem:[%s400 + $0xc0] sm:$0xff]
      %v474 = vld [vmem:[%s400 + $0xc8] sm:$0xff]
      %v475 = vld [vmem:[%s400 + $0xd0] sm:$0xff]
      %v476 = vld [vmem:[%s400 + $0xd8] sm:$0xff]
      %v477 = vld [vmem:[%s400 + $0xe0] sm:$0xff]
      %v478 = vld [vmem:[%s400 + $0xe8] sm:$0xff]
      %v479 = vld [vmem:[%s400 + $0xf0] sm:$0xff]
      %v480 = vld [vmem:[%s400 + $0xf8] sm:$0xff]
      %v482 = vlaneseq
      %v483 = vshrl.u32 %v482, 7
      %v484 = vsub.s32 0, %v483
      %v485 = vrot.slane %v448, %v484
      %vm487 = vcmask 31744
      %v489 = vsel %vm487, %v449, 0
      %v492 = vsel %vm487, %v450, 0
      %v495 = vsel %vm487, %v451, 0
      %v498 = vsel %vm487, %v452, 0
      %v501 = vsel %vm487, %v453, 0
      %v504 = vsel %vm487, %v454, 0
      %v507 = vsel %vm487, %v455, 0
      %v510 = vsel %vm487, %v456, 0
      %v513 = vsel %vm487, %v457, 0
      %v516 = vsel %vm487, %v458, 0
      %v519 = vsel %vm487, %v459, 0
      %v522 = vsel %vm487, %v460, 0
      %v525 = vsel %vm487, %v461, 0
      %v528 = vsel %vm487, %v462, 0
      %v531 = vsel %vm487, %v463, 0
      %v534 = vsel %vm487, %v464, 0
      %v537 = vsel %vm487, %v465, 0
      %v540 = vsel %vm487, %v466, 0
      %v543 = vsel %vm487, %v467, 0
      %v546 = vsel %vm487, %v468, 0
      %v549 = vsel %vm487, %v469, 0
      %v552 = vsel %vm487, %v470, 0
      %v555 = vsel %vm487, %v471, 0
      %v558 = vsel %vm487, %v472, 0
      %v561 = vsel %vm487, %v473, 0
      %v564 = vsel %vm487, %v474, 0
      %v567 = vsel %vm487, %v475, 0
      %v570 = vsel %vm487, %v476, 0
      %v573 = vsel %vm487, %v477, 0
      %v576 = vsel %vm487, %v478, 0
      %v579 = vsel %vm487, %v479, 0
      %v582 = vsel %vm487, %v480, 0
      %vm584 = vcmask 1043456
      %v586 = vsel %vm584, %v447, 0
      %588 = vmatprep.subr.mxu0 0.0
      %589 = vmatpush1.msra.mxu0 0.0
      %590 = vmatprep.subr.mxu0 0.0
      %591 = vmatpush1.msra.mxu0 0.0
      %592 = vmatprep.subr.mxu0 0.0
      %593 = vmatpush1.msra.mxu0 0.0
      %594 = vmatprep.subr.mxu0 0.0
      %595 = vmatpush1.msra.mxu0 0.0
      %596 = vmatprep.subr.mxu0 0.0
      %597 = vmatpush1.msra.mxu0 0.0
      %598 = vmatprep.subr.mxu0 0.0
      %599 = vmatpush1.msra.mxu0 0.0
      %600 = vmatprep.subr.mxu0 0.0
      %601 = vmatpush1.msra.mxu0 0.0
      %602 = vmatprep.subr.mxu0 0.0
      %603 = vmatpush1.msra.mxu0 0.0
      %604 = vmatprep.subr.mxu0 0.0
      %605 = vmatpush1.msra.mxu0 0.0
      %606 = vmatprep.subr.mxu0 0.0
      %607 = vmatpush1.msra.mxu0 0.0
      %608 = vmatprep.subr.mxu0 0.0
      %609 = vmatpush1.msra.mxu0 0.0
      %610 = vmatprep.subr.mxu0 0.0
      %611 = vmatpush1.msra.mxu0 0.0
      %612 = vmatprep.subr.mxu0 0.0
      %613 = vmatpush1.msra.mxu0 0.0
      %614 = vmatprep.subr.mxu0 0.0
      %615 = vmatpush1.msra.mxu0 0.0
      %616 = vmatprep.subr.mxu0 0.0
      %617 = vmatpush1.msra.mxu0 0.0
      %618 = vmatprep.subr.mxu0 0.0
      %619 = vmatpush1.msra.mxu0 %v586
      %620 = vmatprep.subr.mxu0 0.0
      %621 = vmatpush2.msra.mxu0 0.0
      %622 = vmatprep.subr.mxu0 0.0
      %623 = vmatpush2.msra.mxu0 0.0
      %624 = vmatprep.subr.mxu0 0.0
      %625 = vmatpush2.msra.mxu0 0.0
      %626 = vmatprep.subr.mxu0 0.0
      %627 = vmatpush2.msra.mxu0 0.0
      %628 = vmatprep.subr.mxu0 0.0
      %629 = vmatpush2.msra.mxu0 0.0
      %630 = vmatprep.subr.mxu0 0.0
      %631 = vmatpush2.msra.mxu0 0.0
      %632 = vmatprep.subr.mxu0 0.0
      %633 = vmatpush2.msra.mxu0 0.0
      %634 = vmatprep.subr.mxu0 0.0
      %635 = vmatpush2.msra.mxu0 0.0
      %636 = vmatprep.subr.mxu0 0.0
      %637 = vmatpush2.msra.mxu0 0.0
      %638 = vmatprep.subr.mxu0 0.0
      %639 = vmatpush2.msra.mxu0 0.0
      %640 = vmatprep.subr.mxu0 0.0
      %641 = vmatpush2.msra.mxu0 0.0
      %642 = vmatprep.subr.mxu0 0.0
      %643 = vmatpush2.msra.mxu0 0.0
      %644 = vmatprep.subr.mxu0 0.0
      %645 = vmatpush2.msra.mxu0 0.0
      %646 = vmatprep.subr.mxu0 0.0
      %647 = vmatpush2.msra.mxu0 0.0
      %648 = vmatprep.subr.mxu0 0.0
      %649 = vmatpush2.msra.mxu0 0.0
      %650 = vmatprep.subr.mxu0 0.0
      %651 = vmatpush2.msra.mxu0 0.0
      %652 = vmatprep.mubr.f32.mxu0 0.0
      %653 = vmatmul.mubr.f32.gmra.mxu0 %v489
      %v654 = vpop.f32.mrf.mxu0
      %v655 = vadd.f32 %v485, %v654
      %v656 = vpop.f32.mrf.mxu0
      %657 = vmatprep.mubr.f32.mxu0 0.0
      %658 = vmatmul.mubr.f32.gmra.mxu0 %v492
      %v659 = vpop.f32.mrf.mxu0
      %v660 = vadd.f32 %v485, %v659
      %v661 = vpop.f32.mrf.mxu0
      %662 = vmatprep.mubr.f32.mxu0 0.0
      %663 = vmatmul.mubr.f32.gmra.mxu0 %v495
      %v664 = vpop.f32.mrf.mxu0
      %v665 = vadd.f32 %v485, %v664
      %v666 = vpop.f32.mrf.mxu0
      %667 = vmatprep.mubr.f32.mxu0 0.0
      %668 = vmatmul.mubr.f32.gmra.mxu0 %v498
      %v669 = vpop.f32.mrf.mxu0
      %v670 = vadd.f32 %v485, %v669
      %v671 = vpop.f32.mrf.mxu0
      %672 = vmatprep.mubr.f32.mxu0 0.0
      %673 = vmatmul.mubr.f32.gmra.mxu0 %v501
      %v674 = vpop.f32.mrf.mxu0
      %v675 = vadd.f32 %v485, %v674
      %v676 = vpop.f32.mrf.mxu0
      %677 = vmatprep.mubr.f32.mxu0 0.0
      %678 = vmatmul.mubr.f32.gmra.mxu0 %v504
      %v679 = vpop.f32.mrf.mxu0
      %v680 = vadd.f32 %v485, %v679
      %v681 = vpop.f32.mrf.mxu0
      %682 = vmatprep.mubr.f32.mxu0 0.0
      %683 = vmatmul.mubr.f32.gmra.mxu0 %v507
      %v684 = vpop.f32.mrf.mxu0
      %v685 = vadd.f32 %v485, %v684
      %v686 = vpop.f32.mrf.mxu0
      %687 = vmatprep.mubr.f32.mxu0 0.0
      %688 = vmatmul.mubr.f32.gmra.mxu0 %v510
      %v689 = vpop.f32.mrf.mxu0
      %v690 = vadd.f32 %v485, %v689
      %v691 = vpop.f32.mrf.mxu0
      %692 = vmatprep.mubr.f32.mxu0 0.0
      %693 = vmatmul.mubr.f32.gmra.mxu0 %v513
      %v694 = vpop.f32.mrf.mxu0
      %v695 = vadd.f32 %v485, %v694
      %v696 = vpop.f32.mrf.mxu0
      %697 = vmatprep.mubr.f32.mxu0 0.0
      %698 = vmatmul.mubr.f32.gmra.mxu0 %v516
      %v699 = vpop.f32.mrf.mxu0
      %v700 = vadd.f32 %v485, %v699
      %v701 = vpop.f32.mrf.mxu0
      %702 = vmatprep.mubr.f32.mxu0 0.0
      %703 = vmatmul.mubr.f32.gmra.mxu0 %v519
      %v704 = vpop.f32.mrf.mxu0
      %v705 = vadd.f32 %v485, %v704
      %v706 = vpop.f32.mrf.mxu0
      %707 = vmatprep.mubr.f32.mxu0 0.0
      %708 = vmatmul.mubr.f32.gmra.mxu0 %v522
      %v709 = vpop.f32.mrf.mxu0
      %v710 = vadd.f32 %v485, %v709
      %v711 = vpop.f32.mrf.mxu0
      %712 = vmatprep.mubr.f32.mxu0 0.0
      %713 = vmatmul.mubr.f32.gmra.mxu0 %v525
      %v714 = vpop.f32.mrf.mxu0
      %v715 = vadd.f32 %v485, %v714
      %v716 = vpop.f32.mrf.mxu0
      %717 = vmatprep.mubr.f32.mxu0 0.0
      %718 = vmatmul.mubr.f32.gmra.mxu0 %v528
      %v719 = vpop.f32.mrf.mxu0
      %v720 = vadd.f32 %v485, %v719
      %v721 = vpop.f32.mrf.mxu0
      %722 = vmatprep.mubr.f32.mxu0 0.0
      %723 = vmatmul.mubr.f32.gmra.mxu0 %v531
      %v724 = vpop.f32.mrf.mxu0
      %v725 = vadd.f32 %v485, %v724
      %v726 = vpop.f32.mrf.mxu0
      %727 = vmatprep.mubr.f32.mxu0 0.0
      %728 = vmatmul.mubr.f32.gmra.mxu0 %v534
      %v729 = vpop.f32.mrf.mxu0
      %v730 = vadd.f32 %v485, %v729
      %v731 = vpop.f32.mrf.mxu0
      %732 = vmatprep.mubr.f32.mxu0 0.0
      %733 = vmatmul.mubr.f32.gmra.mxu0 %v537
      %v734 = vpop.f32.mrf.mxu0
      %v735 = vadd.f32 %v485, %v734
      %v736 = vpop.f32.mrf.mxu0
      %737 = vmatprep.mubr.f32.mxu0 0.0
      %738 = vmatmul.mubr.f32.gmra.mxu0 %v540
      %v739 = vpop.f32.mrf.mxu0
      %v740 = vadd.f32 %v485, %v739
      %v741 = vpop.f32.mrf.mxu0
      %742 = vmatprep.mubr.f32.mxu0 0.0
      %743 = vmatmul.mubr.f32.gmra.mxu0 %v543
      %v744 = vpop.f32.mrf.mxu0
      %v745 = vadd.f32 %v485, %v744
      %v746 = vpop.f32.mrf.mxu0
      %747 = vmatprep.mubr.f32.mxu0 0.0
      %748 = vmatmul.mubr.f32.gmra.mxu0 %v546
      %v749 = vpop.f32.mrf.mxu0
      %v750 = vadd.f32 %v485, %v749
      %v751 = vpop.f32.mrf.mxu0
      %752 = vmatprep.mubr.f32.mxu0 0.0
      %753 = vmatmul.mubr.f32.gmra.mxu0 %v549
      %v754 = vpop.f32.mrf.mxu0
      %v755 = vadd.f32 %v485, %v754
      %v756 = vpop.f32.mrf.mxu0
      %757 = vmatprep.mubr.f32.mxu0 0.0
      %758 = vmatmul.mubr.f32.gmra.mxu0 %v552
      %v759 = vpop.f32.mrf.mxu0
      %v760 = vadd.f32 %v485, %v759
      %v761 = vpop.f32.mrf.mxu0
      %762 = vmatprep.mubr.f32.mxu0 0.0
      %763 = vmatmul.mubr.f32.gmra.mxu0 %v555
      %v764 = vpop.f32.mrf.mxu0
      %v765 = vadd.f32 %v485, %v764
      %v766 = vpop.f32.mrf.mxu0
      %767 = vmatprep.mubr.f32.mxu0 0.0
      %768 = vmatmul.mubr.f32.gmra.mxu0 %v558
      %v769 = vpop.f32.mrf.mxu0
      %v770 = vadd.f32 %v485, %v769
      %v771 = vpop.f32.mrf.mxu0
      %772 = vmatprep.mubr.f32.mxu0 0.0
      %773 = vmatmul.mubr.f32.gmra.mxu0 %v561
      %v774 = vpop.f32.mrf.mxu0
      %v775 = vadd.f32 %v485, %v774
      %v776 = vpop.f32.mrf.mxu0
      %777 = vmatprep.mubr.f32.mxu0 0.0
      %778 = vmatmul.mubr.f32.gmra.mxu0 %v564
      %v779 = vpop.f32.mrf.mxu0
      %v780 = vadd.f32 %v485, %v779
      %v781 = vpop.f32.mrf.mxu0
      %782 = vmatprep.mubr.f32.mxu0 0.0
      %783 = vmatmul.mubr.f32.gmra.mxu0 %v567
      %v784 = vpop.f32.mrf.mxu0
      %v785 = vadd.f32 %v485, %v784
      %v786 = vpop.f32.mrf.mxu0
      %787 = vmatprep.mubr.f32.mxu0 0.0
      %788 = vmatmul.mubr.f32.gmra.mxu0 %v570
      %v789 = vpop.f32.mrf.mxu0
      %v790 = vadd.f32 %v485, %v789
      %v791 = vpop.f32.mrf.mxu0
      %792 = vmatprep.mubr.f32.mxu0 0.0
      %793 = vmatmul.mubr.f32.gmra.mxu0 %v573
      %v794 = vpop.f32.mrf.mxu0
      %v795 = vadd.f32 %v485, %v794
      %v796 = vpop.f32.mrf.mxu0
      %797 = vmatprep.mubr.f32.mxu0 0.0
      %798 = vmatmul.mubr.f32.gmra.mxu0 %v576
      %v799 = vpop.f32.mrf.mxu0
      %v800 = vadd.f32 %v485, %v799
      %v801 = vpop.f32.mrf.mxu0
      %802 = vmatprep.mubr.f32.mxu0 0.0
      %803 = vmatmul.mubr.f32.gmra.mxu0 %v579
      %v804 = vpop.f32.mrf.mxu0
      %v805 = vadd.f32 %v485, %v804
      %v806 = vpop.f32.mrf.mxu0
      %807 = vmatprep.mubr.f32.mxu0 0.0
      %808 = vmatmul.mubr.f32.gmra.mxu0 %v582
      %v809 = vpop.f32.mrf.mxu0
      %v810 = vadd.f32 %v485, %v809
      %v811 = vpop.f32.mrf.mxu0
      %812 = vdwg.mxu0
      %v813 = vsub.f32 0.0, %v655
      %v814 = vsub.f32 0.0, %v660
      %v815 = vsub.f32 0.0, %v665
      %v816 = vsub.f32 0.0, %v670
      %v817 = vsub.f32 0.0, %v675
      %v818 = vsub.f32 0.0, %v680
      %v819 = vsub.f32 0.0, %v685
      %v820 = vsub.f32 0.0, %v690
      %v821 = vsub.f32 0.0, %v695
      %v822 = vsub.f32 0.0, %v700
      %v823 = vsub.f32 0.0, %v705
      %v824 = vsub.f32 0.0, %v710
      %v825 = vsub.f32 0.0, %v715
      %v826 = vsub.f32 0.0, %v720
      %v827 = vsub.f32 0.0, %v725
      %v828 = vsub.f32 0.0, %v730
      %v829 = vsub.f32 0.0, %v735
      %v830 = vsub.f32 0.0, %v740
      %v831 = vsub.f32 0.0, %v745
      %v832 = vsub.f32 0.0, %v750
      %v833 = vsub.f32 0.0, %v755
      %v834 = vsub.f32 0.0, %v760
      %v835 = vsub.f32 0.0, %v765
      %v836 = vsub.f32 0.0, %v770
      %v837 = vsub.f32 0.0, %v775
      %v838 = vsub.f32 0.0, %v780
      %v839 = vsub.f32 0.0, %v785
      %v840 = vsub.f32 0.0, %v790
      %v841 = vsub.f32 0.0, %v795
      %v842 = vsub.f32 0.0, %v800
      %v843 = vsub.f32 0.0, %v805
      %v844 = vsub.f32 0.0, %v810
      %v845 = vmul.f32 %v813, 1.442695
      %v846 = vpow.pop %v845
      %v847 = vmul.f32 %v814, 1.442695
      %v848 = vpow.pop %v847
      %v849 = vmul.f32 %v815, 1.442695
      %v850 = vpow.pop %v849
      %v851 = vmul.f32 %v816, 1.442695
      %v852 = vpow.pop %v851
      %v853 = vmul.f32 %v817, 1.442695
      %v854 = vpow.pop %v853
      %v855 = vmul.f32 %v818, 1.442695
      %v856 = vpow.pop %v855
      %v857 = vmul.f32 %v819, 1.442695
      %v858 = vpow.pop %v857
      %v859 = vmul.f32 %v820, 1.442695
      %v860 = vpow.pop %v859
      %v861 = vmul.f32 %v821, 1.442695
      %v862 = vpow.pop %v861
      %v863 = vmul.f32 %v822, 1.442695
      %v864 = vpow.pop %v863
      %v865 = vmul.f32 %v823, 1.442695
      %v866 = vpow.pop %v865
      %v867 = vmul.f32 %v824, 1.442695
      %v868 = vpow.pop %v867
      %v869 = vmul.f32 %v825, 1.442695
      %v870 = vpow.pop %v869
      %v871 = vmul.f32 %v826, 1.442695
      %v872 = vpow.pop %v871
      %v873 = vmul.f32 %v827, 1.442695
      %v874 = vpow.pop %v873
      %v875 = vmul.f32 %v828, 1.442695
      %v876 = vpow.pop %v875
      %v877 = vmul.f32 %v829, 1.442695
      %v878 = vpow.pop %v877
      %v879 = vmul.f32 %v830, 1.442695
      %v880 = vpow.pop %v879
      %v881 = vmul.f32 %v831, 1.442695
      %v882 = vpow.pop %v881
      %v883 = vmul.f32 %v832, 1.442695
      %v884 = vpow.pop %v883
      %v885 = vmul.f32 %v833, 1.442695
      %v886 = vpow.pop %v885
      %v887 = vmul.f32 %v834, 1.442695
      %v888 = vpow.pop %v887
      %v889 = vmul.f32 %v835, 1.442695
      %v890 = vpow.pop %v889
      %v891 = vmul.f32 %v836, 1.442695
      %v892 = vpow.pop %v891
      %v893 = vmul.f32 %v837, 1.442695
      %v894 = vpow.pop %v893
      %v895 = vmul.f32 %v838, 1.442695
      %v896 = vpow.pop %v895
      %v897 = vmul.f32 %v839, 1.442695
      %v898 = vpow.pop %v897
      %v899 = vmul.f32 %v840, 1.442695
      %v900 = vpow.pop %v899
      %v901 = vmul.f32 %v841, 1.442695
      %v902 = vpow.pop %v901
      %v903 = vmul.f32 %v842, 1.442695
      %v904 = vpow.pop %v903
      %v905 = vmul.f32 %v843, 1.442695
      %v906 = vpow.pop %v905
      %v907 = vmul.f32 %v844, 1.442695
      %v908 = vpow.pop %v907
      %v909 = vadd.f32 %v846, 1.0
      %v910 = vadd.f32 %v848, 1.0
      %v911 = vadd.f32 %v850, 1.0
      %v912 = vadd.f32 %v852, 1.0
      %v913 = vadd.f32 %v854, 1.0
      %v914 = vadd.f32 %v856, 1.0
      %v915 = vadd.f32 %v858, 1.0
      %v916 = vadd.f32 %v860, 1.0
      %v917 = vadd.f32 %v862, 1.0
      %v918 = vadd.f32 %v864, 1.0
      %v919 = vadd.f32 %v866, 1.0
      %v920 = vadd.f32 %v868, 1.0
      %v921 = vadd.f32 %v870, 1.0
      %v922 = vadd.f32 %v872, 1.0
      %v923 = vadd.f32 %v874, 1.0
      %v924 = vadd.f32 %v876, 1.0
      %v925 = vadd.f32 %v878, 1.0
      %v926 = vadd.f32 %v880, 1.0
      %v927 = vadd.f32 %v882, 1.0
      %v928 = vadd.f32 %v884, 1.0
      %v929 = vadd.f32 %v886, 1.0
      %v930 = vadd.f32 %v888, 1.0
      %v931 = vadd.f32 %v890, 1.0
      %v932 = vadd.f32 %v892, 1.0
      %v933 = vadd.f32 %v894, 1.0
      %v934 = vadd.f32 %v896, 1.0
      %v935 = vadd.f32 %v898, 1.0
      %v936 = vadd.f32 %v900, 1.0
      %v937 = vadd.f32 %v902, 1.0
      %v938 = vadd.f32 %v904, 1.0
      %v939 = vadd.f32 %v906, 1.0
      %v940 = vadd.f32 %v908, 1.0
      %v941 = vrcp.pop %v909
      %v942 = vrcp.pop %v910
      %v943 = vrcp.pop %v911
      %v944 = vrcp.pop %v912
      %v945 = vrcp.pop %v913
      %v946 = vrcp.pop %v914
      %v947 = vrcp.pop %v915
      %v948 = vrcp.pop %v916
      %v949 = vrcp.pop %v917
      %v950 = vrcp.pop %v918
      %v951 = vrcp.pop %v919
      %v952 = vrcp.pop %v920
      %v953 = vrcp.pop %v921
      %v954 = vrcp.pop %v922
      %v955 = vrcp.pop %v923
      %v956 = vrcp.pop %v924
      %v957 = vrcp.pop %v925
      %v958 = vrcp.pop %v926
      %v959 = vrcp.pop %v927
      %v960 = vrcp.pop %v928
      %v961 = vrcp.pop %v929
      %v962 = vrcp.pop %v930
      %v963 = vrcp.pop %v931
      %v964 = vrcp.pop %v932
      %v965 = vrcp.pop %v933
      %v966 = vrcp.pop %v934
      %v967 = vrcp.pop %v935
      %v968 = vrcp.pop %v936
      %v969 = vrcp.pop %v937
      %v970 = vrcp.pop %v938
      %v971 = vrcp.pop %v939
      %v972 = vrcp.pop %v940
      %v973 = vmul.f32 %v655, %v941
      %v974 = vmul.f32 %v660, %v942
      %v975 = vmul.f32 %v665, %v943
      %v976 = vmul.f32 %v670, %v944
      %v977 = vmul.f32 %v675, %v945
      %v978 = vmul.f32 %v680, %v946
      %v979 = vmul.f32 %v685, %v947
      %v980 = vmul.f32 %v690, %v948
      %v981 = vmul.f32 %v695, %v949
      %v982 = vmul.f32 %v700, %v950
      %v983 = vmul.f32 %v705, %v951
      %v984 = vmul.f32 %v710, %v952
      %v985 = vmul.f32 %v715, %v953
      %v986 = vmul.f32 %v720, %v954
      %v987 = vmul.f32 %v725, %v955
      %v988 = vmul.f32 %v730, %v956
      %v989 = vmul.f32 %v735, %v957
      %v990 = vmul.f32 %v740, %v958
      %v991 = vmul.f32 %v745, %v959
      %v992 = vmul.f32 %v750, %v960
      %v993 = vmul.f32 %v755, %v961
      %v994 = vmul.f32 %v760, %v962
      %v995 = vmul.f32 %v765, %v963
      %v996 = vmul.f32 %v770, %v964
      %v997 = vmul.f32 %v775, %v965
      %v998 = vmul.f32 %v780, %v966
      %v999 = vmul.f32 %v785, %v967
      %v1000 = vmul.f32 %v790, %v968
      %v1001 = vmul.f32 %v795, %v969
      %v1002 = vmul.f32 %v800, %v970
      %v1003 = vmul.f32 %v805, %v971
      %v1004 = vmul.f32 %v810, %v972
      %s1005 = scalar_lea.vmem [#allocation2], 24
      %vm1006 = vcmask 15360
      %1007 = vst.msk [vmem:[%s1005 + $0x1] sm:$0xff] %vm1006, %v973
      %1008 = vst.msk [vmem:[%s1005 + $0x9] sm:$0xff] %vm1006, %v974
      %1009 = vst.msk [vmem:[%s1005 + $0x19] sm:$0xff] %vm1006, %v975
      %1010 = vst.msk [vmem:[%s1005 + $0x21] sm:$0xff] %vm1006, %v976
      %1011 = vst.msk [vmem:[%s1005 + $0x31] sm:$0xff] %vm1006, %v977
      %1012 = vst.msk [vmem:[%s1005 + $0x39] sm:$0xff] %vm1006, %v978
      %1013 = vst.msk [vmem:[%s1005 + $0x49] sm:$0xff] %vm1006, %v979
      %1014 = vst.msk [vmem:[%s1005 + $0x51] sm:$0xff] %vm1006, %v980
      %1015 = vst.msk [vmem:[%s1005 + $0x61] sm:$0xff] %vm1006, %v981
      %1016 = vst.msk [vmem:[%s1005 + $0x69] sm:$0xff] %vm1006, %v982
      %1017 = vst.msk [vmem:[%s1005 + $0x79] sm:$0xff] %vm1006, %v983
      %1018 = vst.msk [vmem:[%s1005 + $0x81] sm:$0xff] %vm1006, %v984
      %1019 = vst.msk [vmem:[%s1005 + $0x91] sm:$0xff] %vm1006, %v985
      %1020 = vst.msk [vmem:[%s1005 + $0x99] sm:$0xff] %vm1006, %v986
      %1021 = vst.msk [vmem:[%s1005 + $0xa9] sm:$0xff] %vm1006, %v987
      %1022 = vst.msk [vmem:[%s1005 + $0xb1] sm:$0xff] %vm1006, %v988
      %1023 = vst.msk [vmem:[%s1005 + $0xc1] sm:$0xff] %vm1006, %v989
      %1024 = vst.msk [vmem:[%s1005 + $0xc9] sm:$0xff] %vm1006, %v990
      %1025 = vst.msk [vmem:[%s1005 + $0xd9] sm:$0xff] %vm1006, %v991
      %1026 = vst.msk [vmem:[%s1005 + $0xe1] sm:$0xff] %vm1006, %v992
      %1027 = vst.msk [vmem:[%s1005 + $0xf1] sm:$0xff] %vm1006, %v993
      %1028 = vst.msk [vmem:[%s1005 + $0xf9] sm:$0xff] %vm1006, %v994
      %1029 = vst.msk [vmem:[%s1005 + $0x109] sm:$0xff] %vm1006, %v995
      %1030 = vst.msk [vmem:[%s1005 + $0x111] sm:$0xff] %vm1006, %v996
      %1031 = vst.msk [vmem:[%s1005 + $0x121] sm:$0xff] %vm1006, %v997
      %1032 = vst.msk [vmem:[%s1005 + $0x129] sm:$0xff] %vm1006, %v998
      %1033 = vst.msk [vmem:[%s1005 + $0x139] sm:$0xff] %vm1006, %v999
      %1034 = vst.msk [vmem:[%s1005 + $0x141] sm:$0xff] %vm1006, %v1000
      %1035 = vst.msk [vmem:[%s1005 + $0x151] sm:$0xff] %vm1006, %v1001
      %1036 = vst.msk [vmem:[%s1005 + $0x159] sm:$0xff] %vm1006, %v1002
      %1037 = vst.msk [vmem:[%s1005 + $0x169] sm:$0xff] %vm1006, %v1003
      %1038 = vst.msk [vmem:[%s1005 + $0x171] sm:$0xff] %vm1006, %v1004
      %p1039 = scmp.eq.s32.totalorder %s23, 0
      %v1040 = vld [vmem:[%s414] sm:$0xff]
      %v1041 = vld [vmem:[%s414 + $0x8] sm:$0xff]
      %v1043 = vsel %vm487, %v1040, 0
      %v1046 = vsel %vm487, %v1041, 0
      %1048 = vmatprep.subr.mxu0 0.0
      %1049 = vmatpush1.msra.mxu0 0.0
      %1050 = vmatprep.subr.mxu0 0.0
      %1051 = vmatpush1.msra.mxu0 0.0
      %1052 = vmatprep.subr.mxu0 0.0
      %1053 = vmatpush1.msra.mxu0 0.0
      %1054 = vmatprep.subr.mxu0 0.0
      %1055 = vmatpush1.msra.mxu0 0.0
      %1056 = vmatprep.subr.mxu0 0.0
      %1057 = vmatpush1.msra.mxu0 0.0
      %1058 = vmatprep.subr.mxu0 0.0
      %1059 = vmatpush1.msra.mxu0 0.0
      %1060 = vmatprep.subr.mxu0 0.0
      %1061 = vmatpush1.msra.mxu0 0.0
      %1062 = vmatprep.subr.mxu0 0.0
      %1063 = vmatpush1.msra.mxu0 0.0
      %1064 = vmatprep.subr.mxu0 0.0
      %1065 = vmatpush1.msra.mxu0 0.0
      %1066 = vmatprep.subr.mxu0 0.0
      %1067 = vmatpush1.msra.mxu0 0.0
      %1068 = vmatprep.subr.mxu0 0.0
      %1069 = vmatpush1.msra.mxu0 0.0
      %1070 = vmatprep.subr.mxu0 0.0
      %1071 = vmatpush1.msra.mxu0 0.0
      %1072 = vmatprep.subr.mxu0 0.0
      %1073 = vmatpush1.msra.mxu0 0.0
      %1074 = vmatprep.subr.mxu0 0.0
      %1075 = vmatpush1.msra.mxu0 0.0
      %1076 = vmatprep.subr.mxu0 0.0
      %1077 = vmatpush1.msra.mxu0 0.0
      %1078 = vmatprep.subr.mxu0 0.0
      %1079 = vmatpush1.msra.mxu0 %v586
      %1080 = vmatprep.subr.mxu0 0.0
      %1081 = vmatpush2.msra.mxu0 0.0
      %1082 = vmatprep.subr.mxu0 0.0
      %1083 = vmatpush2.msra.mxu0 0.0
      %1084 = vmatprep.subr.mxu0 0.0
      %1085 = vmatpush2.msra.mxu0 0.0
      %1086 = vmatprep.subr.mxu0 0.0
      %1087 = vmatpush2.msra.mxu0 0.0
      %1088 = vmatprep.subr.mxu0 0.0
      %1089 = vmatpush2.msra.mxu0 0.0
      %1090 = vmatprep.subr.mxu0 0.0
      %1091 = vmatpush2.msra.mxu0 0.0
      %1092 = vmatprep.subr.mxu0 0.0
      %1093 = vmatpush2.msra.mxu0 0.0
      %1094 = vmatprep.subr.mxu0 0.0
      %1095 = vmatpush2.msra.mxu0 0.0
      %1096 = vmatprep.subr.mxu0 0.0
      %1097 = vmatpush2.msra.mxu0 0.0
      %1098 = vmatprep.subr.mxu0 0.0
      %1099 = vmatpush2.msra.mxu0 0.0
      %1100 = vmatprep.subr.mxu0 0.0
      %1101 = vmatpush2.msra.mxu0 0.0
      %1102 = vmatprep.subr.mxu0 0.0
      %1103 = vmatpush2.msra.mxu0 0.0
      %1104 = vmatprep.subr.mxu0 0.0
      %1105 = vmatpush2.msra.mxu0 0.0
      %1106 = vmatprep.subr.mxu0 0.0
      %1107 = vmatpush2.msra.mxu0 0.0
      %1108 = vmatprep.subr.mxu0 0.0
      %1109 = vmatpush2.msra.mxu0 0.0
      %1110 = vmatprep.subr.mxu0 0.0
      %1111 = vmatpush2.msra.mxu0 0.0
      %1112 = vmatprep.mubr.f32.mxu0 0.0
      %1113 = vmatmul.mubr.f32.gmra.mxu0 %v1043
      %v1114 = vpop.f32.mrf.mxu0
      %v1115 = vadd.f32 %v485, %v1114
      %v1116 = vpop.f32.mrf.mxu0
      %1117 = vmatprep.mubr.f32.mxu0 0.0
      %1118 = vmatmul.mubr.f32.gmra.mxu0 %v1046
      %v1119 = vpop.f32.mrf.mxu0
      %v1120 = vadd.f32 %v485, %v1119
      %v1121 = vpop.f32.mrf.mxu0
      %1122 = vdwg.mxu0
      %v1123 = vsub.f32 0.0, %v1115
      %v1124 = vsub.f32 0.0, %v1120
      %v1125 = vmul.f32 %v1123, 1.442695
      %v1126 = vpow.pop %v1125
      %v1127 = vmul.f32 %v1124, 1.442695
      %v1128 = vpow.pop %v1127
      %v1129 = vadd.f32 %v1126, 1.0
      %v1130 = vadd.f32 %v1128, 1.0
      %v1131 = vrcp.pop %v1129
      %v1132 = vrcp.pop %v1130
      %v1133 = vmul.f32 %v1115, %v1131
      %v1134 = vmul.f32 %v1120, %v1132
      %s1135 = scalar_select %p1039, 1, 0
      %v1136 = vstv %s1135
      %vm1137 = vcmp.eq.s32.totalorder %v1136, 1
      %v1138 = vsel %vm1137, 0.0, %v1133
      %v1139 = vsel %vm1137, 0.0, %v1134
      %1140 = vst.msk [vmem:[#allocation2 + $0x1] sm:$0xff] %vm1006, %v1138
      %1141 = vst.msk [vmem:[#allocation2 + $0x9] sm:$0xff] %vm1006, %v1139
      %v1142 = vld [vmem:[%s431] sm:$0xff]
      %v1143 = vld [vmem:[%s431 + $0x8] sm:$0xff]
      %v1145 = vsel %vm487, %v1142, 0
      %v1148 = vsel %vm487, %v1143, 0
      %1150 = vmatprep.subr.mxu0 0.0
      %1151 = vmatpush1.msra.mxu0 0.0
      %1152 = vmatprep.subr.mxu0 0.0
      %1153 = vmatpush1.msra.mxu0 0.0
      %1154 = vmatprep.subr.mxu0 0.0
      %1155 = vmatpush1.msra.mxu0 0.0
      %1156 = vmatprep.subr.mxu0 0.0
      %1157 = vmatpush1.msra.mxu0 0.0
      %1158 = vmatprep.subr.mxu0 0.0
      %1159 = vmatpush1.msra.mxu0 0.0
      %1160 = vmatprep.subr.mxu0 0.0
      %1161 = vmatpush1.msra.mxu0 0.0
      %1162 = vmatprep.subr.mxu0 0.0
      %1163 = vmatpush1.msra.mxu0 0.0
      %1164 = vmatprep.subr.mxu0 0.0
      %1165 = vmatpush1.msra.mxu0 0.0
      %1166 = vmatprep.subr.mxu0 0.0
      %1167 = vmatpush1.msra.mxu0 0.0
      %1168 = vmatprep.subr.mxu0 0.0
      %1169 = vmatpush1.msra.mxu0 0.0
      %1170 = vmatprep.subr.mxu0 0.0
      %1171 = vmatpush1.msra.mxu0 0.0
      %1172 = vmatprep.subr.mxu0 0.0
      %1173 = vmatpush1.msra.mxu0 0.0
      %1174 = vmatprep.subr.mxu0 0.0
      %1175 = vmatpush1.msra.mxu0 0.0
      %1176 = vmatprep.subr.mxu0 0.0
      %1177 = vmatpush1.msra.mxu0 0.0
      %1178 = vmatprep.subr.mxu0 0.0
      %1179 = vmatpush1.msra.mxu0 0.0
      %1180 = vmatprep.subr.mxu0 0.0
      %1181 = vmatpush1.msra.mxu0 %v586
      %1182 = vmatprep.subr.mxu0 0.0
      %1183 = vmatpush2.msra.mxu0 0.0
      %1184 = vmatprep.subr.mxu0 0.0
      %1185 = vmatpush2.msra.mxu0 0.0
      %1186 = vmatprep.subr.mxu0 0.0
      %1187 = vmatpush2.msra.mxu0 0.0
      %1188 = vmatprep.subr.mxu0 0.0
      %1189 = vmatpush2.msra.mxu0 0.0
      %1190 = vmatprep.subr.mxu0 0.0
      %1191 = vmatpush2.msra.mxu0 0.0
      %1192 = vmatprep.subr.mxu0 0.0
      %1193 = vmatpush2.msra.mxu0 0.0
      %1194 = vmatprep.subr.mxu0 0.0
      %1195 = vmatpush2.msra.mxu0 0.0
      %1196 = vmatprep.subr.mxu0 0.0
      %1197 = vmatpush2.msra.mxu0 0.0
      %1198 = vmatprep.subr.mxu0 0.0
      %1199 = vmatpush2.msra.mxu0 0.0
      %1200 = vmatprep.subr.mxu0 0.0
      %1201 = vmatpush2.msra.mxu0 0.0
      %1202 = vmatprep.subr.mxu0 0.0
      %1203 = vmatpush2.msra.mxu0 0.0
      %1204 = vmatprep.subr.mxu0 0.0
      %1205 = vmatpush2.msra.mxu0 0.0
      %1206 = vmatprep.subr.mxu0 0.0
      %1207 = vmatpush2.msra.mxu0 0.0
      %1208 = vmatprep.subr.mxu0 0.0
      %1209 = vmatpush2.msra.mxu0 0.0
      %1210 = vmatprep.subr.mxu0 0.0
      %1211 = vmatpush2.msra.mxu0 0.0
      %1212 = vmatprep.subr.mxu0 0.0
      %1213 = vmatpush2.msra.mxu0 0.0
      %1214 = vmatprep.mubr.f32.mxu0 0.0
      %1215 = vmatmul.mubr.f32.gmra.mxu0 %v1145
      %v1216 = vpop.f32.mrf.mxu0
      %v1217 = vadd.f32 %v485, %v1216
      %v1218 = vpop.f32.mrf.mxu0
      %1219 = vmatprep.mubr.f32.mxu0 0.0
      %1220 = vmatmul.mubr.f32.gmra.mxu0 %v1148
      %v1221 = vpop.f32.mrf.mxu0
      %v1222 = vadd.f32 %v485, %v1221
      %v1223 = vpop.f32.mrf.mxu0
      %1224 = vdwg.mxu0
      %v1225 = vsub.f32 0.0, %v1217
      %v1226 = vsub.f32 0.0, %v1222
      %v1227 = vmul.f32 %v1225, 1.442695
      %v1228 = vpow.pop %v1227
      %v1229 = vmul.f32 %v1226, 1.442695
      %v1230 = vpow.pop %v1229
      %v1231 = vadd.f32 %v1228, 1.0
      %v1232 = vadd.f32 %v1230, 1.0
      %v1233 = vrcp.pop %v1231
      %v1234 = vrcp.pop %v1232
      %v1235 = vmul.f32 %v1217, %v1233
      %v1236 = vmul.f32 %v1222, %v1234
      %v1237 = vsel %vm1137, 0.0, %v1235
      %v1238 = vsel %vm1137, 0.0, %v1236
      %s1239 = scalar_lea.vmem [#allocation2], 408
      %1240 = vst.msk [vmem:[%s1239 + $0x1] sm:$0xff] %vm1006, %v1237
      %1241 = vst.msk [vmem:[%s1239 + $0x9] sm:$0xff] %vm1006, %v1238
      %vm1242 = vcmask 8192
      %1243 = vst.msk [vmem:[#allocation2] sm:$0x1] %vm1242, 0.0
      %1244 = vst.msk [vmem:[#allocation2 + $0x18] sm:$0x1] %vm1242, 0.0
      %1245 = vst.msk [vmem:[#allocation2 + $0x30] sm:$0x1] %vm1242, 0.0
      %1246 = vst.msk [vmem:[#allocation2 + $0x48] sm:$0x1] %vm1242, 0.0
      %1247 = vst.msk [vmem:[#allocation2 + $0x60] sm:$0x1] %vm1242, 0.0
      %1248 = vst.msk [vmem:[#allocation2 + $0x78] sm:$0x1] %vm1242, 0.0
      %1249 = vst.msk [vmem:[#allocation2 + $0x90] sm:$0x1] %vm1242, 0.0
      %1250 = vst.msk [vmem:[#allocation2 + $0xa8] sm:$0x1] %vm1242, 0.0
      %1251 = vst.msk [vmem:[#allocation2 + $0xc0] sm:$0x1] %vm1242, 0.0
      %1252 = vst.msk [vmem:[#allocation2 + $0xd8] sm:$0x1] %vm1242, 0.0
      %1253 = vst.msk [vmem:[#allocation2 + $0xf0] sm:$0x1] %vm1242, 0.0
      %1254 = vst.msk [vmem:[#allocation2 + $0x108] sm:$0x1] %vm1242, 0.0
      %1255 = vst.msk [vmem:[#allocation2 + $0x120] sm:$0x1] %vm1242, 0.0
      %1256 = vst.msk [vmem:[#allocation2 + $0x138] sm:$0x1] %vm1242, 0.0
      %1257 = vst.msk [vmem:[#allocation2 + $0x150] sm:$0x1] %vm1242, 0.0
      %1258 = vst.msk [vmem:[#allocation2 + $0x168] sm:$0x1] %vm1242, 0.0
      %1259 = vst.msk [vmem:[#allocation2 + $0x180] sm:$0x1] %vm1242, 0.0
      %1260 = vst.msk [vmem:[#allocation2 + $0x198] sm:$0x1] %vm1242, 0.0
      %1261 = vst.msk [vmem:[#allocation2 + $0x11] sm:$0x1] %vm1242, 0.0
      %1262 = vst.msk [vmem:[#allocation2 + $0x29] sm:$0x1] %vm1242, 0.0
      %1263 = vst.msk [vmem:[#allocation2 + $0x41] sm:$0x1] %vm1242, 0.0
      %1264 = vst.msk [vmem:[#allocation2 + $0x59] sm:$0x1] %vm1242, 0.0
      %1265 = vst.msk [vmem:[#allocation2 + $0x71] sm:$0x1] %vm1242, 0.0
      %1266 = vst.msk [vmem:[#allocation2 + $0x89] sm:$0x1] %vm1242, 0.0
      %1267 = vst.msk [vmem:[#allocation2 + $0xa1] sm:$0x1] %vm1242, 0.0
      %1268 = vst.msk [vmem:[#allocation2 + $0xb9] sm:$0x1] %vm1242, 0.0
      %1269 = vst.msk [vmem:[#allocation2 + $0xd1] sm:$0x1] %vm1242, 0.0
      %1270 = vst.msk [vmem:[#allocation2 + $0xe9] sm:$0x1] %vm1242, 0.0
      %1271 = vst.msk [vmem:[#allocation2 + $0x101] sm:$0x1] %vm1242, 0.0
      %1272 = vst.msk [vmem:[#allocation2 + $0x119] sm:$0x1] %vm1242, 0.0
      %1273 = vst.msk [vmem:[#allocation2 + $0x131] sm:$0x1] %vm1242, 0.0
      %1274 = vst.msk [vmem:[#allocation2 + $0x149] sm:$0x1] %vm1242, 0.0
      %1275 = vst.msk [vmem:[#allocation2 + $0x161] sm:$0x1] %vm1242, 0.0
      %1276 = vst.msk [vmem:[#allocation2 + $0x179] sm:$0x1] %vm1242, 0.0
      %1277 = vst.msk [vmem:[#allocation2 + $0x191] sm:$0x1] %vm1242, 0.0
      %1278 = vst.msk [vmem:[#allocation2 + $0x1a9] sm:$0x1] %vm1242, 0.0
      %v1279 = vld [vmem:[#allocation2] sm:$0xff]
      %v1280 = vld [vmem:[#allocation2 + $0x8] sm:$0xff]
      %v1281 = vld [vmem:[#allocation2 + $0x18] sm:$0xff]
      %v1282 = vld [vmem:[#allocation2 + $0x20] sm:$0xff]
      %v1283 = vld [vmem:[#allocation2 + $0x30] sm:$0xff]
      %v1284 = vld [vmem:[#allocation2 + $0x38] sm:$0xff]
      %v1285 = vld [vmem:[#allocation2 + $0x48] sm:$0xff]
      %v1286 = vld [vmem:[#allocation2 + $0x50] sm:$0xff]
      %v1287 = vld [vmem:[#allocation2 + $0x60] sm:$0xff]
      %v1288 = vld [vmem:[#allocation2 + $0x68] sm:$0xff]
      %v1289 = vld [vmem:[#allocation2 + $0x78] sm:$0xff]
      %v1290 = vld [vmem:[#allocation2 + $0x80] sm:$0xff]
      %v1291 = vld [vmem:[#allocation2 + $0x90] sm:$0xff]
      %v1292 = vld [vmem:[#allocation2 + $0x98] sm:$0xff]
      %v1293 = vld [vmem:[#allocation2 + $0xa8] sm:$0xff]
      %v1294 = vld [vmem:[#allocation2 + $0xb0] sm:$0xff]
      %v1295 = vld [vmem:[#allocation2 + $0xc0] sm:$0xff]
      %v1296 = vld [vmem:[#allocation2 + $0xc8] sm:$0xff]
      %v1297 = vld [vmem:[#allocation2 + $0xd8] sm:$0xff]
      %v1298 = vld [vmem:[#allocation2 + $0xe0] sm:$0xff]
      %v1299 = vld [vmem:[#allocation2 + $0xf0] sm:$0xff]
      %v1300 = vld [vmem:[#allocation2 + $0xf8] sm:$0xff]
      %v1301 = vld [vmem:[#allocation2 + $0x108] sm:$0xff]
      %v1302 = vld [vmem:[#allocation2 + $0x110] sm:$0xff]
      %v1303 = vld [vmem:[#allocation2 + $0x120] sm:$0xff]
      %v1304 = vld [vmem:[#allocation2 + $0x128] sm:$0xff]
      %v1305 = vld [vmem:[#allocation2 + $0x138] sm:$0xff]
      %v1306 = vld [vmem:[#allocation2 + $0x140] sm:$0xff]
      %v1307 = vld [vmem:[#allocation2 + $0x150] sm:$0xff]
      %v1308 = vld [vmem:[#allocation2 + $0x158] sm:$0xff]
      %v1309 = vld [vmem:[#allocation2 + $0x168] sm:$0xff]
      %v1310 = vld [vmem:[#allocation2 + $0x170] sm:$0xff]
      %1311 = vst.msk [vmem:[#allocation3] sm:$0xff] %vm1006, %v1279
      %1312 = vst.msk [vmem:[#allocation3 + $0x8] sm:$0xff] %vm1006, %v1280
      %1313 = vst.msk [vmem:[#allocation3 + $0x10] sm:$0xff] %vm1006, %v1281
      %1314 = vst.msk [vmem:[#allocation3 + $0x18] sm:$0xff] %vm1006, %v1282
      %1315 = vst.msk [vmem:[#allocation3 + $0x20] sm:$0xff] %vm1006, %v1283
      %1316 = vst.msk [vmem:[#allocation3 + $0x28] sm:$0xff] %vm1006, %v1284
      %1317 = vst.msk [vmem:[#allocation3 + $0x30] sm:$0xff] %vm1006, %v1285
      %1318 = vst.msk [vmem:[#allocation3 + $0x38] sm:$0xff] %vm1006, %v1286
      %1319 = vst.msk [vmem:[#allocation3 + $0x40] sm:$0xff] %vm1006, %v1287
      %1320 = vst.msk [vmem:[#allocation3 + $0x48] sm:$0xff] %vm1006, %v1288
      %1321 = vst.msk [vmem:[#allocation3 + $0x50] sm:$0xff] %vm1006, %v1289
      %1322 = vst.msk [vmem:[#allocation3 + $0x58] sm:$0xff] %vm1006, %v1290
      %1323 = vst.msk [vmem:[#allocation3 + $0x60] sm:$0xff] %vm1006, %v1291
      %1324 = vst.msk [vmem:[#allocation3 + $0x68] sm:$0xff] %vm1006, %v1292
      %1325 = vst.msk [vmem:[#allocation3 + $0x70] sm:$0xff] %vm1006, %v1293
      %1326 = vst.msk [vmem:[#allocation3 + $0x78] sm:$0xff] %vm1006, %v1294
      %1327 = vst.msk [vmem:[#allocation3 + $0x80] sm:$0xff] %vm1006, %v1295
      %1328 = vst.msk [vmem:[#allocation3 + $0x88] sm:$0xff] %vm1006, %v1296
      %1329 = vst.msk [vmem:[#allocation3 + $0x90] sm:$0xff] %vm1006, %v1297
      %1330 = vst.msk [vmem:[#allocation3 + $0x98] sm:$0xff] %vm1006, %v1298
      %1331 = vst.msk [vmem:[#allocation3 + $0xa0] sm:$0xff] %vm1006, %v1299
      %1332 = vst.msk [vmem:[#allocation3 + $0xa8] sm:$0xff] %vm1006, %v1300
      %1333 = vst.msk [vmem:[#allocation3 + $0xb0] sm:$0xff] %vm1006, %v1301
      %1334 = vst.msk [vmem:[#allocation3 + $0xb8] sm:$0xff] %vm1006, %v1302
      %1335 = vst.msk [vmem:[#allocation3 + $0xc0] sm:$0xff] %vm1006, %v1303
      %1336 = vst.msk [vmem:[#allocation3 + $0xc8] sm:$0xff] %vm1006, %v1304
      %1337 = vst.msk [vmem:[#allocation3 + $0xd0] sm:$0xff] %vm1006, %v1305
      %1338 = vst.msk [vmem:[#allocation3 + $0xd8] sm:$0xff] %vm1006, %v1306
      %1339 = vst.msk [vmem:[#allocation3 + $0xe0] sm:$0xff] %vm1006, %v1307
      %1340 = vst.msk [vmem:[#allocation3 + $0xe8] sm:$0xff] %vm1006, %v1308
      %1341 = vst.msk [vmem:[#allocation3 + $0xf0] sm:$0xff] %vm1006, %v1309
      %1342 = vst.msk [vmem:[#allocation3 + $0xf8] sm:$0xff] %vm1006, %v1310
      %v1343 = vld [vmem:[#allocation2 + $0x1] sm:$0xff]
      %v1344 = vld [vmem:[#allocation2 + $0x9] sm:$0xff]
      %v1345 = vld [vmem:[#allocation2 + $0x19] sm:$0xff]
      %v1346 = vld [vmem:[#allocation2 + $0x21] sm:$0xff]
      %v1347 = vld [vmem:[#allocation2 + $0x31] sm:$0xff]
      %v1348 = vld [vmem:[#allocation2 + $0x39] sm:$0xff]
      %v1349 = vld [vmem:[#allocation2 + $0x49] sm:$0xff]
      %v1350 = vld [vmem:[#allocation2 + $0x51] sm:$0xff]
      %v1351 = vld [vmem:[#allocation2 + $0x61] sm:$0xff]
      %v1352 = vld [vmem:[#allocation2 + $0x69] sm:$0xff]
      %v1353 = vld [vmem:[#allocation2 + $0x79] sm:$0xff]
      %v1354 = vld [vmem:[#allocation2 + $0x81] sm:$0xff]
      %v1355 = vld [vmem:[#allocation2 + $0x91] sm:$0xff]
      %v1356 = vld [vmem:[#allocation2 + $0x99] sm:$0xff]
      %v1357 = vld [vmem:[#allocation2 + $0xa9] sm:$0xff]
      %v1358 = vld [vmem:[#allocation2 + $0xb1] sm:$0xff]
      %v1359 = vld [vmem:[#allocation2 + $0xc1] sm:$0xff]
      %v1360 = vld [vmem:[#allocation2 + $0xc9] sm:$0xff]
      %v1361 = vld [vmem:[#allocation2 + $0xd9] sm:$0xff]
      %v1362 = vld [vmem:[#allocation2 + $0xe1] sm:$0xff]
      %v1363 = vld [vmem:[#allocation2 + $0xf1] sm:$0xff]
      %v1364 = vld [vmem:[#allocation2 + $0xf9] sm:$0xff]
      %v1365 = vld [vmem:[#allocation2 + $0x109] sm:$0xff]
      %v1366 = vld [vmem:[#allocation2 + $0x111] sm:$0xff]
      %v1367 = vld [vmem:[#allocation2 + $0x121] sm:$0xff]
      %v1368 = vld [vmem:[#allocation2 + $0x129] sm:$0xff]
      %v1369 = vld [vmem:[#allocation2 + $0x139] sm:$0xff]
      %v1370 = vld [vmem:[#allocation2 + $0x141] sm:$0xff]
      %v1371 = vld [vmem:[#allocation2 + $0x151] sm:$0xff]
      %v1372 = vld [vmem:[#allocation2 + $0x159] sm:$0xff]
      %v1373 = vld [vmem:[#allocation2 + $0x169] sm:$0xff]
      %v1374 = vld [vmem:[#allocation2 + $0x171] sm:$0xff]
      %1407 = vrot.lane.b32.xlu0 %v1343, 2
      %v1408 = vpop.permute.xlu0 %1407
      %1409 = vrot.lane.b32.xlu0 %v1344, 2
      %v1410 = vpop.permute.xlu0 %1409
      %1411 = vrot.lane.b32.xlu0 %v1345, 2
      %v1412 = vpop.permute.xlu0 %1411
      %1413 = vrot.lane.b32.xlu0 %v1346, 2
      %v1414 = vpop.permute.xlu0 %1413
      %1415 = vrot.lane.b32.xlu0 %v1347, 2
      %v1416 = vpop.permute.xlu0 %1415
      %1417 = vrot.lane.b32.xlu0 %v1348, 2
      %v1418 = vpop.permute.xlu0 %1417
      %1419 = vrot.lane.b32.xlu0 %v1349, 2
      %v1420 = vpop.permute.xlu0 %1419
      %1421 = vrot.lane.b32.xlu0 %v1350, 2
      %v1422 = vpop.permute.xlu0 %1421
      %1423 = vrot.lane.b32.xlu0 %v1351, 2
      %v1424 = vpop.permute.xlu0 %1423
      %1425 = vrot.lane.b32.xlu0 %v1352, 2
      %v1426 = vpop.permute.xlu0 %1425
      %1427 = vrot.lane.b32.xlu0 %v1353, 2
      %v1428 = vpop.permute.xlu0 %1427
      %1429 = vrot.lane.b32.xlu0 %v1354, 2
      %v1430 = vpop.permute.xlu0 %1429
      %1431 = vrot.lane.b32.xlu0 %v1355, 2
      %v1432 = vpop.permute.xlu0 %1431
      %1433 = vrot.lane.b32.xlu0 %v1356, 2
      %v1434 = vpop.permute.xlu0 %1433
      %1435 = vrot.lane.b32.xlu0 %v1357, 2
      %v1436 = vpop.permute.xlu0 %1435
      %1437 = vrot.lane.b32.xlu0 %v1358, 2
      %v1438 = vpop.permute.xlu0 %1437
      %1439 = vrot.lane.b32.xlu0 %v1359, 2
      %v1440 = vpop.permute.xlu0 %1439
      %1441 = vrot.lane.b32.xlu0 %v1360, 2
      %v1442 = vpop.permute.xlu0 %1441
      %1443 = vrot.lane.b32.xlu0 %v1361, 2
      %v1444 = vpop.permute.xlu0 %1443
      %1445 = vrot.lane.b32.xlu0 %v1362, 2
      %v1446 = vpop.permute.xlu0 %1445
      %1447 = vrot.lane.b32.xlu0 %v1363, 2
      %v1448 = vpop.permute.xlu0 %1447
      %1449 = vrot.lane.b32.xlu0 %v1364, 2
      %v1450 = vpop.permute.xlu0 %1449
      %1451 = vrot.lane.b32.xlu0 %v1365, 2
      %v1452 = vpop.permute.xlu0 %1451
      %1453 = vrot.lane.b32.xlu0 %v1366, 2
      %v1454 = vpop.permute.xlu0 %1453
      %1455 = vrot.lane.b32.xlu0 %v1367, 2
      %v1456 = vpop.permute.xlu0 %1455
      %1457 = vrot.lane.b32.xlu0 %v1368, 2
      %v1458 = vpop.permute.xlu0 %1457
      %1459 = vrot.lane.b32.xlu0 %v1369, 2
      %v1460 = vpop.permute.xlu0 %1459
      %1461 = vrot.lane.b32.xlu0 %v1370, 2
      %v1462 = vpop.permute.xlu0 %1461
      %1463 = vrot.lane.b32.xlu0 %v1371, 2
      %v1464 = vpop.permute.xlu0 %1463
      %1465 = vrot.lane.b32.xlu0 %v1372, 2
      %v1466 = vpop.permute.xlu0 %1465
      %1467 = vrot.lane.b32.xlu0 %v1373, 2
      %v1468 = vpop.permute.xlu0 %1467
      %1469 = vrot.lane.b32.xlu0 %v1374, 2
      %v1470 = vpop.permute.xlu0 %1469
      %vm1503 = vcmask 31760
      %1504 = vst.msk [vmem:[#allocation3] sm:$0xff] %vm1503, %v1408
      %1505 = vst.msk [vmem:[#allocation3 + $0x8] sm:$0xff] %vm1503, %v1410
      %1506 = vst.msk [vmem:[#allocation3 + $0x10] sm:$0xff] %vm1503, %v1412
      %1507 = vst.msk [vmem:[#allocation3 + $0x18] sm:$0xff] %vm1503, %v1414
      %1508 = vst.msk [vmem:[#allocation3 + $0x20] sm:$0xff] %vm1503, %v1416
      %1509 = vst.msk [vmem:[#allocation3 + $0x28] sm:$0xff] %vm1503, %v1418
      %1510 = vst.msk [vmem:[#allocation3 + $0x30] sm:$0xff] %vm1503, %v1420
      %1511 = vst.msk [vmem:[#allocation3 + $0x38] sm:$0xff] %vm1503, %v1422
      %1512 = vst.msk [vmem:[#allocation3 + $0x40] sm:$0xff] %vm1503, %v1424
      %1513 = vst.msk [vmem:[#allocation3 + $0x48] sm:$0xff] %vm1503, %v1426
      %1514 = vst.msk [vmem:[#allocation3 + $0x50] sm:$0xff] %vm1503, %v1428
      %1515 = vst.msk [vmem:[#allocation3 + $0x58] sm:$0xff] %vm1503, %v1430
      %1516 = vst.msk [vmem:[#allocation3 + $0x60] sm:$0xff] %vm1503, %v1432
      %1517 = vst.msk [vmem:[#allocation3 + $0x68] sm:$0xff] %vm1503, %v1434
      %1518 = vst.msk [vmem:[#allocation3 + $0x70] sm:$0xff] %vm1503, %v1436
      %1519 = vst.msk [vmem:[#allocation3 + $0x78] sm:$0xff] %vm1503, %v1438
      %1520 = vst.msk [vmem:[#allocation3 + $0x80] sm:$0xff] %vm1503, %v1440
      %1521 = vst.msk [vmem:[#allocation3 + $0x88] sm:$0xff] %vm1503, %v1442
      %1522 = vst.msk [vmem:[#allocation3 + $0x90] sm:$0xff] %vm1503, %v1444
      %1523 = vst.msk [vmem:[#allocation3 + $0x98] sm:$0xff] %vm1503, %v1446
      %1524 = vst.msk [vmem:[#allocation3 + $0xa0] sm:$0xff] %vm1503, %v1448
      %1525 = vst.msk [vmem:[#allocation3 + $0xa8] sm:$0xff] %vm1503, %v1450
      %1526 = vst.msk [vmem:[#allocation3 + $0xb0] sm:$0xff] %vm1503, %v1452
      %1527 = vst.msk [vmem:[#allocation3 + $0xb8] sm:$0xff] %vm1503, %v1454
      %1528 = vst.msk [vmem:[#allocation3 + $0xc0] sm:$0xff] %vm1503, %v1456
      %1529 = vst.msk [vmem:[#allocation3 + $0xc8] sm:$0xff] %vm1503, %v1458
      %1530 = vst.msk [vmem:[#allocation3 + $0xd0] sm:$0xff] %vm1503, %v1460
      %1531 = vst.msk [vmem:[#allocation3 + $0xd8] sm:$0xff] %vm1503, %v1462
      %1532 = vst.msk [vmem:[#allocation3 + $0xe0] sm:$0xff] %vm1503, %v1464
      %1533 = vst.msk [vmem:[#allocation3 + $0xe8] sm:$0xff] %vm1503, %v1466
      %1534 = vst.msk [vmem:[#allocation3 + $0xf0] sm:$0xff] %vm1503, %v1468
      %1535 = vst.msk [vmem:[#allocation3 + $0xf8] sm:$0xff] %vm1503, %v1470
      %v1536 = vld [vmem:[#allocation2 + $0x2] sm:$0xff]
      %v1537 = vld [vmem:[#allocation2 + $0xa] sm:$0xff]
      %v1538 = vld [vmem:[#allocation2 + $0x1a] sm:$0xff]
      %v1539 = vld [vmem:[#allocation2 + $0x22] sm:$0xff]
      %v1540 = vld [vmem:[#allocation2 + $0x32] sm:$0xff]
      %v1541 = vld [vmem:[#allocation2 + $0x3a] sm:$0xff]
      %v1542 = vld [vmem:[#allocation2 + $0x4a] sm:$0xff]
      %v1543 = vld [vmem:[#allocation2 + $0x52] sm:$0xff]
      %v1544 = vld [vmem:[#allocation2 + $0x62] sm:$0xff]
      %v1545 = vld [vmem:[#allocation2 + $0x6a] sm:$0xff]
      %v1546 = vld [vmem:[#allocation2 + $0x7a] sm:$0xff]
      %v1547 = vld [vmem:[#allocation2 + $0x82] sm:$0xff]
      %v1548 = vld [vmem:[#allocation2 + $0x92] sm:$0xff]
      %v1549 = vld [vmem:[#allocation2 + $0x9a] sm:$0xff]
      %v1550 = vld [vmem:[#allocation2 + $0xaa] sm:$0xff]
      %v1551 = vld [vmem:[#allocation2 + $0xb2] sm:$0xff]
      %v1552 = vld [vmem:[#allocation2 + $0xc2] sm:$0xff]
      %v1553 = vld [vmem:[#allocation2 + $0xca] sm:$0xff]
      %v1554 = vld [vmem:[#allocation2 + $0xda] sm:$0xff]
      %v1555 = vld [vmem:[#allocation2 + $0xe2] sm:$0xff]
      %v1556 = vld [vmem:[#allocation2 + $0xf2] sm:$0xff]
      %v1557 = vld [vmem:[#allocation2 + $0xfa] sm:$0xff]
      %v1558 = vld [vmem:[#allocation2 + $0x10a] sm:$0xff]
      %v1559 = vld [vmem:[#allocation2 + $0x112] sm:$0xff]
      %v1560 = vld [vmem:[#allocation2 + $0x122] sm:$0xff]
      %v1561 = vld [vmem:[#allocation2 + $0x12a] sm:$0xff]
      %v1562 = vld [vmem:[#allocation2 + $0x13a] sm:$0xff]
      %v1563 = vld [vmem:[#allocation2 + $0x142] sm:$0xff]
      %v1564 = vld [vmem:[#allocation2 + $0x152] sm:$0xff]
      %v1565 = vld [vmem:[#allocation2 + $0x15a] sm:$0xff]
      %v1566 = vld [vmem:[#allocation2 + $0x16a] sm:$0xff]
      %v1567 = vld [vmem:[#allocation2 + $0x172] sm:$0xff]
      %1600 = vrot.lane.b32.xlu0 %v1536, 4
      %v1601 = vpop.permute.xlu0 %1600
      %1602 = vrot.lane.b32.xlu0 %v1537, 4
      %v1603 = vpop.permute.xlu0 %1602
      %1604 = vrot.lane.b32.xlu0 %v1538, 4
      %v1605 = vpop.permute.xlu0 %1604
      %1606 = vrot.lane.b32.xlu0 %v1539, 4
      %v1607 = vpop.permute.xlu0 %1606
      %1608 = vrot.lane.b32.xlu0 %v1540, 4
      %v1609 = vpop.permute.xlu0 %1608
      %1610 = vrot.lane.b32.xlu0 %v1541, 4
      %v1611 = vpop.permute.xlu0 %1610
      %1612 = vrot.lane.b32.xlu0 %v1542, 4
      %v1613 = vpop.permute.xlu0 %1612
      %1614 = vrot.lane.b32.xlu0 %v1543, 4
      %v1615 = vpop.permute.xlu0 %1614
      %1616 = vrot.lane.b32.xlu0 %v1544, 4
      %v1617 = vpop.permute.xlu0 %1616
      %1618 = vrot.lane.b32.xlu0 %v1545, 4
      %v1619 = vpop.permute.xlu0 %1618
      %1620 = vrot.lane.b32.xlu0 %v1546, 4
      %v1621 = vpop.permute.xlu0 %1620
      %1622 = vrot.lane.b32.xlu0 %v1547, 4
      %v1623 = vpop.permute.xlu0 %1622
      %1624 = vrot.lane.b32.xlu0 %v1548, 4
      %v1625 = vpop.permute.xlu0 %1624
      %1626 = vrot.lane.b32.xlu0 %v1549, 4
      %v1627 = vpop.permute.xlu0 %1626
      %1628 = vrot.lane.b32.xlu0 %v1550, 4
      %v1629 = vpop.permute.xlu0 %1628
      %1630 = vrot.lane.b32.xlu0 %v1551, 4
      %v1631 = vpop.permute.xlu0 %1630
      %1632 = vrot.lane.b32.xlu0 %v1552, 4
      %v1633 = vpop.permute.xlu0 %1632
      %1634 = vrot.lane.b32.xlu0 %v1553, 4
      %v1635 = vpop.permute.xlu0 %1634
      %1636 = vrot.lane.b32.xlu0 %v1554, 4
      %v1637 = vpop.permute.xlu0 %1636
      %1638 = vrot.lane.b32.xlu0 %v1555, 4
      %v1639 = vpop.permute.xlu0 %1638
      %1640 = vrot.lane.b32.xlu0 %v1556, 4
      %v1641 = vpop.permute.xlu0 %1640
      %1642 = vrot.lane.b32.xlu0 %v1557, 4
      %v1643 = vpop.permute.xlu0 %1642
      %1644 = vrot.lane.b32.xlu0 %v1558, 4
      %v1645 = vpop.permute.xlu0 %1644
      %1646 = vrot.lane.b32.xlu0 %v1559, 4
      %v1647 = vpop.permute.xlu0 %1646
      %1648 = vrot.lane.b32.xlu0 %v1560, 4
      %v1649 = vpop.permute.xlu0 %1648
      %1650 = vrot.lane.b32.xlu0 %v1561, 4
      %v1651 = vpop.permute.xlu0 %1650
      %1652 = vrot.lane.b32.xlu0 %v1562, 4
      %v1653 = vpop.permute.xlu0 %1652
      %1654 = vrot.lane.b32.xlu0 %v1563, 4
      %v1655 = vpop.permute.xlu0 %1654
      %1656 = vrot.lane.b32.xlu0 %v1564, 4
      %v1657 = vpop.permute.xlu0 %1656
      %1658 = vrot.lane.b32.xlu0 %v1565, 4
      %v1659 = vpop.permute.xlu0 %1658
      %1660 = vrot.lane.b32.xlu0 %v1566, 4
      %v1661 = vpop.permute.xlu0 %1660
      %1662 = vrot.lane.b32.xlu0 %v1567, 4
      %v1663 = vpop.permute.xlu0 %1662
      %vm1696 = vcmask 48160
      %1697 = vst.msk [vmem:[#allocation3] sm:$0xff] %vm1696, %v1601
      %1698 = vst.msk [vmem:[#allocation3 + $0x8] sm:$0xff] %vm1696, %v1603
      %1699 = vst.msk [vmem:[#allocation3 + $0x10] sm:$0xff] %vm1696, %v1605
      %1700 = vst.msk [vmem:[#allocation3 + $0x18] sm:$0xff] %vm1696, %v1607
      %1701 = vst.msk [vmem:[#allocation3 + $0x20] sm:$0xff] %vm1696, %v1609
      %1702 = vst.msk [vmem:[#allocation3 + $0x28] sm:$0xff] %vm1696, %v1611
      %1703 = vst.msk [vmem:[#allocation3 + $0x30] sm:$0xff] %vm1696, %v1613
      %1704 = vst.msk [vmem:[#allocation3 + $0x38] sm:$0xff] %vm1696, %v1615
      %1705 = vst.msk [vmem:[#allocation3 + $0x40] sm:$0xff] %vm1696, %v1617
      %1706 = vst.msk [vmem:[#allocation3 + $0x48] sm:$0xff] %vm1696, %v1619
      %1707 = vst.msk [vmem:[#allocation3 + $0x50] sm:$0xff] %vm1696, %v1621
      %1708 = vst.msk [vmem:[#allocation3 + $0x58] sm:$0xff] %vm1696, %v1623
      %1709 = vst.msk [vmem:[#allocation3 + $0x60] sm:$0xff] %vm1696, %v1625
      %1710 = vst.msk [vmem:[#allocation3 + $0x68] sm:$0xff] %vm1696, %v1627
      %1711 = vst.msk [vmem:[#allocation3 + $0x70] sm:$0xff] %vm1696, %v1629
      %1712 = vst.msk [vmem:[#allocation3 + $0x78] sm:$0xff] %vm1696, %v1631
      %1713 = vst.msk [vmem:[#allocation3 + $0x80] sm:$0xff] %vm1696, %v1633
      %1714 = vst.msk [vmem:[#allocation3 + $0x88] sm:$0xff] %vm1696, %v1635
      %1715 = vst.msk [vmem:[#allocation3 + $0x90] sm:$0xff] %vm1696, %v1637
      %1716 = vst.msk [vmem:[#allocation3 + $0x98] sm:$0xff] %vm1696, %v1639
      %1717 = vst.msk [vmem:[#allocation3 + $0xa0] sm:$0xff] %vm1696, %v1641
      %1718 = vst.msk [vmem:[#allocation3 + $0xa8] sm:$0xff] %vm1696, %v1643
      %1719 = vst.msk [vmem:[#allocation3 + $0xb0] sm:$0xff] %vm1696, %v1645
      %1720 = vst.msk [vmem:[#allocation3 + $0xb8] sm:$0xff] %vm1696, %v1647
      %1721 = vst.msk [vmem:[#allocation3 + $0xc0] sm:$0xff] %vm1696, %v1649
      %1722 = vst.msk [vmem:[#allocation3 + $0xc8] sm:$0xff] %vm1696, %v1651
      %1723 = vst.msk [vmem:[#allocation3 + $0xd0] sm:$0xff] %vm1696, %v1653
      %1724 = vst.msk [vmem:[#allocation3 + $0xd8] sm:$0xff] %vm1696, %v1655
      %1725 = vst.msk [vmem:[#allocation3 + $0xe0] sm:$0xff] %vm1696, %v1657
      %1726 = vst.msk [vmem:[#allocation3 + $0xe8] sm:$0xff] %vm1696, %v1659
      %1727 = vst.msk [vmem:[#allocation3 + $0xf0] sm:$0xff] %vm1696, %v1661
      %1728 = vst.msk [vmem:[#allocation3 + $0xf8] sm:$0xff] %vm1696, %v1663
      %v1729 = vld [vmem:[%s1005] sm:$0xff]
      %v1730 = vld [vmem:[%s1005 + $0x8] sm:$0xff]
      %v1731 = vld [vmem:[%s1005 + $0x18] sm:$0xff]
      %v1732 = vld [vmem:[%s1005 + $0x20] sm:$0xff]
      %v1733 = vld [vmem:[%s1005 + $0x30] sm:$0xff]
      %v1734 = vld [vmem:[%s1005 + $0x38] sm:$0xff]
      %v1735 = vld [vmem:[%s1005 + $0x48] sm:$0xff]
      %v1736 = vld [vmem:[%s1005 + $0x50] sm:$0xff]
      %v1737 = vld [vmem:[%s1005 + $0x60] sm:$0xff]
      %v1738 = vld [vmem:[%s1005 + $0x68] sm:$0xff]
      %v1739 = vld [vmem:[%s1005 + $0x78] sm:$0xff]
      %v1740 = vld [vmem:[%s1005 + $0x80] sm:$0xff]
      %v1741 = vld [vmem:[%s1005 + $0x90] sm:$0xff]
      %v1742 = vld [vmem:[%s1005 + $0x98] sm:$0xff]
      %v1743 = vld [vmem:[%s1005 + $0xa8] sm:$0xff]
      %v1744 = vld [vmem:[%s1005 + $0xb0] sm:$0xff]
      %v1745 = vld [vmem:[%s1005 + $0xc0] sm:$0xff]
      %v1746 = vld [vmem:[%s1005 + $0xc8] sm:$0xff]
      %v1747 = vld [vmem:[%s1005 + $0xd8] sm:$0xff]
      %v1748 = vld [vmem:[%s1005 + $0xe0] sm:$0xff]
      %v1749 = vld [vmem:[%s1005 + $0xf0] sm:$0xff]
      %v1750 = vld [vmem:[%s1005 + $0xf8] sm:$0xff]
      %v1751 = vld [vmem:[%s1005 + $0x108] sm:$0xff]
      %v1752 = vld [vmem:[%s1005 + $0x110] sm:$0xff]
      %v1753 = vld [vmem:[%s1005 + $0x120] sm:$0xff]
      %v1754 = vld [vmem:[%s1005 + $0x128] sm:$0xff]
      %v1755 = vld [vmem:[%s1005 + $0x138] sm:$0xff]
      %v1756 = vld [vmem:[%s1005 + $0x140] sm:$0xff]
      %v1757 = vld [vmem:[%s1005 + $0x150] sm:$0xff]
      %v1758 = vld [vmem:[%s1005 + $0x158] sm:$0xff]
      %v1759 = vld [vmem:[%s1005 + $0x168] sm:$0xff]
      %v1760 = vld [vmem:[%s1005 + $0x170] sm:$0xff]
      %1793 = vrot.lane.b32.xlu0 %v1729, 6
      %v1794 = vpop.permute.xlu0 %1793
      %1795 = vrot.lane.b32.xlu0 %v1730, 6
      %v1796 = vpop.permute.xlu0 %1795
      %1797 = vrot.lane.b32.xlu0 %v1731, 6
      %v1798 = vpop.permute.xlu0 %1797
      %1799 = vrot.lane.b32.xlu0 %v1732, 6
      %v1800 = vpop.permute.xlu0 %1799
      %1801 = vrot.lane.b32.xlu0 %v1733, 6
      %v1802 = vpop.permute.xlu0 %1801
      %1803 = vrot.lane.b32.xlu0 %v1734, 6
      %v1804 = vpop.permute.xlu0 %1803
      %1805 = vrot.lane.b32.xlu0 %v1735, 6
      %v1806 = vpop.permute.xlu0 %1805
      %1807 = vrot.lane.b32.xlu0 %v1736, 6
      %v1808 = vpop.permute.xlu0 %1807
      %1809 = vrot.lane.b32.xlu0 %v1737, 6
      %v1810 = vpop.permute.xlu0 %1809
      %1811 = vrot.lane.b32.xlu0 %v1738, 6
      %v1812 = vpop.permute.xlu0 %1811
      %1813 = vrot.lane.b32.xlu0 %v1739, 6
      %v1814 = vpop.permute.xlu0 %1813
      %1815 = vrot.lane.b32.xlu0 %v1740, 6
      %v1816 = vpop.permute.xlu0 %1815
      %1817 = vrot.lane.b32.xlu0 %v1741, 6
      %v1818 = vpop.permute.xlu0 %1817
      %1819 = vrot.lane.b32.xlu0 %v1742, 6
      %v1820 = vpop.permute.xlu0 %1819
      %1821 = vrot.lane.b32.xlu0 %v1743, 6
      %v1822 = vpop.permute.xlu0 %1821
      %1823 = vrot.lane.b32.xlu0 %v1744, 6
      %v1824 = vpop.permute.xlu0 %1823
      %1825 = vrot.lane.b32.xlu0 %v1745, 6
      %v1826 = vpop.permute.xlu0 %1825
      %1827 = vrot.lane.b32.xlu0 %v1746, 6
      %v1828 = vpop.permute.xlu0 %1827
      %1829 = vrot.lane.b32.xlu0 %v1747, 6
      %v1830 = vpop.permute.xlu0 %1829
      %1831 = vrot.lane.b32.xlu0 %v1748, 6
      %v1832 = vpop.permute.xlu0 %1831
      %1833 = vrot.lane.b32.xlu0 %v1749, 6
      %v1834 = vpop.permute.xlu0 %1833
      %1835 = vrot.lane.b32.xlu0 %v1750, 6
      %v1836 = vpop.permute.xlu0 %1835
      %1837 = vrot.lane.b32.xlu0 %v1751, 6
      %v1838 = vpop.permute.xlu0 %1837
      %1839 = vrot.lane.b32.xlu0 %v1752, 6
      %v1840 = vpop.permute.xlu0 %1839
      %1841 = vrot.lane.b32.xlu0 %v1753, 6
      %v1842 = vpop.permute.xlu0 %1841
      %1843 = vrot.lane.b32.xlu0 %v1754, 6
      %v1844 = vpop.permute.xlu0 %1843
      %1845 = vrot.lane.b32.xlu0 %v1755, 6
      %v1846 = vpop.permute.xlu0 %1845
      %1847 = vrot.lane.b32.xlu0 %v1756, 6
      %v1848 = vpop.permute.xlu0 %1847
      %1849 = vrot.lane.b32.xlu0 %v1757, 6
      %v1850 = vpop.permute.xlu0 %1849
      %1851 = vrot.lane.b32.xlu0 %v1758, 6
      %v1852 = vpop.permute.xlu0 %1851
      %1853 = vrot.lane.b32.xlu0 %v1759, 6
      %v1854 = vpop.permute.xlu0 %1853
      %1855 = vrot.lane.b32.xlu0 %v1760, 6
      %v1856 = vpop.permute.xlu0 %1855
      %vm1889 = vcmask 64560
      %1890 = vst.msk [vmem:[#allocation3] sm:$0xff] %vm1889, %v1794
      %1891 = vst.msk [vmem:[#allocation3 + $0x8] sm:$0xff] %vm1889, %v1796
      %1892 = vst.msk [vmem:[#allocation3 + $0x10] sm:$0xff] %vm1889, %v1798
      %1893 = vst.msk [vmem:[#allocation3 + $0x18] sm:$0xff] %vm1889, %v1800
      %1894 = vst.msk [vmem:[#allocation3 + $0x20] sm:$0xff] %vm1889, %v1802
      %1895 = vst.msk [vmem:[#allocation3 + $0x28] sm:$0xff] %vm1889, %v1804
      %1896 = vst.msk [vmem:[#allocation3 + $0x30] sm:$0xff] %vm1889, %v1806
      %1897 = vst.msk [vmem:[#allocation3 + $0x38] sm:$0xff] %vm1889, %v1808
      %1898 = vst.msk [vmem:[#allocation3 + $0x40] sm:$0xff] %vm1889, %v1810
      %1899 = vst.msk [vmem:[#allocation3 + $0x48] sm:$0xff] %vm1889, %v1812
      %1900 = vst.msk [vmem:[#allocation3 + $0x50] sm:$0xff] %vm1889, %v1814
      %1901 = vst.msk [vmem:[#allocation3 + $0x58] sm:$0xff] %vm1889, %v1816
      %1902 = vst.msk [vmem:[#allocation3 + $0x60] sm:$0xff] %vm1889, %v1818
      %1903 = vst.msk [vmem:[#allocation3 + $0x68] sm:$0xff] %vm1889, %v1820
      %1904 = vst.msk [vmem:[#allocation3 + $0x70] sm:$0xff] %vm1889, %v1822
      %1905 = vst.msk [vmem:[#allocation3 + $0x78] sm:$0xff] %vm1889, %v1824
      %1906 = vst.msk [vmem:[#allocation3 + $0x80] sm:$0xff] %vm1889, %v1826
      %1907 = vst.msk [vmem:[#allocation3 + $0x88] sm:$0xff] %vm1889, %v1828
      %1908 = vst.msk [vmem:[#allocation3 + $0x90] sm:$0xff] %vm1889, %v1830
      %1909 = vst.msk [vmem:[#allocation3 + $0x98] sm:$0xff] %vm1889, %v1832
      %1910 = vst.msk [vmem:[#allocation3 + $0xa0] sm:$0xff] %vm1889, %v1834
      %1911 = vst.msk [vmem:[#allocation3 + $0xa8] sm:$0xff] %vm1889, %v1836
      %1912 = vst.msk [vmem:[#allocation3 + $0xb0] sm:$0xff] %vm1889, %v1838
      %1913 = vst.msk [vmem:[#allocation3 + $0xb8] sm:$0xff] %vm1889, %v1840
      %1914 = vst.msk [vmem:[#allocation3 + $0xc0] sm:$0xff] %vm1889, %v1842
      %1915 = vst.msk [vmem:[#allocation3 + $0xc8] sm:$0xff] %vm1889, %v1844
      %1916 = vst.msk [vmem:[#allocation3 + $0xd0] sm:$0xff] %vm1889, %v1846
      %1917 = vst.msk [vmem:[#allocation3 + $0xd8] sm:$0xff] %vm1889, %v1848
      %1918 = vst.msk [vmem:[#allocation3 + $0xe0] sm:$0xff] %vm1889, %v1850
      %1919 = vst.msk [vmem:[#allocation3 + $0xe8] sm:$0xff] %vm1889, %v1852
      %1920 = vst.msk [vmem:[#allocation3 + $0xf0] sm:$0xff] %vm1889, %v1854
      %1921 = vst.msk [vmem:[#allocation3 + $0xf8] sm:$0xff] %vm1889, %v1856
      %v1922 = vld [vmem:[%s1005 + $0x1] sm:$0xff]
      %v1923 = vld [vmem:[%s1005 + $0x9] sm:$0xff]
      %v1924 = vld [vmem:[%s1005 + $0x19] sm:$0xff]
      %v1925 = vld [vmem:[%s1005 + $0x21] sm:$0xff]
      %v1926 = vld [vmem:[%s1005 + $0x31] sm:$0xff]
      %v1927 = vld [vmem:[%s1005 + $0x39] sm:$0xff]
      %v1928 = vld [vmem:[%s1005 + $0x49] sm:$0xff]
      %v1929 = vld [vmem:[%s1005 + $0x51] sm:$0xff]
      %v1930 = vld [vmem:[%s1005 + $0x61] sm:$0xff]
      %v1931 = vld [vmem:[%s1005 + $0x69] sm:$0xff]
      %v1932 = vld [vmem:[%s1005 + $0x79] sm:$0xff]
      %v1933 = vld [vmem:[%s1005 + $0x81] sm:$0xff]
      %v1934 = vld [vmem:[%s1005 + $0x91] sm:$0xff]
      %v1935 = vld [vmem:[%s1005 + $0x99] sm:$0xff]
      %v1936 = vld [vmem:[%s1005 + $0xa9] sm:$0xff]
      %v1937 = vld [vmem:[%s1005 + $0xb1] sm:$0xff]
      %v1938 = vld [vmem:[%s1005 + $0xc1] sm:$0xff]
      %v1939 = vld [vmem:[%s1005 + $0xc9] sm:$0xff]
      %v1940 = vld [vmem:[%s1005 + $0xd9] sm:$0xff]
      %v1941 = vld [vmem:[%s1005 + $0xe1] sm:$0xff]
      %v1942 = vld [vmem:[%s1005 + $0xf1] sm:$0xff]
      %v1943 = vld [vmem:[%s1005 + $0xf9] sm:$0xff]
      %v1944 = vld [vmem:[%s1005 + $0x109] sm:$0xff]
      %v1945 = vld [vmem:[%s1005 + $0x111] sm:$0xff]
      %v1946 = vld [vmem:[%s1005 + $0x121] sm:$0xff]
      %v1947 = vld [vmem:[%s1005 + $0x129] sm:$0xff]
      %v1948 = vld [vmem:[%s1005 + $0x139] sm:$0xff]
      %v1949 = vld [vmem:[%s1005 + $0x141] sm:$0xff]
      %v1950 = vld [vmem:[%s1005 + $0x151] sm:$0xff]
      %v1951 = vld [vmem:[%s1005 + $0x159] sm:$0xff]
      %v1952 = vld [vmem:[%s1005 + $0x169] sm:$0xff]
      %v1953 = vld [vmem:[%s1005 + $0x171] sm:$0xff]
      %1986 = vrot.lane.b32.xlu0 %v1922, 8
      %v1987 = vpop.permute.xlu0 %1986
      %1988 = vrot.lane.b32.xlu0 %v1923, 8
      %v1989 = vpop.permute.xlu0 %1988
      %1990 = vrot.lane.b32.xlu0 %v1924, 8
      %v1991 = vpop.permute.xlu0 %1990
      %1992 = vrot.lane.b32.xlu0 %v1925, 8
      %v1993 = vpop.permute.xlu0 %1992
      %1994 = vrot.lane.b32.xlu0 %v1926, 8
      %v1995 = vpop.permute.xlu0 %1994
      %1996 = vrot.lane.b32.xlu0 %v1927, 8
      %v1997 = vpop.permute.xlu0 %1996
      %1998 = vrot.lane.b32.xlu0 %v1928, 8
      %v1999 = vpop.permute.xlu0 %1998
      %2000 = vrot.lane.b32.xlu0 %v1929, 8
      %v2001 = vpop.permute.xlu0 %2000
      %2002 = vrot.lane.b32.xlu0 %v1930, 8
      %v2003 = vpop.permute.xlu0 %2002
      %2004 = vrot.lane.b32.xlu0 %v1931, 8
      %v2005 = vpop.permute.xlu0 %2004
      %2006 = vrot.lane.b32.xlu0 %v1932, 8
      %v2007 = vpop.permute.xlu0 %2006
      %2008 = vrot.lane.b32.xlu0 %v1933, 8
      %v2009 = vpop.permute.xlu0 %2008
      %2010 = vrot.lane.b32.xlu0 %v1934, 8
      %v2011 = vpop.permute.xlu0 %2010
      %2012 = vrot.lane.b32.xlu0 %v1935, 8
      %v2013 = vpop.permute.xlu0 %2012
      %2014 = vrot.lane.b32.xlu0 %v1936, 8
      %v2015 = vpop.permute.xlu0 %2014
      %2016 = vrot.lane.b32.xlu0 %v1937, 8
      %v2017 = vpop.permute.xlu0 %2016
      %2018 = vrot.lane.b32.xlu0 %v1938, 8
      %v2019 = vpop.permute.xlu0 %2018
      %2020 = vrot.lane.b32.xlu0 %v1939, 8
      %v2021 = vpop.permute.xlu0 %2020
      %2022 = vrot.lane.b32.xlu0 %v1940, 8
      %v2023 = vpop.permute.xlu0 %2022
      %2024 = vrot.lane.b32.xlu0 %v1941, 8
      %v2025 = vpop.permute.xlu0 %2024
      %2026 = vrot.lane.b32.xlu0 %v1942, 8
      %v2027 = vpop.permute.xlu0 %2026
      %2028 = vrot.lane.b32.xlu0 %v1943, 8
      %v2029 = vpop.permute.xlu0 %2028
      %2030 = vrot.lane.b32.xlu0 %v1944, 8
      %v2031 = vpop.permute.xlu0 %2030
      %2032 = vrot.lane.b32.xlu0 %v1945, 8
      %v2033 = vpop.permute.xlu0 %2032
      %2034 = vrot.lane.b32.xlu0 %v1946, 8
      %v2035 = vpop.permute.xlu0 %2034
      %2036 = vrot.lane.b32.xlu0 %v1947, 8
      %v2037 = vpop.permute.xlu0 %2036
      %2038 = vrot.lane.b32.xlu0 %v1948, 8
      %v2039 = vpop.permute.xlu0 %2038
      %2040 = vrot.lane.b32.xlu0 %v1949, 8
      %v2041 = vpop.permute.xlu0 %2040
      %2042 = vrot.lane.b32.xlu0 %v1950, 8
      %v2043 = vpop.permute.xlu0 %2042
      %2044 = vrot.lane.b32.xlu0 %v1951, 8
      %v2045 = vpop.permute.xlu0 %2044
      %2046 = vrot.lane.b32.xlu0 %v1952, 8
      %v2047 = vpop.permute.xlu0 %2046
      %2048 = vrot.lane.b32.xlu0 %v1953, 8
      %v2049 = vpop.permute.xlu0 %2048
      %vm2082 = vcmask 80960
      %2083 = vst.msk [vmem:[#allocation3] sm:$0xff] %vm2082, %v1987
      %2084 = vst.msk [vmem:[#allocation3 + $0x8] sm:$0xff] %vm2082, %v1989
      %2085 = vst.msk [vmem:[#allocation3 + $0x10] sm:$0xff] %vm2082, %v1991
      %2086 = vst.msk [vmem:[#allocation3 + $0x18] sm:$0xff] %vm2082, %v1993
      %2087 = vst.msk [vmem:[#allocation3 + $0x20] sm:$0xff] %vm2082, %v1995
      %2088 = vst.msk [vmem:[#allocation3 + $0x28] sm:$0xff] %vm2082, %v1997
      %2089 = vst.msk [vmem:[#allocation3 + $0x30] sm:$0xff] %vm2082, %v1999
      %2090 = vst.msk [vmem:[#allocation3 + $0x38] sm:$0xff] %vm2082, %v2001
      %2091 = vst.msk [vmem:[#allocation3 + $0x40] sm:$0xff] %vm2082, %v2003
      %2092 = vst.msk [vmem:[#allocation3 + $0x48] sm:$0xff] %vm2082, %v2005
      %2093 = vst.msk [vmem:[#allocation3 + $0x50] sm:$0xff] %vm2082, %v2007
      %2094 = vst.msk [vmem:[#allocation3 + $0x58] sm:$0xff] %vm2082, %v2009
      %2095 = vst.msk [vmem:[#allocation3 + $0x60] sm:$0xff] %vm2082, %v2011
      %2096 = vst.msk [vmem:[#allocation3 + $0x68] sm:$0xff] %vm2082, %v2013
      %2097 = vst.msk [vmem:[#allocation3 + $0x70] sm:$0xff] %vm2082, %v2015
      %2098 = vst.msk [vmem:[#allocation3 + $0x78] sm:$0xff] %vm2082, %v2017
      %2099 = vst.msk [vmem:[#allocation3 + $0x80] sm:$0xff] %vm2082, %v2019
      %2100 = vst.msk [vmem:[#allocation3 + $0x88] sm:$0xff] %vm2082, %v2021
      %2101 = vst.msk [vmem:[#allocation3 + $0x90] sm:$0xff] %vm2082, %v2023
      %2102 = vst.msk [vmem:[#allocation3 + $0x98] sm:$0xff] %vm2082, %v2025
      %2103 = vst.msk [vmem:[#allocation3 + $0xa0] sm:$0xff] %vm2082, %v2027
      %2104 = vst.msk [vmem:[#allocation3 + $0xa8] sm:$0xff] %vm2082, %v2029
      %2105 = vst.msk [vmem:[#allocation3 + $0xb0] sm:$0xff] %vm2082, %v2031
      %2106 = vst.msk [vmem:[#allocation3 + $0xb8] sm:$0xff] %vm2082, %v2033
      %2107 = vst.msk [vmem:[#allocation3 + $0xc0] sm:$0xff] %vm2082, %v2035
      %2108 = vst.msk [vmem:[#allocation3 + $0xc8] sm:$0xff] %vm2082, %v2037
      %2109 = vst.msk [vmem:[#allocation3 + $0xd0] sm:$0xff] %vm2082, %v2039
      %2110 = vst.msk [vmem:[#allocation3 + $0xd8] sm:$0xff] %vm2082, %v2041
      %2111 = vst.msk [vmem:[#allocation3 + $0xe0] sm:$0xff] %vm2082, %v2043
      %2112 = vst.msk [vmem:[#allocation3 + $0xe8] sm:$0xff] %vm2082, %v2045
      %2113 = vst.msk [vmem:[#allocation3 + $0xf0] sm:$0xff] %vm2082, %v2047
      %2114 = vst.msk [vmem:[#allocation3 + $0xf8] sm:$0xff] %vm2082, %v2049
      %v2115 = vld [vmem:[%s1005 + $0x2] sm:$0xff]
      %v2116 = vld [vmem:[%s1005 + $0xa] sm:$0xff]
      %v2117 = vld [vmem:[%s1005 + $0x1a] sm:$0xff]
      %v2118 = vld [vmem:[%s1005 + $0x22] sm:$0xff]
      %v2119 = vld [vmem:[%s1005 + $0x32] sm:$0xff]
      %v2120 = vld [vmem:[%s1005 + $0x3a] sm:$0xff]
      %v2121 = vld [vmem:[%s1005 + $0x4a] sm:$0xff]
      %v2122 = vld [vmem:[%s1005 + $0x52] sm:$0xff]
      %v2123 = vld [vmem:[%s1005 + $0x62] sm:$0xff]
      %v2124 = vld [vmem:[%s1005 + $0x6a] sm:$0xff]
      %v2125 = vld [vmem:[%s1005 + $0x7a] sm:$0xff]
      %v2126 = vld [vmem:[%s1005 + $0x82] sm:$0xff]
      %v2127 = vld [vmem:[%s1005 + $0x92] sm:$0xff]
      %v2128 = vld [vmem:[%s1005 + $0x9a] sm:$0xff]
      %v2129 = vld [vmem:[%s1005 + $0xaa] sm:$0xff]
      %v2130 = vld [vmem:[%s1005 + $0xb2] sm:$0xff]
      %v2131 = vld [vmem:[%s1005 + $0xc2] sm:$0xff]
      %v2132 = vld [vmem:[%s1005 + $0xca] sm:$0xff]
      %v2133 = vld [vmem:[%s1005 + $0xda] sm:$0xff]
      %v2134 = vld [vmem:[%s1005 + $0xe2] sm:$0xff]
      %v2135 = vld [vmem:[%s1005 + $0xf2] sm:$0xff]
      %v2136 = vld [vmem:[%s1005 + $0xfa] sm:$0xff]
      %v2137 = vld [vmem:[%s1005 + $0x10a] sm:$0xff]
      %v2138 = vld [vmem:[%s1005 + $0x112] sm:$0xff]
      %v2139 = vld [vmem:[%s1005 + $0x122] sm:$0xff]
      %v2140 = vld [vmem:[%s1005 + $0x12a] sm:$0xff]
      %v2141 = vld [vmem:[%s1005 + $0x13a] sm:$0xff]
      %v2142 = vld [vmem:[%s1005 + $0x142] sm:$0xff]
      %v2143 = vld [vmem:[%s1005 + $0x152] sm:$0xff]
      %v2144 = vld [vmem:[%s1005 + $0x15a] sm:$0xff]
      %v2145 = vld [vmem:[%s1005 + $0x16a] sm:$0xff]
      %v2146 = vld [vmem:[%s1005 + $0x172] sm:$0xff]
      %2179 = vrot.lane.b32.xlu0 %v2115, 10
      %v2180 = vpop.permute.xlu0 %2179
      %2181 = vrot.lane.b32.xlu0 %v2116, 10
      %v2182 = vpop.permute.xlu0 %2181
      %2183 = vrot.lane.b32.xlu0 %v2117, 10
      %v2184 = vpop.permute.xlu0 %2183
      %2185 = vrot.lane.b32.xlu0 %v2118, 10
      %v2186 = vpop.permute.xlu0 %2185
      %2187 = vrot.lane.b32.xlu0 %v2119, 10
      %v2188 = vpop.permute.xlu0 %2187
      %2189 = vrot.lane.b32.xlu0 %v2120, 10
      %v2190 = vpop.permute.xlu0 %2189
      %2191 = vrot.lane.b32.xlu0 %v2121, 10
      %v2192 = vpop.permute.xlu0 %2191
      %2193 = vrot.lane.b32.xlu0 %v2122, 10
      %v2194 = vpop.permute.xlu0 %2193
      %2195 = vrot.lane.b32.xlu0 %v2123, 10
      %v2196 = vpop.permute.xlu0 %2195
      %2197 = vrot.lane.b32.xlu0 %v2124, 10
      %v2198 = vpop.permute.xlu0 %2197
      %2199 = vrot.lane.b32.xlu0 %v2125, 10
      %v2200 = vpop.permute.xlu0 %2199
      %2201 = vrot.lane.b32.xlu0 %v2126, 10
      %v2202 = vpop.permute.xlu0 %2201
      %2203 = vrot.lane.b32.xlu0 %v2127, 10
      %v2204 = vpop.permute.xlu0 %2203
      %2205 = vrot.lane.b32.xlu0 %v2128, 10
      %v2206 = vpop.permute.xlu0 %2205
      %2207 = vrot.lane.b32.xlu0 %v2129, 10
      %v2208 = vpop.permute.xlu0 %2207
      %2209 = vrot.lane.b32.xlu0 %v2130, 10
      %v2210 = vpop.permute.xlu0 %2209
      %2211 = vrot.lane.b32.xlu0 %v2131, 10
      %v2212 = vpop.permute.xlu0 %2211
      %2213 = vrot.lane.b32.xlu0 %v2132, 10
      %v2214 = vpop.permute.xlu0 %2213
      %2215 = vrot.lane.b32.xlu0 %v2133, 10
      %v2216 = vpop.permute.xlu0 %2215
      %2217 = vrot.lane.b32.xlu0 %v2134, 10
      %v2218 = vpop.permute.xlu0 %2217
      %2219 = vrot.lane.b32.xlu0 %v2135, 10
      %v2220 = vpop.permute.xlu0 %2219
      %2221 = vrot.lane.b32.xlu0 %v2136, 10
      %v2222 = vpop.permute.xlu0 %2221
      %2223 = vrot.lane.b32.xlu0 %v2137, 10
      %v2224 = vpop.permute.xlu0 %2223
      %2225 = vrot.lane.b32.xlu0 %v2138, 10
      %v2226 = vpop.permute.xlu0 %2225
      %2227 = vrot.lane.b32.xlu0 %v2139, 10
      %v2228 = vpop.permute.xlu0 %2227
      %2229 = vrot.lane.b32.xlu0 %v2140, 10
      %v2230 = vpop.permute.xlu0 %2229
      %2231 = vrot.lane.b32.xlu0 %v2141, 10
      %v2232 = vpop.permute.xlu0 %2231
      %2233 = vrot.lane.b32.xlu0 %v2142, 10
      %v2234 = vpop.permute.xlu0 %2233
      %2235 = vrot.lane.b32.xlu0 %v2143, 10
      %v2236 = vpop.permute.xlu0 %2235
      %2237 = vrot.lane.b32.xlu0 %v2144, 10
      %v2238 = vpop.permute.xlu0 %2237
      %2239 = vrot.lane.b32.xlu0 %v2145, 10
      %v2240 = vpop.permute.xlu0 %2239
      %2241 = vrot.lane.b32.xlu0 %v2146, 10
      %v2242 = vpop.permute.xlu0 %2241
      %vm2275 = vcmask 97360
      %2276 = vst.msk [vmem:[#allocation3] sm:$0xff] %vm2275, %v2180
      %2277 = vst.msk [vmem:[#allocation3 + $0x8] sm:$0xff] %vm2275, %v2182
      %2278 = vst.msk [vmem:[#allocation3 + $0x10] sm:$0xff] %vm2275, %v2184
      %2279 = vst.msk [vmem:[#allocation3 + $0x18] sm:$0xff] %vm2275, %v2186
      %2280 = vst.msk [vmem:[#allocation3 + $0x20] sm:$0xff] %vm2275, %v2188
      %2281 = vst.msk [vmem:[#allocation3 + $0x28] sm:$0xff] %vm2275, %v2190
      %2282 = vst.msk [vmem:[#allocation3 + $0x30] sm:$0xff] %vm2275, %v2192
      %2283 = vst.msk [vmem:[#allocation3 + $0x38] sm:$0xff] %vm2275, %v2194
      %2284 = vst.msk [vmem:[#allocation3 + $0x40] sm:$0xff] %vm2275, %v2196
      %2285 = vst.msk [vmem:[#allocation3 + $0x48] sm:$0xff] %vm2275, %v2198
      %2286 = vst.msk [vmem:[#allocation3 + $0x50] sm:$0xff] %vm2275, %v2200
      %2287 = vst.msk [vmem:[#allocation3 + $0x58] sm:$0xff] %vm2275, %v2202
      %2288 = vst.msk [vmem:[#allocation3 + $0x60] sm:$0xff] %vm2275, %v2204
      %2289 = vst.msk [vmem:[#allocation3 + $0x68] sm:$0xff] %vm2275, %v2206
      %2290 = vst.msk [vmem:[#allocation3 + $0x70] sm:$0xff] %vm2275, %v2208
      %2291 = vst.msk [vmem:[#allocation3 + $0x78] sm:$0xff] %vm2275, %v2210
      %2292 = vst.msk [vmem:[#allocation3 + $0x80] sm:$0xff] %vm2275, %v2212
      %2293 = vst.msk [vmem:[#allocation3 + $0x88] sm:$0xff] %vm2275, %v2214
      %2294 = vst.msk [vmem:[#allocation3 + $0x90] sm:$0xff] %vm2275, %v2216
      %2295 = vst.msk [vmem:[#allocation3 + $0x98] sm:$0xff] %vm2275, %v2218
      %2296 = vst.msk [vmem:[#allocation3 + $0xa0] sm:$0xff] %vm2275, %v2220
      %2297 = vst.msk [vmem:[#allocation3 + $0xa8] sm:$0xff] %vm2275, %v2222
      %2298 = vst.msk [vmem:[#allocation3 + $0xb0] sm:$0xff] %vm2275, %v2224
      %2299 = vst.msk [vmem:[#allocation3 + $0xb8] sm:$0xff] %vm2275, %v2226
      %2300 = vst.msk [vmem:[#allocation3 + $0xc0] sm:$0xff] %vm2275, %v2228
      %2301 = vst.msk [vmem:[#allocation3 + $0xc8] sm:$0xff] %vm2275, %v2230
      %2302 = vst.msk [vmem:[#allocation3 + $0xd0] sm:$0xff] %vm2275, %v2232
      %2303 = vst.msk [vmem:[#allocation3 + $0xd8] sm:$0xff] %vm2275, %v2234
      %2304 = vst.msk [vmem:[#allocation3 + $0xe0] sm:$0xff] %vm2275, %v2236
      %2305 = vst.msk [vmem:[#allocation3 + $0xe8] sm:$0xff] %vm2275, %v2238
      %2306 = vst.msk [vmem:[#allocation3 + $0xf0] sm:$0xff] %vm2275, %v2240
      %2307 = vst.msk [vmem:[#allocation3 + $0xf8] sm:$0xff] %vm2275, %v2242
      %s2308 = scalar_lea.vmem [#allocation2], 48
      %v2309 = vld [vmem:[%s2308] sm:$0xff]
      %v2310 = vld [vmem:[%s2308 + $0x8] sm:$0xff]
      %v2311 = vld [vmem:[%s2308 + $0x18] sm:$0xff]
      %v2312 = vld [vmem:[%s2308 + $0x20] sm:$0xff]
      %v2313 = vld [vmem:[%s2308 + $0x30] sm:$0xff]
      %v2314 = vld [vmem:[%s2308 + $0x38] sm:$0xff]
      %v2315 = vld [vmem:[%s2308 + $0x48] sm:$0xff]
      %v2316 = vld [vmem:[%s2308 + $0x50] sm:$0xff]
      %v2317 = vld [vmem:[%s2308 + $0x60] sm:$0xff]
      %v2318 = vld [vmem:[%s2308 + $0x68] sm:$0xff]
      %v2319 = vld [vmem:[%s2308 + $0x78] sm:$0xff]
      %v2320 = vld [vmem:[%s2308 + $0x80] sm:$0xff]
      %v2321 = vld [vmem:[%s2308 + $0x90] sm:$0xff]
      %v2322 = vld [vmem:[%s2308 + $0x98] sm:$0xff]
      %v2323 = vld [vmem:[%s2308 + $0xa8] sm:$0xff]
      %v2324 = vld [vmem:[%s2308 + $0xb0] sm:$0xff]
      %v2325 = vld [vmem:[%s2308 + $0xc0] sm:$0xff]
      %v2326 = vld [vmem:[%s2308 + $0xc8] sm:$0xff]
      %v2327 = vld [vmem:[%s2308 + $0xd8] sm:$0xff]
      %v2328 = vld [vmem:[%s2308 + $0xe0] sm:$0xff]
      %v2329 = vld [vmem:[%s2308 + $0xf0] sm:$0xff]
      %v2330 = vld [vmem:[%s2308 + $0xf8] sm:$0xff]
      %v2331 = vld [vmem:[%s2308 + $0x108] sm:$0xff]
      %v2332 = vld [vmem:[%s2308 + $0x110] sm:$0xff]
      %v2333 = vld [vmem:[%s2308 + $0x120] sm:$0xff]
      %v2334 = vld [vmem:[%s2308 + $0x128] sm:$0xff]
      %v2335 = vld [vmem:[%s2308 + $0x138] sm:$0xff]
      %v2336 = vld [vmem:[%s2308 + $0x140] sm:$0xff]
      %v2337 = vld [vmem:[%s2308 + $0x150] sm:$0xff]
      %v2338 = vld [vmem:[%s2308 + $0x158] sm:$0xff]
      %v2339 = vld [vmem:[%s2308 + $0x168] sm:$0xff]
      %v2340 = vld [vmem:[%s2308 + $0x170] sm:$0xff]
      %2373 = vrot.lane.b32.xlu0 %v2309, 12
      %v2374 = vpop.permute.xlu0 %2373
      %2375 = vrot.lane.b32.xlu0 %v2310, 12
      %v2376 = vpop.permute.xlu0 %2375
      %2377 = vrot.lane.b32.xlu0 %v2311, 12
      %v2378 = vpop.permute.xlu0 %2377
      %2379 = vrot.lane.b32.xlu0 %v2312, 12
      %v2380 = vpop.permute.xlu0 %2379
      %2381 = vrot.lane.b32.xlu0 %v2313, 12
      %v2382 = vpop.permute.xlu0 %2381
      %2383 = vrot.lane.b32.xlu0 %v2314, 12
      %v2384 = vpop.permute.xlu0 %2383
      %2385 = vrot.lane.b32.xlu0 %v2315, 12
      %v2386 = vpop.permute.xlu0 %2385
      %2387 = vrot.lane.b32.xlu0 %v2316, 12
      %v2388 = vpop.permute.xlu0 %2387
      %2389 = vrot.lane.b32.xlu0 %v2317, 12
      %v2390 = vpop.permute.xlu0 %2389
      %2391 = vrot.lane.b32.xlu0 %v2318, 12
      %v2392 = vpop.permute.xlu0 %2391
      %2393 = vrot.lane.b32.xlu0 %v2319, 12
      %v2394 = vpop.permute.xlu0 %2393
      %2395 = vrot.lane.b32.xlu0 %v2320, 12
      %v2396 = vpop.permute.xlu0 %2395
      %2397 = vrot.lane.b32.xlu0 %v2321, 12
      %v2398 = vpop.permute.xlu0 %2397
      %2399 = vrot.lane.b32.xlu0 %v2322, 12
      %v2400 = vpop.permute.xlu0 %2399
      %2401 = vrot.lane.b32.xlu0 %v2323, 12
      %v2402 = vpop.permute.xlu0 %2401
      %2403 = vrot.lane.b32.xlu0 %v2324, 12
      %v2404 = vpop.permute.xlu0 %2403
      %2405 = vrot.lane.b32.xlu0 %v2325, 12
      %v2406 = vpop.permute.xlu0 %2405
      %2407 = vrot.lane.b32.xlu0 %v2326, 12
      %v2408 = vpop.permute.xlu0 %2407
      %2409 = vrot.lane.b32.xlu0 %v2327, 12
      %v2410 = vpop.permute.xlu0 %2409
      %2411 = vrot.lane.b32.xlu0 %v2328, 12
      %v2412 = vpop.permute.xlu0 %2411
      %2413 = vrot.lane.b32.xlu0 %v2329, 12
      %v2414 = vpop.permute.xlu0 %2413
      %2415 = vrot.lane.b32.xlu0 %v2330, 12
      %v2416 = vpop.permute.xlu0 %2415
      %2417 = vrot.lane.b32.xlu0 %v2331, 12
      %v2418 = vpop.permute.xlu0 %2417
      %2419 = vrot.lane.b32.xlu0 %v2332, 12
      %v2420 = vpop.permute.xlu0 %2419
      %2421 = vrot.lane.b32.xlu0 %v2333, 12
      %v2422 = vpop.permute.xlu0 %2421
      %2423 = vrot.lane.b32.xlu0 %v2334, 12
      %v2424 = vpop.permute.xlu0 %2423
      %2425 = vrot.lane.b32.xlu0 %v2335, 12
      %v2426 = vpop.permute.xlu0 %2425
      %2427 = vrot.lane.b32.xlu0 %v2336, 12
      %v2428 = vpop.permute.xlu0 %2427
      %2429 = vrot.lane.b32.xlu0 %v2337, 12
      %v2430 = vpop.permute.xlu0 %2429
      %2431 = vrot.lane.b32.xlu0 %v2338, 12
      %v2432 = vpop.permute.xlu0 %2431
      %2433 = vrot.lane.b32.xlu0 %v2339, 12
      %v2434 = vpop.permute.xlu0 %2433
      %2435 = vrot.lane.b32.xlu0 %v2340, 12
      %v2436 = vpop.permute.xlu0 %2435
      %vm2469 = vcmask 113760
      %2470 = vst.msk [vmem:[#allocation3] sm:$0xff] %vm2469, %v2374
      %2471 = vst.msk [vmem:[#allocation3 + $0x8] sm:$0xff] %vm2469, %v2376
      %2472 = vst.msk [vmem:[#allocation3 + $0x10] sm:$0xff] %vm2469, %v2378
      %2473 = vst.msk [vmem:[#allocation3 + $0x18] sm:$0xff] %vm2469, %v2380
      %2474 = vst.msk [vmem:[#allocation3 + $0x20] sm:$0xff] %vm2469, %v2382
      %2475 = vst.msk [vmem:[#allocation3 + $0x28] sm:$0xff] %vm2469, %v2384
      %2476 = vst.msk [vmem:[#allocation3 + $0x30] sm:$0xff] %vm2469, %v2386
      %2477 = vst.msk [vmem:[#allocation3 + $0x38] sm:$0xff] %vm2469, %v2388
      %2478 = vst.msk [vmem:[#allocation3 + $0x40] sm:$0xff] %vm2469, %v2390
      %2479 = vst.msk [vmem:[#allocation3 + $0x48] sm:$0xff] %vm2469, %v2392
      %2480 = vst.msk [vmem:[#allocation3 + $0x50] sm:$0xff] %vm2469, %v2394
      %2481 = vst.msk [vmem:[#allocation3 + $0x58] sm:$0xff] %vm2469, %v2396
      %2482 = vst.msk [vmem:[#allocation3 + $0x60] sm:$0xff] %vm2469, %v2398
      %2483 = vst.msk [vmem:[#allocation3 + $0x68] sm:$0xff] %vm2469, %v2400
      %2484 = vst.msk [vmem:[#allocation3 + $0x70] sm:$0xff] %vm2469, %v2402
      %2485 = vst.msk [vmem:[#allocation3 + $0x78] sm:$0xff] %vm2469, %v2404
      %2486 = vst.msk [vmem:[#allocation3 + $0x80] sm:$0xff] %vm2469, %v2406
      %2487 = vst.msk [vmem:[#allocation3 + $0x88] sm:$0xff] %vm2469, %v2408
      %2488 = vst.msk [vmem:[#allocation3 + $0x90] sm:$0xff] %vm2469, %v2410
      %2489 = vst.msk [vmem:[#allocation3 + $0x98] sm:$0xff] %vm2469, %v2412
      %2490 = vst.msk [vmem:[#allocation3 + $0xa0] sm:$0xff] %vm2469, %v2414
      %2491 = vst.msk [vmem:[#allocation3 + $0xa8] sm:$0xff] %vm2469, %v2416
      %2492 = vst.msk [vmem:[#allocation3 + $0xb0] sm:$0xff] %vm2469, %v2418
      %2493 = vst.msk [vmem:[#allocation3 + $0xb8] sm:$0xff] %vm2469, %v2420
      %2494 = vst.msk [vmem:[#allocation3 + $0xc0] sm:$0xff] %vm2469, %v2422
      %2495 = vst.msk [vmem:[#allocation3 + $0xc8] sm:$0xff] %vm2469, %v2424
      %2496 = vst.msk [vmem:[#allocation3 + $0xd0] sm:$0xff] %vm2469, %v2426
      %2497 = vst.msk [vmem:[#allocation3 + $0xd8] sm:$0xff] %vm2469, %v2428
      %2498 = vst.msk [vmem:[#allocation3 + $0xe0] sm:$0xff] %vm2469, %v2430
      %2499 = vst.msk [vmem:[#allocation3 + $0xe8] sm:$0xff] %vm2469, %v2432
      %2500 = vst.msk [vmem:[#allocation3 + $0xf0] sm:$0xff] %vm2469, %v2434
      %2501 = vst.msk [vmem:[#allocation3 + $0xf8] sm:$0xff] %vm2469, %v2436
      %v2502 = vld [vmem:[%s2308 + $0x1] sm:$0xff]
      %v2503 = vld [vmem:[%s2308 + $0x9] sm:$0xff]
      %v2504 = vld [vmem:[%s2308 + $0x19] sm:$0xff]
      %v2505 = vld [vmem:[%s2308 + $0x21] sm:$0xff]
      %v2506 = vld [vmem:[%s2308 + $0x31] sm:$0xff]
      %v2507 = vld [vmem:[%s2308 + $0x39] sm:$0xff]
      %v2508 = vld [vmem:[%s2308 + $0x49] sm:$0xff]
      %v2509 = vld [vmem:[%s2308 + $0x51] sm:$0xff]
      %v2510 = vld [vmem:[%s2308 + $0x61] sm:$0xff]
      %v2511 = vld [vmem:[%s2308 + $0x69] sm:$0xff]
      %v2512 = vld [vmem:[%s2308 + $0x79] sm:$0xff]
      %v2513 = vld [vmem:[%s2308 + $0x81] sm:$0xff]
      %v2514 = vld [vmem:[%s2308 + $0x91] sm:$0xff]
      %v2515 = vld [vmem:[%s2308 + $0x99] sm:$0xff]
      %v2516 = vld [vmem:[%s2308 + $0xa9] sm:$0xff]
      %v2517 = vld [vmem:[%s2308 + $0xb1] sm:$0xff]
      %v2518 = vld [vmem:[%s2308 + $0xc1] sm:$0xff]
      %v2519 = vld [vmem:[%s2308 + $0xc9] sm:$0xff]
      %v2520 = vld [vmem:[%s2308 + $0xd9] sm:$0xff]
      %v2521 = vld [vmem:[%s2308 + $0xe1] sm:$0xff]
      %v2522 = vld [vmem:[%s2308 + $0xf1] sm:$0xff]
      %v2523 = vld [vmem:[%s2308 + $0xf9] sm:$0xff]
      %v2524 = vld [vmem:[%s2308 + $0x109] sm:$0xff]
      %v2525 = vld [vmem:[%s2308 + $0x111] sm:$0xff]
      %v2526 = vld [vmem:[%s2308 + $0x121] sm:$0xff]
      %v2527 = vld [vmem:[%s2308 + $0x129] sm:$0xff]
      %v2528 = vld [vmem:[%s2308 + $0x139] sm:$0xff]
      %v2529 = vld [vmem:[%s2308 + $0x141] sm:$0xff]
      %v2530 = vld [vmem:[%s2308 + $0x151] sm:$0xff]
      %v2531 = vld [vmem:[%s2308 + $0x159] sm:$0xff]
      %v2532 = vld [vmem:[%s2308 + $0x169] sm:$0xff]
      %v2533 = vld [vmem:[%s2308 + $0x171] sm:$0xff]
      %2566 = vrot.lane.b32.xlu0 %v2502, 14
      %v2567 = vpop.permute.xlu0 %2566
      %2568 = vrot.lane.b32.xlu0 %v2503, 14
      %v2569 = vpop.permute.xlu0 %2568
      %2570 = vrot.lane.b32.xlu0 %v2504, 14
      %v2571 = vpop.permute.xlu0 %2570
      %2572 = vrot.lane.b32.xlu0 %v2505, 14
      %v2573 = vpop.permute.xlu0 %2572
      %2574 = vrot.lane.b32.xlu0 %v2506, 14
      %v2575 = vpop.permute.xlu0 %2574
      %2576 = vrot.lane.b32.xlu0 %v2507, 14
      %v2577 = vpop.permute.xlu0 %2576
      %2578 = vrot.lane.b32.xlu0 %v2508, 14
      %v2579 = vpop.permute.xlu0 %2578
      %2580 = vrot.lane.b32.xlu0 %v2509, 14
      %v2581 = vpop.permute.xlu0 %2580
      %2582 = vrot.lane.b32.xlu0 %v2510, 14
      %v2583 = vpop.permute.xlu0 %2582
      %2584 = vrot.lane.b32.xlu0 %v2511, 14
      %v2585 = vpop.permute.xlu0 %2584
      %2586 = vrot.lane.b32.xlu0 %v2512, 14
      %v2587 = vpop.permute.xlu0 %2586
      %2588 = vrot.lane.b32.xlu0 %v2513, 14
      %v2589 = vpop.permute.xlu0 %2588
      %2590 = vrot.lane.b32.xlu0 %v2514, 14
      %v2591 = vpop.permute.xlu0 %2590
      %2592 = vrot.lane.b32.xlu0 %v2515, 14
      %v2593 = vpop.permute.xlu0 %2592
      %2594 = vrot.lane.b32.xlu0 %v2516, 14
      %v2595 = vpop.permute.xlu0 %2594
      %2596 = vrot.lane.b32.xlu0 %v2517, 14
      %v2597 = vpop.permute.xlu0 %2596
      %2598 = vrot.lane.b32.xlu0 %v2518, 14
      %v2599 = vpop.permute.xlu0 %2598
      %2600 = vrot.lane.b32.xlu0 %v2519, 14
      %v2601 = vpop.permute.xlu0 %2600
      %2602 = vrot.lane.b32.xlu0 %v2520, 14
      %v2603 = vpop.permute.xlu0 %2602
      %2604 = vrot.lane.b32.xlu0 %v2521, 14
      %v2605 = vpop.permute.xlu0 %2604
      %2606 = vrot.lane.b32.xlu0 %v2522, 14
      %v2607 = vpop.permute.xlu0 %2606
      %2608 = vrot.lane.b32.xlu0 %v2523, 14
      %v2609 = vpop.permute.xlu0 %2608
      %2610 = vrot.lane.b32.xlu0 %v2524, 14
      %v2611 = vpop.permute.xlu0 %2610
      %2612 = vrot.lane.b32.xlu0 %v2525, 14
      %v2613 = vpop.permute.xlu0 %2612
      %2614 = vrot.lane.b32.xlu0 %v2526, 14
      %v2615 = vpop.permute.xlu0 %2614
      %2616 = vrot.lane.b32.xlu0 %v2527, 14
      %v2617 = vpop.permute.xlu0 %2616
      %2618 = vrot.lane.b32.xlu0 %v2528, 14
      %v2619 = vpop.permute.xlu0 %2618
      %2620 = vrot.lane.b32.xlu0 %v2529, 14
      %v2621 = vpop.permute.xlu0 %2620
      %2622 = vrot.lane.b32.xlu0 %v2530, 14
      %v2623 = vpop.permute.xlu0 %2622
      %2624 = vrot.lane.b32.xlu0 %v2531, 14
      %v2625 = vpop.permute.xlu0 %2624
      %2626 = vrot.lane.b32.xlu0 %v2532, 14
      %v2627 = vpop.permute.xlu0 %2626
      %2628 = vrot.lane.b32.xlu0 %v2533, 14
      %v2629 = vpop.permute.xlu0 %2628
      %vm2662 = vcmask 130160
      %2663 = vst.msk [vmem:[#allocation3] sm:$0xff] %vm2662, %v2567
      %2664 = vst.msk [vmem:[#allocation3 + $0x8] sm:$0xff] %vm2662, %v2569
      %2665 = vst.msk [vmem:[#allocation3 + $0x10] sm:$0xff] %vm2662, %v2571
      %2666 = vst.msk [vmem:[#allocation3 + $0x18] sm:$0xff] %vm2662, %v2573
      %2667 = vst.msk [vmem:[#allocation3 + $0x20] sm:$0xff] %vm2662, %v2575
      %2668 = vst.msk [vmem:[#allocation3 + $0x28] sm:$0xff] %vm2662, %v2577
      %2669 = vst.msk [vmem:[#allocation3 + $0x30] sm:$0xff] %vm2662, %v2579
      %2670 = vst.msk [vmem:[#allocation3 + $0x38] sm:$0xff] %vm2662, %v2581
      %2671 = vst.msk [vmem:[#allocation3 + $0x40] sm:$0xff] %vm2662, %v2583
      %2672 = vst.msk [vmem:[#allocation3 + $0x48] sm:$0xff] %vm2662, %v2585
      %2673 = vst.msk [vmem:[#allocation3 + $0x50] sm:$0xff] %vm2662, %v2587
      %2674 = vst.msk [vmem:[#allocation3 + $0x58] sm:$0xff] %vm2662, %v2589
      %2675 = vst.msk [vmem:[#allocation3 + $0x60] sm:$0xff] %vm2662, %v2591
      %2676 = vst.msk [vmem:[#allocation3 + $0x68] sm:$0xff] %vm2662, %v2593
      %2677 = vst.msk [vmem:[#allocation3 + $0x70] sm:$0xff] %vm2662, %v2595
      %2678 = vst.msk [vmem:[#allocation3 + $0x78] sm:$0xff] %vm2662, %v2597
      %2679 = vst.msk [vmem:[#allocation3 + $0x80] sm:$0xff] %vm2662, %v2599
      %2680 = vst.msk [vmem:[#allocation3 + $0x88] sm:$0xff] %vm2662, %v2601
      %2681 = vst.msk [vmem:[#allocation3 + $0x90] sm:$0xff] %vm2662, %v2603
      %2682 = vst.msk [vmem:[#allocation3 + $0x98] sm:$0xff] %vm2662, %v2605
      %2683 = vst.msk [vmem:[#allocation3 + $0xa0] sm:$0xff] %vm2662, %v2607
      %2684 = vst.msk [vmem:[#allocation3 + $0xa8] sm:$0xff] %vm2662, %v2609
      %2685 = vst.msk [vmem:[#allocation3 + $0xb0] sm:$0xff] %vm2662, %v2611
      %2686 = vst.msk [vmem:[#allocation3 + $0xb8] sm:$0xff] %vm2662, %v2613
      %2687 = vst.msk [vmem:[#allocation3 + $0xc0] sm:$0xff] %vm2662, %v2615
      %2688 = vst.msk [vmem:[#allocation3 + $0xc8] sm:$0xff] %vm2662, %v2617
      %2689 = vst.msk [vmem:[#allocation3 + $0xd0] sm:$0xff] %vm2662, %v2619
      %2690 = vst.msk [vmem:[#allocation3 + $0xd8] sm:$0xff] %vm2662, %v2621
      %2691 = vst.msk [vmem:[#allocation3 + $0xe0] sm:$0xff] %vm2662, %v2623
      %2692 = vst.msk [vmem:[#allocation3 + $0xe8] sm:$0xff] %vm2662, %v2625
      %2693 = vst.msk [vmem:[#allocation3 + $0xf0] sm:$0xff] %vm2662, %v2627
      %2694 = vst.msk [vmem:[#allocation3 + $0xf8] sm:$0xff] %vm2662, %v2629
      %v2695 = vld [vmem:[%s2308 + $0x2] sm:$0xff]
      %v2696 = vld [vmem:[%s2308 + $0xa] sm:$0xff]
      %v2697 = vld [vmem:[%s2308 + $0x1a] sm:$0xff]
      %v2698 = vld [vmem:[%s2308 + $0x22] sm:$0xff]
      %v2699 = vld [vmem:[%s2308 + $0x32] sm:$0xff]
      %v2700 = vld [vmem:[%s2308 + $0x3a] sm:$0xff]
      %v2701 = vld [vmem:[%s2308 + $0x4a] sm:$0xff]
      %v2702 = vld [vmem:[%s2308 + $0x52] sm:$0xff]
      %v2703 = vld [vmem:[%s2308 + $0x62] sm:$0xff]
      %v2704 = vld [vmem:[%s2308 + $0x6a] sm:$0xff]
      %v2705 = vld [vmem:[%s2308 + $0x7a] sm:$0xff]
      %v2706 = vld [vmem:[%s2308 + $0x82] sm:$0xff]
      %v2707 = vld [vmem:[%s2308 + $0x92] sm:$0xff]
      %v2708 = vld [vmem:[%s2308 + $0x9a] sm:$0xff]
      %v2709 = vld [vmem:[%s2308 + $0xaa] sm:$0xff]
      %v2710 = vld [vmem:[%s2308 + $0xb2] sm:$0xff]
      %v2711 = vld [vmem:[%s2308 + $0xc2] sm:$0xff]
      %v2712 = vld [vmem:[%s2308 + $0xca] sm:$0xff]
      %v2713 = vld [vmem:[%s2308 + $0xda] sm:$0xff]
      %v2714 = vld [vmem:[%s2308 + $0xe2] sm:$0xff]
      %v2715 = vld [vmem:[%s2308 + $0xf2] sm:$0xff]
      %v2716 = vld [vmem:[%s2308 + $0xfa] sm:$0xff]
      %v2717 = vld [vmem:[%s2308 + $0x10a] sm:$0xff]
      %v2718 = vld [vmem:[%s2308 + $0x112] sm:$0xff]
      %v2719 = vld [vmem:[%s2308 + $0x122] sm:$0xff]
      %v2720 = vld [vmem:[%s2308 + $0x12a] sm:$0xff]
      %v2721 = vld [vmem:[%s2308 + $0x13a] sm:$0xff]
      %v2722 = vld [vmem:[%s2308 + $0x142] sm:$0xff]
      %v2723 = vld [vmem:[%s2308 + $0x152] sm:$0xff]
      %v2724 = vld [vmem:[%s2308 + $0x15a] sm:$0xff]
      %v2725 = vld [vmem:[%s2308 + $0x16a] sm:$0xff]
      %v2726 = vld [vmem:[%s2308 + $0x172] sm:$0xff]
      %2759 = vrot.lane.b32.xlu0 %v2695, 16
      %v2760 = vpop.permute.xlu0 %2759
      %2761 = vrot.lane.b32.xlu0 %v2696, 16
      %v2762 = vpop.permute.xlu0 %2761
      %2763 = vrot.lane.b32.xlu0 %v2697, 16
      %v2764 = vpop.permute.xlu0 %2763
      %2765 = vrot.lane.b32.xlu0 %v2698, 16
      %v2766 = vpop.permute.xlu0 %2765
      %2767 = vrot.lane.b32.xlu0 %v2699, 16
      %v2768 = vpop.permute.xlu0 %2767
      %2769 = vrot.lane.b32.xlu0 %v2700, 16
      %v2770 = vpop.permute.xlu0 %2769
      %2771 = vrot.lane.b32.xlu0 %v2701, 16
      %v2772 = vpop.permute.xlu0 %2771
      %2773 = vrot.lane.b32.xlu0 %v2702, 16
      %v2774 = vpop.permute.xlu0 %2773
      %2775 = vrot.lane.b32.xlu0 %v2703, 16
      %v2776 = vpop.permute.xlu0 %2775
      %2777 = vrot.lane.b32.xlu0 %v2704, 16
      %v2778 = vpop.permute.xlu0 %2777
      %2779 = vrot.lane.b32.xlu0 %v2705, 16
      %v2780 = vpop.permute.xlu0 %2779
      %2781 = vrot.lane.b32.xlu0 %v2706, 16
      %v2782 = vpop.permute.xlu0 %2781
      %2783 = vrot.lane.b32.xlu0 %v2707, 16
      %v2784 = vpop.permute.xlu0 %2783
      %2785 = vrot.lane.b32.xlu0 %v2708, 16
      %v2786 = vpop.permute.xlu0 %2785
      %2787 = vrot.lane.b32.xlu0 %v2709, 16
      %v2788 = vpop.permute.xlu0 %2787
      %2789 = vrot.lane.b32.xlu0 %v2710, 16
      %v2790 = vpop.permute.xlu0 %2789
      %2791 = vrot.lane.b32.xlu0 %v2711, 16
      %v2792 = vpop.permute.xlu0 %2791
      %2793 = vrot.lane.b32.xlu0 %v2712, 16
      %v2794 = vpop.permute.xlu0 %2793
      %2795 = vrot.lane.b32.xlu0 %v2713, 16
      %v2796 = vpop.permute.xlu0 %2795
      %2797 = vrot.lane.b32.xlu0 %v2714, 16
      %v2798 = vpop.permute.xlu0 %2797
      %2799 = vrot.lane.b32.xlu0 %v2715, 16
      %v2800 = vpop.permute.xlu0 %2799
      %2801 = vrot.lane.b32.xlu0 %v2716, 16
      %v2802 = vpop.permute.xlu0 %2801
      %2803 = vrot.lane.b32.xlu0 %v2717, 16
      %v2804 = vpop.permute.xlu0 %2803
      %2805 = vrot.lane.b32.xlu0 %v2718, 16
      %v2806 = vpop.permute.xlu0 %2805
      %2807 = vrot.lane.b32.xlu0 %v2719, 16
      %v2808 = vpop.permute.xlu0 %2807
      %2809 = vrot.lane.b32.xlu0 %v2720, 16
      %v2810 = vpop.permute.xlu0 %2809
      %2811 = vrot.lane.b32.xlu0 %v2721, 16
      %v2812 = vpop.permute.xlu0 %2811
      %2813 = vrot.lane.b32.xlu0 %v2722, 16
      %v2814 = vpop.permute.xlu0 %2813
      %2815 = vrot.lane.b32.xlu0 %v2723, 16
      %v2816 = vpop.permute.xlu0 %2815
      %2817 = vrot.lane.b32.xlu0 %v2724, 16
      %v2818 = vpop.permute.xlu0 %2817
      %2819 = vrot.lane.b32.xlu0 %v2725, 16
      %v2820 = vpop.permute.xlu0 %2819
      %2821 = vrot.lane.b32.xlu0 %v2726, 16
      %v2822 = vpop.permute.xlu0 %2821
      %vm2855 = vcmask 146560
      %2856 = vst.msk [vmem:[#allocation3] sm:$0xff] %vm2855, %v2760
      %2857 = vst.msk [vmem:[#allocation3 + $0x8] sm:$0xff] %vm2855, %v2762
      %2858 = vst.msk [vmem:[#allocation3 + $0x10] sm:$0xff] %vm2855, %v2764
      %2859 = vst.msk [vmem:[#allocation3 + $0x18] sm:$0xff] %vm2855, %v2766
      %2860 = vst.msk [vmem:[#allocation3 + $0x20] sm:$0xff] %vm2855, %v2768
      %2861 = vst.msk [vmem:[#allocation3 + $0x28] sm:$0xff] %vm2855, %v2770
      %2862 = vst.msk [vmem:[#allocation3 + $0x30] sm:$0xff] %vm2855, %v2772
      %2863 = vst.msk [vmem:[#allocation3 + $0x38] sm:$0xff] %vm2855, %v2774
      %2864 = vst.msk [vmem:[#allocation3 + $0x40] sm:$0xff] %vm2855, %v2776
      %2865 = vst.msk [vmem:[#allocation3 + $0x48] sm:$0xff] %vm2855, %v2778
      %2866 = vst.msk [vmem:[#allocation3 + $0x50] sm:$0xff] %vm2855, %v2780
      %2867 = vst.msk [vmem:[#allocation3 + $0x58] sm:$0xff] %vm2855, %v2782
      %2868 = vst.msk [vmem:[#allocation3 + $0x60] sm:$0xff] %vm2855, %v2784
      %2869 = vst.msk [vmem:[#allocation3 + $0x68] sm:$0xff] %vm2855, %v2786
      %2870 = vst.msk [vmem:[#allocation3 + $0x70] sm:$0xff] %vm2855, %v2788
      %2871 = vst.msk [vmem:[#allocation3 + $0x78] sm:$0xff] %vm2855, %v2790
      %2872 = vst.msk [vmem:[#allocation3 + $0x80] sm:$0xff] %vm2855, %v2792
      %2873 = vst.msk [vmem:[#allocation3 + $0x88] sm:$0xff] %vm2855, %v2794
      %2874 = vst.msk [vmem:[#allocation3 + $0x90] sm:$0xff] %vm2855, %v2796
      %2875 = vst.msk [vmem:[#allocation3 + $0x98] sm:$0xff] %vm2855, %v2798
      %2876 = vst.msk [vmem:[#allocation3 + $0xa0] sm:$0xff] %vm2855, %v2800
      %2877 = vst.msk [vmem:[#allocation3 + $0xa8] sm:$0xff] %vm2855, %v2802
      %2878 = vst.msk [vmem:[#allocation3 + $0xb0] sm:$0xff] %vm2855, %v2804
      %2879 = vst.msk [vmem:[#allocation3 + $0xb8] sm:$0xff] %vm2855, %v2806
      %2880 = vst.msk [vmem:[#allocation3 + $0xc0] sm:$0xff] %vm2855, %v2808
      %2881 = vst.msk [vmem:[#allocation3 + $0xc8] sm:$0xff] %vm2855, %v2810
      %2882 = vst.msk [vmem:[#allocation3 + $0xd0] sm:$0xff] %vm2855, %v2812
      %2883 = vst.msk [vmem:[#allocation3 + $0xd8] sm:$0xff] %vm2855, %v2814
      %2884 = vst.msk [vmem:[#allocation3 + $0xe0] sm:$0xff] %vm2855, %v2816
      %2885 = vst.msk [vmem:[#allocation3 + $0xe8] sm:$0xff] %vm2855, %v2818
      %2886 = vst.msk [vmem:[#allocation3 + $0xf0] sm:$0xff] %vm2855, %v2820
      %2887 = vst.msk [vmem:[#allocation3 + $0xf8] sm:$0xff] %vm2855, %v2822
      %v2888 = vld [vmem:[#allocation3] sm:$0xff]
      %v2889 = vld [vmem:[#allocation3 + $0x8] sm:$0xff]
      %v2890 = vld [vmem:[#allocation3 + $0x10] sm:$0xff]
      %v2891 = vld [vmem:[#allocation3 + $0x18] sm:$0xff]
      %v2892 = vld [vmem:[#allocation3 + $0x20] sm:$0xff]
      %v2893 = vld [vmem:[#allocation3 + $0x28] sm:$0xff]
      %v2894 = vld [vmem:[#allocation3 + $0x30] sm:$0xff]
      %v2895 = vld [vmem:[#allocation3 + $0x38] sm:$0xff]
      %v2896 = vld [vmem:[#allocation3 + $0x40] sm:$0xff]
      %v2897 = vld [vmem:[#allocation3 + $0x48] sm:$0xff]
      %v2898 = vld [vmem:[#allocation3 + $0x50] sm:$0xff]
      %v2899 = vld [vmem:[#allocation3 + $0x58] sm:$0xff]
      %v2900 = vld [vmem:[#allocation3 + $0x60] sm:$0xff]
      %v2901 = vld [vmem:[#allocation3 + $0x68] sm:$0xff]
      %v2902 = vld [vmem:[#allocation3 + $0x70] sm:$0xff]
      %v2903 = vld [vmem:[#allocation3 + $0x78] sm:$0xff]
      %v2904 = vld [vmem:[#allocation3 + $0x80] sm:$0xff]
      %v2905 = vld [vmem:[#allocation3 + $0x88] sm:$0xff]
      %v2906 = vld [vmem:[#allocation3 + $0x90] sm:$0xff]
      %v2907 = vld [vmem:[#allocation3 + $0x98] sm:$0xff]
      %v2908 = vld [vmem:[#allocation3 + $0xa0] sm:$0xff]
      %v2909 = vld [vmem:[#allocation3 + $0xa8] sm:$0xff]
      %v2910 = vld [vmem:[#allocation3 + $0xb0] sm:$0xff]
      %v2911 = vld [vmem:[#allocation3 + $0xb8] sm:$0xff]
      %v2912 = vld [vmem:[#allocation3 + $0xc0] sm:$0xff]
      %v2913 = vld [vmem:[#allocation3 + $0xc8] sm:$0xff]
      %v2914 = vld [vmem:[#allocation3 + $0xd0] sm:$0xff]
      %v2915 = vld [vmem:[#allocation3 + $0xd8] sm:$0xff]
      %v2916 = vld [vmem:[#allocation3 + $0xe0] sm:$0xff]
      %v2917 = vld [vmem:[#allocation3 + $0xe8] sm:$0xff]
      %v2918 = vld [vmem:[#allocation3 + $0xf0] sm:$0xff]
      %v2919 = vld [vmem:[#allocation3 + $0xf8] sm:$0xff]
      %v2920 = vld [vmem:[%s5] sm:$0xff]
      %v2921 = vld [vmem:[%s5 + $0x8] sm:$0xff]
      %v2922 = vld [vmem:[%s5 + $0x10] sm:$0x3]
      %v2923 = vld [vmem:[%s6] sm:$0x1]
      %v2925 = vlaneseq
      %v2926 = vshrl.u32 %v2925, 7
      %v2927 = vsub.s32 0, %v2926
      %v2928 = vrot.slane %v2923, %v2927
      %vm2930 = vcmask 146432
      %v2932 = vsel %vm2930, %v2888, 0
      %v2935 = vsel %vm2930, %v2889, 0
      %v2938 = vsel %vm2930, %v2890, 0
      %v2941 = vsel %vm2930, %v2891, 0
      %v2944 = vsel %vm2930, %v2892, 0
      %v2947 = vsel %vm2930, %v2893, 0
      %v2950 = vsel %vm2930, %v2894, 0
      %v2953 = vsel %vm2930, %v2895, 0
      %v2956 = vsel %vm2930, %v2896, 0
      %v2959 = vsel %vm2930, %v2897, 0
      %v2962 = vsel %vm2930, %v2898, 0
      %v2965 = vsel %vm2930, %v2899, 0
      %v2968 = vsel %vm2930, %v2900, 0
      %v2971 = vsel %vm2930, %v2901, 0
      %v2974 = vsel %vm2930, %v2902, 0
      %v2977 = vsel %vm2930, %v2903, 0
      %v2980 = vsel %vm2930, %v2904, 0
      %v2983 = vsel %vm2930, %v2905, 0
      %v2986 = vsel %vm2930, %v2906, 0
      %v2989 = vsel %vm2930, %v2907, 0
      %v2992 = vsel %vm2930, %v2908, 0
      %v2995 = vsel %vm2930, %v2909, 0
      %v2998 = vsel %vm2930, %v2910, 0
      %v3001 = vsel %vm2930, %v2911, 0
      %v3004 = vsel %vm2930, %v2912, 0
      %v3007 = vsel %vm2930, %v2913, 0
      %v3010 = vsel %vm2930, %v2914, 0
      %v3013 = vsel %vm2930, %v2915, 0
      %v3016 = vsel %vm2930, %v2916, 0
      %v3019 = vsel %vm2930, %v2917, 0
      %v3022 = vsel %vm2930, %v2918, 0
      %v3025 = vsel %vm2930, %v2919, 0
      %vm3027 = vcmask 1041408
      %v3029 = vsel %vm3027, %v2922, 0
      %3031 = vmatprep.subr.mxu0 0.0
      %3032 = vmatpush1.msra.mxu0 0.0
      %3033 = vmatprep.subr.mxu0 0.0
      %3034 = vmatpush1.msra.mxu0 0.0
      %3035 = vmatprep.subr.mxu0 0.0
      %3036 = vmatpush1.msra.mxu0 0.0
      %3037 = vmatprep.subr.mxu0 0.0
      %3038 = vmatpush1.msra.mxu0 0.0
      %3039 = vmatprep.subr.mxu0 0.0
      %3040 = vmatpush1.msra.mxu0 0.0
      %3041 = vmatprep.subr.mxu0 0.0
      %3042 = vmatpush1.msra.mxu0 0.0
      %3043 = vmatprep.subr.mxu0 0.0
      %3044 = vmatpush1.msra.mxu0 0.0
      %3045 = vmatprep.subr.mxu0 0.0
      %3046 = vmatpush1.msra.mxu0 0.0
      %3047 = vmatprep.subr.mxu0 0.0
      %3048 = vmatpush1.msra.mxu0 0.0
      %3049 = vmatprep.subr.mxu0 0.0
      %3050 = vmatpush1.msra.mxu0 0.0
      %3051 = vmatprep.subr.mxu0 0.0
      %3052 = vmatpush1.msra.mxu0 0.0
      %3053 = vmatprep.subr.mxu0 0.0
      %3054 = vmatpush1.msra.mxu0 0.0
      %3055 = vmatprep.subr.mxu0 0.0
      %3056 = vmatpush1.msra.mxu0 0.0
      %3057 = vmatprep.subr.mxu0 0.0
      %3058 = vmatpush1.msra.mxu0 %v3029
      %3059 = vmatprep.subr.mxu0 0.0
      %3060 = vmatpush1.msra.mxu0 %v2921
      %3061 = vmatprep.subr.mxu0 0.0
      %3062 = vmatpush1.msra.mxu0 %v2920
      %3063 = vmatprep.subr.mxu0 0.0
      %3064 = vmatpush2.msra.mxu0 0.0
      %3065 = vmatprep.subr.mxu0 0.0
      %3066 = vmatpush2.msra.mxu0 0.0
      %3067 = vmatprep.subr.mxu0 0.0
      %3068 = vmatpush2.msra.mxu0 0.0
      %3069 = vmatprep.subr.mxu0 0.0
      %3070 = vmatpush2.msra.mxu0 0.0
      %3071 = vmatprep.subr.mxu0 0.0
      %3072 = vmatpush2.msra.mxu0 0.0
      %3073 = vmatprep.subr.mxu0 0.0
      %3074 = vmatpush2.msra.mxu0 0.0
      %3075 = vmatprep.subr.mxu0 0.0
      %3076 = vmatpush2.msra.mxu0 0.0
      %3077 = vmatprep.subr.mxu0 0.0
      %3078 = vmatpush2.msra.mxu0 0.0
      %3079 = vmatprep.subr.mxu0 0.0
      %3080 = vmatpush2.msra.mxu0 0.0
      %3081 = vmatprep.subr.mxu0 0.0
      %3082 = vmatpush2.msra.mxu0 0.0
      %3083 = vmatprep.subr.mxu0 0.0
      %3084 = vmatpush2.msra.mxu0 0.0
      %3085 = vmatprep.subr.mxu0 0.0
      %3086 = vmatpush2.msra.mxu0 0.0
      %3087 = vmatprep.subr.mxu0 0.0
      %3088 = vmatpush2.msra.mxu0 0.0
      %3089 = vmatprep.subr.mxu0 0.0
      %3090 = vmatpush2.msra.mxu0 0.0
      %3091 = vmatprep.subr.mxu0 0.0
      %3092 = vmatpush2.msra.mxu0 0.0
      %3093 = vmatprep.subr.mxu0 0.0
      %3094 = vmatpush2.msra.mxu0 0.0
      %3095 = vmatprep.mubr.f32.mxu0 0.0
      %3096 = vmatmul.mubr.f32.gmra.mxu0 %v2932
      %v3097 = vpop.f32.mrf.mxu0
      %v3098 = vadd.f32 %v2928, %v3097
      %v3099 = vpop.f32.mrf.mxu0
      %3100 = vmatprep.mubr.f32.mxu0 0.0
      %3101 = vmatmul.mubr.f32.gmra.mxu0 %v2935
      %v3102 = vpop.f32.mrf.mxu0
      %v3103 = vadd.f32 %v2928, %v3102
      %v3104 = vpop.f32.mrf.mxu0
      %3105 = vmatprep.mubr.f32.mxu0 0.0
      %3106 = vmatmul.mubr.f32.gmra.mxu0 %v2938
      %v3107 = vpop.f32.mrf.mxu0
      %v3108 = vadd.f32 %v2928, %v3107
      %v3109 = vpop.f32.mrf.mxu0
      %3110 = vmatprep.mubr.f32.mxu0 0.0
      %3111 = vmatmul.mubr.f32.gmra.mxu0 %v2941
      %v3112 = vpop.f32.mrf.mxu0
      %v3113 = vadd.f32 %v2928, %v3112
      %v3114 = vpop.f32.mrf.mxu0
      %3115 = vmatprep.mubr.f32.mxu0 0.0
      %3116 = vmatmul.mubr.f32.gmra.mxu0 %v2944
      %v3117 = vpop.f32.mrf.mxu0
      %v3118 = vadd.f32 %v2928, %v3117
      %v3119 = vpop.f32.mrf.mxu0
      %3120 = vmatprep.mubr.f32.mxu0 0.0
      %3121 = vmatmul.mubr.f32.gmra.mxu0 %v2947
      %v3122 = vpop.f32.mrf.mxu0
      %v3123 = vadd.f32 %v2928, %v3122
      %v3124 = vpop.f32.mrf.mxu0
      %3125 = vmatprep.mubr.f32.mxu0 0.0
      %3126 = vmatmul.mubr.f32.gmra.mxu0 %v2950
      %v3127 = vpop.f32.mrf.mxu0
      %v3128 = vadd.f32 %v2928, %v3127
      %v3129 = vpop.f32.mrf.mxu0
      %3130 = vmatprep.mubr.f32.mxu0 0.0
      %3131 = vmatmul.mubr.f32.gmra.mxu0 %v2953
      %v3132 = vpop.f32.mrf.mxu0
      %v3133 = vadd.f32 %v2928, %v3132
      %v3134 = vpop.f32.mrf.mxu0
      %3135 = vmatprep.mubr.f32.mxu0 0.0
      %3136 = vmatmul.mubr.f32.gmra.mxu0 %v2956
      %v3137 = vpop.f32.mrf.mxu0
      %v3138 = vadd.f32 %v2928, %v3137
      %v3139 = vpop.f32.mrf.mxu0
      %3140 = vmatprep.mubr.f32.mxu0 0.0
      %3141 = vmatmul.mubr.f32.gmra.mxu0 %v2959
      %v3142 = vpop.f32.mrf.mxu0
      %v3143 = vadd.f32 %v2928, %v3142
      %v3144 = vpop.f32.mrf.mxu0
      %3145 = vmatprep.mubr.f32.mxu0 0.0
      %3146 = vmatmul.mubr.f32.gmra.mxu0 %v2962
      %v3147 = vpop.f32.mrf.mxu0
      %v3148 = vadd.f32 %v2928, %v3147
      %v3149 = vpop.f32.mrf.mxu0
      %3150 = vmatprep.mubr.f32.mxu0 0.0
      %3151 = vmatmul.mubr.f32.gmra.mxu0 %v2965
      %v3152 = vpop.f32.mrf.mxu0
      %v3153 = vadd.f32 %v2928, %v3152
      %v3154 = vpop.f32.mrf.mxu0
      %3155 = vmatprep.mubr.f32.mxu0 0.0
      %3156 = vmatmul.mubr.f32.gmra.mxu0 %v2968
      %v3157 = vpop.f32.mrf.mxu0
      %v3158 = vadd.f32 %v2928, %v3157
      %v3159 = vpop.f32.mrf.mxu0
      %3160 = vmatprep.mubr.f32.mxu0 0.0
      %3161 = vmatmul.mubr.f32.gmra.mxu0 %v2971
      %v3162 = vpop.f32.mrf.mxu0
      %v3163 = vadd.f32 %v2928, %v3162
      %v3164 = vpop.f32.mrf.mxu0
      %3165 = vmatprep.mubr.f32.mxu0 0.0
      %3166 = vmatmul.mubr.f32.gmra.mxu0 %v2974
      %v3167 = vpop.f32.mrf.mxu0
      %v3168 = vadd.f32 %v2928, %v3167
      %v3169 = vpop.f32.mrf.mxu0
      %3170 = vmatprep.mubr.f32.mxu0 0.0
      %3171 = vmatmul.mubr.f32.gmra.mxu0 %v2977
      %v3172 = vpop.f32.mrf.mxu0
      %v3173 = vadd.f32 %v2928, %v3172
      %v3174 = vpop.f32.mrf.mxu0
      %3175 = vmatprep.mubr.f32.mxu0 0.0
      %3176 = vmatmul.mubr.f32.gmra.mxu0 %v2980
      %v3177 = vpop.f32.mrf.mxu0
      %v3178 = vadd.f32 %v2928, %v3177
      %v3179 = vpop.f32.mrf.mxu0
      %3180 = vmatprep.mubr.f32.mxu0 0.0
      %3181 = vmatmul.mubr.f32.gmra.mxu0 %v2983
      %v3182 = vpop.f32.mrf.mxu0
      %v3183 = vadd.f32 %v2928, %v3182
      %v3184 = vpop.f32.mrf.mxu0
      %3185 = vmatprep.mubr.f32.mxu0 0.0
      %3186 = vmatmul.mubr.f32.gmra.mxu0 %v2986
      %v3187 = vpop.f32.mrf.mxu0
      %v3188 = vadd.f32 %v2928, %v3187
      %v3189 = vpop.f32.mrf.mxu0
      %3190 = vmatprep.mubr.f32.mxu0 0.0
      %3191 = vmatmul.mubr.f32.gmra.mxu0 %v2989
      %v3192 = vpop.f32.mrf.mxu0
      %v3193 = vadd.f32 %v2928, %v3192
      %v3194 = vpop.f32.mrf.mxu0
      %3195 = vmatprep.mubr.f32.mxu0 0.0
      %3196 = vmatmul.mubr.f32.gmra.mxu0 %v2992
      %v3197 = vpop.f32.mrf.mxu0
      %v3198 = vadd.f32 %v2928, %v3197
      %v3199 = vpop.f32.mrf.mxu0
      %3200 = vmatprep.mubr.f32.mxu0 0.0
      %3201 = vmatmul.mubr.f32.gmra.mxu0 %v2995
      %v3202 = vpop.f32.mrf.mxu0
      %v3203 = vadd.f32 %v2928, %v3202
      %v3204 = vpop.f32.mrf.mxu0
      %3205 = vmatprep.mubr.f32.mxu0 0.0
      %3206 = vmatmul.mubr.f32.gmra.mxu0 %v2998
      %v3207 = vpop.f32.mrf.mxu0
      %v3208 = vadd.f32 %v2928, %v3207
      %v3209 = vpop.f32.mrf.mxu0
      %3210 = vmatprep.mubr.f32.mxu0 0.0
      %3211 = vmatmul.mubr.f32.gmra.mxu0 %v3001
      %v3212 = vpop.f32.mrf.mxu0
      %v3213 = vadd.f32 %v2928, %v3212
      %v3214 = vpop.f32.mrf.mxu0
      %3215 = vmatprep.mubr.f32.mxu0 0.0
      %3216 = vmatmul.mubr.f32.gmra.mxu0 %v3004
      %v3217 = vpop.f32.mrf.mxu0
      %v3218 = vadd.f32 %v2928, %v3217
      %v3219 = vpop.f32.mrf.mxu0
      %3220 = vmatprep.mubr.f32.mxu0 0.0
      %3221 = vmatmul.mubr.f32.gmra.mxu0 %v3007
      %v3222 = vpop.f32.mrf.mxu0
      %v3223 = vadd.f32 %v2928, %v3222
      %v3224 = vpop.f32.mrf.mxu0
      %3225 = vmatprep.mubr.f32.mxu0 0.0
      %3226 = vmatmul.mubr.f32.gmra.mxu0 %v3010
      %v3227 = vpop.f32.mrf.mxu0
      %v3228 = vadd.f32 %v2928, %v3227
      %v3229 = vpop.f32.mrf.mxu0
      %3230 = vmatprep.mubr.f32.mxu0 0.0
      %3231 = vmatmul.mubr.f32.gmra.mxu0 %v3013
      %v3232 = vpop.f32.mrf.mxu0
      %v3233 = vadd.f32 %v2928, %v3232
      %v3234 = vpop.f32.mrf.mxu0
      %3235 = vmatprep.mubr.f32.mxu0 0.0
      %3236 = vmatmul.mubr.f32.gmra.mxu0 %v3016
      %v3237 = vpop.f32.mrf.mxu0
      %v3238 = vadd.f32 %v2928, %v3237
      %v3239 = vpop.f32.mrf.mxu0
      %3240 = vmatprep.mubr.f32.mxu0 0.0
      %3241 = vmatmul.mubr.f32.gmra.mxu0 %v3019
      %v3242 = vpop.f32.mrf.mxu0
      %v3243 = vadd.f32 %v2928, %v3242
      %v3244 = vpop.f32.mrf.mxu0
      %3245 = vmatprep.mubr.f32.mxu0 0.0
      %3246 = vmatmul.mubr.f32.gmra.mxu0 %v3022
      %v3247 = vpop.f32.mrf.mxu0
      %v3248 = vadd.f32 %v2928, %v3247
      %v3249 = vpop.f32.mrf.mxu0
      %3250 = vmatprep.mubr.f32.mxu0 0.0
      %3251 = vmatmul.mubr.f32.gmra.mxu0 %v3025
      %v3252 = vpop.f32.mrf.mxu0
      %v3253 = vadd.f32 %v2928, %v3252
      %v3254 = vpop.f32.mrf.mxu0
      %3255 = vdwg.mxu0
      %v3256 = vsub.f32 0.0, %v3098
      %v3257 = vsub.f32 0.0, %v3103
      %v3258 = vsub.f32 0.0, %v3108
      %v3259 = vsub.f32 0.0, %v3113
      %v3260 = vsub.f32 0.0, %v3118
      %v3261 = vsub.f32 0.0, %v3123
      %v3262 = vsub.f32 0.0, %v3128
      %v3263 = vsub.f32 0.0, %v3133
      %v3264 = vsub.f32 0.0, %v3138
      %v3265 = vsub.f32 0.0, %v3143
      %v3266 = vsub.f32 0.0, %v3148
      %v3267 = vsub.f32 0.0, %v3153
      %v3268 = vsub.f32 0.0, %v3158
      %v3269 = vsub.f32 0.0, %v3163
      %v3270 = vsub.f32 0.0, %v3168
      %v3271 = vsub.f32 0.0, %v3173
      %v3272 = vsub.f32 0.0, %v3178
      %v3273 = vsub.f32 0.0, %v3183
      %v3274 = vsub.f32 0.0, %v3188
      %v3275 = vsub.f32 0.0, %v3193
      %v3276 = vsub.f32 0.0, %v3198
      %v3277 = vsub.f32 0.0, %v3203
      %v3278 = vsub.f32 0.0, %v3208
      %v3279 = vsub.f32 0.0, %v3213
      %v3280 = vsub.f32 0.0, %v3218
      %v3281 = vsub.f32 0.0, %v3223
      %v3282 = vsub.f32 0.0, %v3228
      %v3283 = vsub.f32 0.0, %v3233
      %v3284 = vsub.f32 0.0, %v3238
      %v3285 = vsub.f32 0.0, %v3243
      %v3286 = vsub.f32 0.0, %v3248
      %v3287 = vsub.f32 0.0, %v3253
      %v3288 = vmul.f32 %v3256, 1.442695
      %v3289 = vpow.pop %v3288
      %v3290 = vmul.f32 %v3257, 1.442695
      %v3291 = vpow.pop %v3290
      %v3292 = vmul.f32 %v3258, 1.442695
      %v3293 = vpow.pop %v3292
      %v3294 = vmul.f32 %v3259, 1.442695
      %v3295 = vpow.pop %v3294
      %v3296 = vmul.f32 %v3260, 1.442695
      %v3297 = vpow.pop %v3296
      %v3298 = vmul.f32 %v3261, 1.442695
      %v3299 = vpow.pop %v3298
      %v3300 = vmul.f32 %v3262, 1.442695
      %v3301 = vpow.pop %v3300
      %v3302 = vmul.f32 %v3263, 1.442695
      %v3303 = vpow.pop %v3302
      %v3304 = vmul.f32 %v3264, 1.442695
      %v3305 = vpow.pop %v3304
      %v3306 = vmul.f32 %v3265, 1.442695
      %v3307 = vpow.pop %v3306
      %v3308 = vmul.f32 %v3266, 1.442695
      %v3309 = vpow.pop %v3308
      %v3310 = vmul.f32 %v3267, 1.442695
      %v3311 = vpow.pop %v3310
      %v3312 = vmul.f32 %v3268, 1.442695
      %v3313 = vpow.pop %v3312
      %v3314 = vmul.f32 %v3269, 1.442695
      %v3315 = vpow.pop %v3314
      %v3316 = vmul.f32 %v3270, 1.442695
      %v3317 = vpow.pop %v3316
      %v3318 = vmul.f32 %v3271, 1.442695
      %v3319 = vpow.pop %v3318
      %v3320 = vmul.f32 %v3272, 1.442695
      %v3321 = vpow.pop %v3320
      %v3322 = vmul.f32 %v3273, 1.442695
      %v3323 = vpow.pop %v3322
      %v3324 = vmul.f32 %v3274, 1.442695
      %v3325 = vpow.pop %v3324
      %v3326 = vmul.f32 %v3275, 1.442695
      %v3327 = vpow.pop %v3326
      %v3328 = vmul.f32 %v3276, 1.442695
      %v3329 = vpow.pop %v3328
      %v3330 = vmul.f32 %v3277, 1.442695
      %v3331 = vpow.pop %v3330
      %v3332 = vmul.f32 %v3278, 1.442695
      %v3333 = vpow.pop %v3332
      %v3334 = vmul.f32 %v3279, 1.442695
      %v3335 = vpow.pop %v3334
      %v3336 = vmul.f32 %v3280, 1.442695
      %v3337 = vpow.pop %v3336
      %v3338 = vmul.f32 %v3281, 1.442695
      %v3339 = vpow.pop %v3338
      %v3340 = vmul.f32 %v3282, 1.442695
      %v3341 = vpow.pop %v3340
      %v3342 = vmul.f32 %v3283, 1.442695
      %v3343 = vpow.pop %v3342
      %v3344 = vmul.f32 %v3284, 1.442695
      %v3345 = vpow.pop %v3344
      %v3346 = vmul.f32 %v3285, 1.442695
      %v3347 = vpow.pop %v3346
      %v3348 = vmul.f32 %v3286, 1.442695
      %v3349 = vpow.pop %v3348
      %v3350 = vmul.f32 %v3287, 1.442695
      %v3351 = vpow.pop %v3350
      %v3352 = vadd.f32 %v3289, 1.0
      %v3353 = vadd.f32 %v3291, 1.0
      %v3354 = vadd.f32 %v3293, 1.0
      %v3355 = vadd.f32 %v3295, 1.0
      %v3356 = vadd.f32 %v3297, 1.0
      %v3357 = vadd.f32 %v3299, 1.0
      %v3358 = vadd.f32 %v3301, 1.0
      %v3359 = vadd.f32 %v3303, 1.0
      %v3360 = vadd.f32 %v3305, 1.0
      %v3361 = vadd.f32 %v3307, 1.0
      %v3362 = vadd.f32 %v3309, 1.0
      %v3363 = vadd.f32 %v3311, 1.0
      %v3364 = vadd.f32 %v3313, 1.0
      %v3365 = vadd.f32 %v3315, 1.0
      %v3366 = vadd.f32 %v3317, 1.0
      %v3367 = vadd.f32 %v3319, 1.0
      %v3368 = vadd.f32 %v3321, 1.0
      %v3369 = vadd.f32 %v3323, 1.0
      %v3370 = vadd.f32 %v3325, 1.0
      %v3371 = vadd.f32 %v3327, 1.0
      %v3372 = vadd.f32 %v3329, 1.0
      %v3373 = vadd.f32 %v3331, 1.0
      %v3374 = vadd.f32 %v3333, 1.0
      %v3375 = vadd.f32 %v3335, 1.0
      %v3376 = vadd.f32 %v3337, 1.0
      %v3377 = vadd.f32 %v3339, 1.0
      %v3378 = vadd.f32 %v3341, 1.0
      %v3379 = vadd.f32 %v3343, 1.0
      %v3380 = vadd.f32 %v3345, 1.0
      %v3381 = vadd.f32 %v3347, 1.0
      %v3382 = vadd.f32 %v3349, 1.0
      %v3383 = vadd.f32 %v3351, 1.0
      %v3384 = vrcp.pop %v3352
      %v3385 = vrcp.pop %v3353
      %v3386 = vrcp.pop %v3354
      %v3387 = vrcp.pop %v3355
      %v3388 = vrcp.pop %v3356
      %v3389 = vrcp.pop %v3357
      %v3390 = vrcp.pop %v3358
      %v3391 = vrcp.pop %v3359
      %v3392 = vrcp.pop %v3360
      %v3393 = vrcp.pop %v3361
      %v3394 = vrcp.pop %v3362
      %v3395 = vrcp.pop %v3363
      %v3396 = vrcp.pop %v3364
      %v3397 = vrcp.pop %v3365
      %v3398 = vrcp.pop %v3366
      %v3399 = vrcp.pop %v3367
      %v3400 = vrcp.pop %v3368
      %v3401 = vrcp.pop %v3369
      %v3402 = vrcp.pop %v3370
      %v3403 = vrcp.pop %v3371
      %v3404 = vrcp.pop %v3372
      %v3405 = vrcp.pop %v3373
      %v3406 = vrcp.pop %v3374
      %v3407 = vrcp.pop %v3375
      %v3408 = vrcp.pop %v3376
      %v3409 = vrcp.pop %v3377
      %v3410 = vrcp.pop %v3378
      %v3411 = vrcp.pop %v3379
      %v3412 = vrcp.pop %v3380
      %v3413 = vrcp.pop %v3381
      %v3414 = vrcp.pop %v3382
      %v3415 = vrcp.pop %v3383
      %v3416 = vmul.f32 %v3098, %v3384
      %v3417 = vmul.f32 %v3103, %v3385
      %v3418 = vmul.f32 %v3108, %v3386
      %v3419 = vmul.f32 %v3113, %v3387
      %v3420 = vmul.f32 %v3118, %v3388
      %v3421 = vmul.f32 %v3123, %v3389
      %v3422 = vmul.f32 %v3128, %v3390
      %v3423 = vmul.f32 %v3133, %v3391
      %v3424 = vmul.f32 %v3138, %v3392
      %v3425 = vmul.f32 %v3143, %v3393
      %v3426 = vmul.f32 %v3148, %v3394
      %v3427 = vmul.f32 %v3153, %v3395
      %v3428 = vmul.f32 %v3158, %v3396
      %v3429 = vmul.f32 %v3163, %v3397
      %v3430 = vmul.f32 %v3168, %v3398
      %v3431 = vmul.f32 %v3173, %v3399
      %v3432 = vmul.f32 %v3178, %v3400
      %v3433 = vmul.f32 %v3183, %v3401
      %v3434 = vmul.f32 %v3188, %v3402
      %v3435 = vmul.f32 %v3193, %v3403
      %v3436 = vmul.f32 %v3198, %v3404
      %v3437 = vmul.f32 %v3203, %v3405
      %v3438 = vmul.f32 %v3208, %v3406
      %v3439 = vmul.f32 %v3213, %v3407
      %v3440 = vmul.f32 %v3218, %v3408
      %v3441 = vmul.f32 %v3223, %v3409
      %v3442 = vmul.f32 %v3228, %v3410
      %v3443 = vmul.f32 %v3233, %v3411
      %v3444 = vmul.f32 %v3238, %v3412
      %v3445 = vmul.f32 %v3243, %v3413
      %v3446 = vmul.f32 %v3248, %v3414
      %v3447 = vmul.f32 %v3253, %v3415
      %v3448 = vadd.f32 %v3416, %v449
      %v3449 = vadd.f32 %v3417, %v450
      %v3450 = vadd.f32 %v3418, %v451
      %v3451 = vadd.f32 %v3419, %v452
      %v3452 = vadd.f32 %v3420, %v453
      %v3453 = vadd.f32 %v3421, %v454
      %v3454 = vadd.f32 %v3422, %v455
      %v3455 = vadd.f32 %v3423, %v456
      %v3456 = vadd.f32 %v3424, %v457
      %v3457 = vadd.f32 %v3425, %v458
      %v3458 = vadd.f32 %v3426, %v459
      %v3459 = vadd.f32 %v3427, %v460
      %v3460 = vadd.f32 %v3428, %v461
      %v3461 = vadd.f32 %v3429, %v462
      %v3462 = vadd.f32 %v3430, %v463
      %v3463 = vadd.f32 %v3431, %v464
      %v3464 = vadd.f32 %v3432, %v465
      %v3465 = vadd.f32 %v3433, %v466
      %v3466 = vadd.f32 %v3434, %v467
      %v3467 = vadd.f32 %v3435, %v468
      %v3468 = vadd.f32 %v3436, %v469
      %v3469 = vadd.f32 %v3437, %v470
      %v3470 = vadd.f32 %v3438, %v471
      %v3471 = vadd.f32 %v3439, %v472
      %v3472 = vadd.f32 %v3440, %v473
      %v3473 = vadd.f32 %v3441, %v474
      %v3474 = vadd.f32 %v3442, %v475
      %v3475 = vadd.f32 %v3443, %v476
      %v3476 = vadd.f32 %v3444, %v477
      %v3477 = vadd.f32 %v3445, %v478
      %v3478 = vadd.f32 %v3446, %v479
      %v3479 = vadd.f32 %v3447, %v480
      %3480 = vst.msk [vmem:[%s445] sm:$0xff] %vm487, %v3448
      %3481 = vst.msk [vmem:[%s445 + $0x8] sm:$0xff] %vm487, %v3449
      %3482 = vst.msk [vmem:[%s445 + $0x10] sm:$0xff] %vm487, %v3450
      %3483 = vst.msk [vmem:[%s445 + $0x18] sm:$0xff] %vm487, %v3451
      %3484 = vst.msk [vmem:[%s445 + $0x20] sm:$0xff] %vm487, %v3452
      %3485 = vst.msk [vmem:[%s445 + $0x28] sm:$0xff] %vm487, %v3453
      %3486 = vst.msk [vmem:[%s445 + $0x30] sm:$0xff] %vm487, %v3454
      %3487 = vst.msk [vmem:[%s445 + $0x38] sm:$0xff] %vm487, %v3455
      %3488 = vst.msk [vmem:[%s445 + $0x40] sm:$0xff] %vm487, %v3456
      %3489 = vst.msk [vmem:[%s445 + $0x48] sm:$0xff] %vm487, %v3457
      %3490 = vst.msk [vmem:[%s445 + $0x50] sm:$0xff] %vm487, %v3458
      %3491 = vst.msk [vmem:[%s445 + $0x58] sm:$0xff] %vm487, %v3459
      %3492 = vst.msk [vmem:[%s445 + $0x60] sm:$0xff] %vm487, %v3460
      %3493 = vst.msk [vmem:[%s445 + $0x68] sm:$0xff] %vm487, %v3461
      %3494 = vst.msk [vmem:[%s445 + $0x70] sm:$0xff] %vm487, %v3462
      %3495 = vst.msk [vmem:[%s445 + $0x78] sm:$0xff] %vm487, %v3463
      %3496 = vst.msk [vmem:[%s445 + $0x80] sm:$0xff] %vm487, %v3464
      %3497 = vst.msk [vmem:[%s445 + $0x88] sm:$0xff] %vm487, %v3465
      %3498 = vst.msk [vmem:[%s445 + $0x90] sm:$0xff] %vm487, %v3466
      %3499 = vst.msk [vmem:[%s445 + $0x98] sm:$0xff] %vm487, %v3467
      %3500 = vst.msk [vmem:[%s445 + $0xa0] sm:$0xff] %vm487, %v3468
      %3501 = vst.msk [vmem:[%s445 + $0xa8] sm:$0xff] %vm487, %v3469
      %3502 = vst.msk [vmem:[%s445 + $0xb0] sm:$0xff] %vm487, %v3470
      %3503 = vst.msk [vmem:[%s445 + $0xb8] sm:$0xff] %vm487, %v3471
      %3504 = vst.msk [vmem:[%s445 + $0xc0] sm:$0xff] %vm487, %v3472
      %3505 = vst.msk [vmem:[%s445 + $0xc8] sm:$0xff] %vm487, %v3473
      %3506 = vst.msk [vmem:[%s445 + $0xd0] sm:$0xff] %vm487, %v3474
      %3507 = vst.msk [vmem:[%s445 + $0xd8] sm:$0xff] %vm487, %v3475
      %3508 = vst.msk [vmem:[%s445 + $0xe0] sm:$0xff] %vm487, %v3476
      %3509 = vst.msk [vmem:[%s445 + $0xe8] sm:$0xff] %vm487, %v3477
      %3510 = vst.msk [vmem:[%s445 + $0xf0] sm:$0xff] %vm487, %v3478
      %3511 = vst.msk [vmem:[%s445 + $0xf8] sm:$0xff] %vm487, %v3479
      %s3512 = smul.u32 16, %s23
      %p3513 = scmp.lt.s32.totalorder %s22, 1
      %s3514 = scalar_select %p3513, %s22, 1
      %p3515 = scmp.lt.s32.totalorder %s3512, 15
      %s3516 = scalar_select %p3515, %s3512, 15
      %s3517 = smul.addr %s3516, 2
      %s3518 = smul.addr %s3514, 32
      %s3519 = sadd.s32 %s3517, %s3518
      %s3520 = smul.addr %s3519, 8
      %s3521 = scalar_lea.vmem %s7, %s3520
      // Predicated region
      $region49: #{tpu_custom_call.1} parent=47 // pred_check
        %p3522 = pneg %p234
      $region50: #{tpu_custom_call.1} parent=47 // pred_check_branch
        %3524 = sbr.rel (%p3522) target = $region52
      $region51: #{tpu_custom_call.1} parent=47 // pred_region
        %s3525 = smul.u32 16, %s23
      $region52: #{tpu_custom_call.1} parent=47 // pred_fallthru
        _
    $region48: #{tpu_custom_call.1} parent=5 // pred_fallthru
      _
    %p3526 = scmp.le.s32.totalorder 2, %s13
    // Predicated region
    $region53: #{tpu_custom_call.1} parent=5 // pred_check
      %p3527 = pneg %p3526
    $region54: #{tpu_custom_call.1} parent=5 // pred_check_branch
      %3529 = sbr.rel (%p3527) target = $region56
    $region55: #{tpu_custom_call.1} parent=5 // pred_region
      %s3530 = ssub.s32 %s13, 2
      // Predicated region
      $region57: #{tpu_custom_call.1} parent=55 // pred_check
        %p3531 = pneg %p240
      $region58: #{tpu_custom_call.1} parent=55 // pred_check_branch
        %3533 = sbr.rel (%p3531) target = $region60
      $region59: #{tpu_custom_call.1} parent=55 // pred_region
        %s3534 = smul.u32 16, %s25
        %p3535 = scmp.lt.s32.totalorder %s24, 1
        %s3536 = scalar_select %p3535, %s24, 1
        %p3537 = scmp.lt.s32.totalorder %s3534, 15
        %s3538 = scalar_select %p3537, %s3534, 15
        %s3539 = smul.addr %s3538, 2
        %s3540 = smul.addr %s3536, 32
        %s3541 = sadd.s32 %s3539, %s3540
        %s3542 = smul.addr %s3541, 8
        %s3543 = scalar_lea.vmem %s7, %s3542
      $region60: #{tpu_custom_call.1} parent=55 // pred_fallthru
        _
    $region56: #{tpu_custom_call.1} parent=5 // pred_fallthru
      _
  $region6: #{tpu_custom_call.1} parent=0 // loop_footer
    %s17 = sadd.s32 1, %s13
  $region7: #{tpu_custom_call.1} parent=0 // loop_footer_branch
    %12 = sbr.rel target = $region3
  $region8: #{tpu_custom_call.1} parent=0 // loop_exit
    _

</llo_original>
